<compile_context>
chip_gen: v5e
topology: v5e:2x2
jax: 0.10.0
libtpu: 0.0.40
codegen_flags: <defaults>
</compile_context>

<pallas_src>
import functools
import math

import jax
import jax.numpy as jnp
from jax.experimental import pallas as pl
from jax.experimental.pallas import tpu as pltpu

# ----------------------------- model dimensions -----------------------------
B = 2        # batch
NPC = 8      # number of "point cloud" tokens
D = 32       # qformer hidden size (== pc embed dim)
NQ = 8       # number of query tokens
DL = 32      # language-model hidden size
T = 8        # text sequence length
V = 64       # vocab size
H = 4        # attention heads
DH = D // H  # qformer head dim
DHL = DL // H
F = 64       # FFN hidden size
S = NQ + T   # LM sequence length


# --------------------------- in-kernel helper math ---------------------------
def _layernorm(x, g, b, eps=1e-5):
    mean = jnp.mean(x, axis=-1, keepdims=True)
    var = jnp.mean((x - mean) ** 2, axis=-1, keepdims=True)
    return (x - mean) * jax.lax.rsqrt(var + eps) * g + b


def _dense(x, w_ref, b_ref):
    # bf16 MXU inputs, f32 accumulation, f32 bias add.
    return (
        jnp.dot(x.astype(jnp.bfloat16), w_ref[...], preferred_element_type=jnp.float32)
        + b_ref[...]
    )


def _mha(q, k, v, bias, n_heads, head_dim):
    """q: (Sq, n_heads*head_dim) f32, k/v: (Sk, ...), bias: (Sq, Sk) f32 or None."""
    scale = 1.0 / math.sqrt(head_dim)
    outs = []
    for h in range(n_heads):
        lo, hi = h * head_dim, (h + 1) * head_dim
        qh = q[:, lo:hi]
        kh = k[:, lo:hi]
        vh = v[:, lo:hi]
        s = jnp.dot(
            qh.astype(jnp.bfloat16), kh.T.astype(jnp.bfloat16),
            preferred_element_type=jnp.float32,
        ) * scale
        if bias is not None:
            s = s + bias
        s = s - jnp.max(s, axis=-1, keepdims=True)
        p = jnp.exp(s)
        p = p * pl.reciprocal(jnp.sum(p, axis=-1, keepdims=True), approx=True)
        outs.append(
            jnp.dot(p.astype(jnp.bfloat16), vh.astype(jnp.bfloat16),
                    preferred_element_type=jnp.float32)
        )
    return jnp.concatenate(outs, axis=-1)


# ------------------------ kernel 1: fused Q-Former layer ------------------------
def _qformer_kernel(
    qt_ref, pc_ref,
    sa_wqkv_ref, sa_bqkv_ref, sa_wo_ref, sa_bo_ref, ln1_g_ref, ln1_b_ref,
    ca_wq_ref, ca_bq_ref, ca_wkv_ref, ca_bkv_ref, ca_wo_ref, ca_bo_ref,
    ln2_g_ref, ln2_b_ref,
    ffn_w1_ref, ffn_b1_ref, ffn_w2_ref, ffn_b2_ref, ln3_g_ref, ln3_b_ref,
    proj_w_ref, proj_b_ref,
    qout_ref, lmin_ref,
):
    x = qt_ref[...]          # (NQ, D) f32 query tokens (shared over batch)
    enc = pc_ref[...]        # (NPC, D) f32 pc_embeds for this batch element

    # self-attention over query tokens (bidirectional -> no mask)
    qkv = _dense(x, sa_wqkv_ref, sa_bqkv_ref)                        # (NQ, 3D)
    attn = _mha(qkv[:, :D], qkv[:, D:2 * D], qkv[:, 2 * D:], None, H, DH)
    sa = _dense(attn, sa_wo_ref, sa_bo_ref)
    h = _layernorm(x + sa, ln1_g_ref[...], ln1_b_ref[...])

    # cross-attention to pc_embeds (image_attention_mask == all ones -> no bias)
    q = _dense(h, ca_wq_ref, ca_bq_ref)                              # (NQ, D)
    kv = _dense(enc, ca_wkv_ref, ca_bkv_ref)                         # (NPC, 2D)
    attn = _mha(q, kv[:, :D], kv[:, D:], None, H, DH)
    ca = _dense(attn, ca_wo_ref, ca_bo_ref)
    h = _layernorm(h + ca, ln2_g_ref[...], ln2_b_ref[...])

    # feed-forward
    f1 = jax.nn.gelu(_dense(h, ffn_w1_ref, ffn_b1_ref))
    f2 = _dense(f1, ffn_w2_ref, ffn_b2_ref)
    h = _layernorm(h + f2, ln3_g_ref[...], ln3_b_ref[...])

    qout_ref[...] = h
    lmin_ref[...] = _dense(h, proj_w_ref, proj_b_ref)                # language projection


def qformer_forward(p, pc_embeds):
    b = pc_embeds.shape[0]
    vec = lambda a: a.reshape(1, -1)
    c2 = lambda shape: pl.BlockSpec(shape, lambda i: (0, 0))         # resident block

    in_specs = [
        pl.BlockSpec((NQ, D), lambda i: (0, 0)),                     # query tokens
        pl.BlockSpec((None, NPC, D), lambda i: (i, 0, 0)),           # pc_embeds
        c2((D, 3 * D)), c2((1, 3 * D)), c2((D, D)), c2((1, D)), c2((1, D)), c2((1, D)),
        c2((D, D)), c2((1, D)), c2((D, 2 * D)), c2((1, 2 * D)), c2((D, D)), c2((1, D)),
        c2((1, D)), c2((1, D)),
        c2((D, F)), c2((1, F)), c2((F, D)), c2((1, D)), c2((1, D)), c2((1, D)),
        c2((D, DL)), c2((1, DL)),
    ]
    out_specs = (
        pl.BlockSpec((None, NQ, D), lambda i: (i, 0, 0)),
        pl.BlockSpec((None, NQ, DL), lambda i: (i, 0, 0)),
    )
    return pl.pallas_call(
        _qformer_kernel,
        out_shape=(jax.ShapeDtypeStruct((b, NQ, D), jnp.float32),
                   jax.ShapeDtypeStruct((b, NQ, DL), jnp.float32)),
        grid=(b,),
        in_specs=in_specs,
        out_specs=out_specs,
        compiler_params=pltpu.CompilerParams(dimension_semantics=("parallel",)),
    )(
        p["query_tokens"], pc_embeds,
        p["sa_wqkv"], vec(p["sa_bqkv"]), p["sa_wo"], vec(p["sa_bo"]),
        vec(p["ln1_g"]), vec(p["ln1_b"]),
        p["ca_wq"], vec(p["ca_bq"]), p["ca_wkv"], vec(p["ca_bkv"]),
        p["ca_wo"], vec(p["ca_bo"]),
        vec(p["ln2_g"]), vec(p["ln2_b"]),
        p["ffn_w1"], vec(p["ffn_b1"]), p["ffn_w2"], vec(p["ffn_b2"]),
        vec(p["ln3_g"]), vec(p["ln3_b"]),
        p["proj_w"], vec(p["proj_b"]),
    )


# --------------- kernel 2: embed gather + fused LM decoder + LM head ---------------
def _lm_decoder_kernel(
    ids_ref,                                   # SMEM (B, T) int32 (scalar prefetch)
    lmin_ref, keybias_ref, table_ref,
    l_wqkv_ref, l_bqkv_ref, l_wo_ref, l_bo_ref,
    l_ln1_g_ref, l_ln1_b_ref, l_ln2_g_ref, l_ln2_b_ref,
    l_ffn_w1_ref, l_ffn_b1_ref, l_ffn_w2_ref, l_ffn_b2_ref,
    lnf_g_ref, lnf_b_ref, lm_head_w_ref, lm_head_b_ref,
    logits_ref,
):
    bi = pl.program_id(0)

    # token embedding gather: one-hot built from SMEM ids, matmul with bf16 table
    cols = jax.lax.broadcasted_iota(jnp.int32, (1, V), 1)
    onehot = jnp.concatenate(
        [(cols == ids_ref[bi, t]).astype(jnp.float32) for t in range(T)], axis=0)
    tok = jnp.dot(onehot.astype(jnp.bfloat16), table_ref[...],
                  preferred_element_type=jnp.float32)                 # (T, DL)

    # concat branch: [projected query output ; token embeddings]
    x = jnp.concatenate([lmin_ref[...], tok], axis=0)                 # (S, DL)

    # pre-LN causal self-attention (causal mask from iota + key-padding bias)
    h = _layernorm(x, l_ln1_g_ref[...], l_ln1_b_ref[...])
    qkv = _dense(h, l_wqkv_ref, l_bqkv_ref)                           # (S, 3*DL)
    qi = jax.lax.broadcasted_iota(jnp.int32, (S, S), 0)
    ki = jax.lax.broadcasted_iota(jnp.int32, (S, S), 1)
    bias = jnp.where(ki <= qi, 0.0, -1e9).astype(jnp.float32) + keybias_ref[...]
    attn = _mha(qkv[:, :DL], qkv[:, DL:2 * DL], qkv[:, 2 * DL:], bias, H, DHL)
    a = _dense(attn, l_wo_ref, l_bo_ref)
    x1 = x + a

    # pre-LN FFN
    h2 = _layernorm(x1, l_ln2_g_ref[...], l_ln2_b_ref[...])
    f = _dense(jax.nn.gelu(_dense(h2, l_ffn_w1_ref, l_ffn_b1_ref)),
               l_ffn_w2_ref, l_ffn_b2_ref)
    x2 = x1 + f

    # final LN + LM head
    hf = _layernorm(x2, lnf_g_ref[...], lnf_b_ref[...])
    logits_ref[...] = _dense(hf, lm_head_w_ref, lm_head_b_ref)        # (S, V)


def lm_decoder_forward(p, input_ids, lm_inputs, attention_mask):
    b = lm_inputs.shape[0]
    vec = lambda a: a.reshape(1, -1)
    c2 = lambda shape: pl.BlockSpec(shape, lambda i, ids: (0, 0))

    # additive key-padding bias for the concatenated sequence (query tokens are unmasked)
    full_mask = jnp.concatenate(
        [jnp.ones((b, NQ), jnp.int32), attention_mask.astype(jnp.int32)], axis=1)
    key_bias = jnp.where(full_mask > 0, 0.0, -1e9).astype(jnp.float32).reshape(b, 1, S)

    grid_spec = pltpu.PrefetchScalarGridSpec(
        num_scalar_prefetch=1,
        grid=(b,),
        in_specs=[
            pl.BlockSpec((None, NQ, DL), lambda i, ids: (i, 0, 0)),   # projected queries
            pl.BlockSpec((None, 1, S), lambda i, ids: (i, 0, 0)),     # key-padding bias
            c2((V, DL)),                                              # embedding table
            c2((DL, 3 * DL)), c2((1, 3 * DL)), c2((DL, DL)), c2((1, DL)),
            c2((1, DL)), c2((1, DL)), c2((1, DL)), c2((1, DL)),
            c2((DL, F)), c2((1, F)), c2((F, DL)), c2((1, DL)),
            c2((1, DL)), c2((1, DL)),
            c2((DL, V)), c2((1, V)),
        ],
        out_specs=pl.BlockSpec((None, S, V), lambda i, ids: (i, 0, 0)),
    )
    return pl.pallas_call(
        _lm_decoder_kernel,
        out_shape=jax.ShapeDtypeStruct((b, S, V), jnp.float32),
        grid_spec=grid_spec,
        compiler_params=pltpu.CompilerParams(dimension_semantics=("parallel",)),
    )(
        input_ids.astype(jnp.int32),
        lm_inputs, key_bias, p["embed_table"],
        p["l_wqkv"], vec(p["l_bqkv"]), p["l_wo"], vec(p["l_bo"]),
        vec(p["l_ln1_g"]), vec(p["l_ln1_b"]), vec(p["l_ln2_g"]), vec(p["l_ln2_b"]),
        p["l_ffn_w1"], vec(p["l_ffn_b1"]), p["l_ffn_w2"], vec(p["l_ffn_b2"]),
        vec(p["lnf_g"]), vec(p["lnf_b"]),
        p["lm_head_w"], vec(p["lm_head_b"]),
    )


# ----------------------- kernel 3: shifted cross-entropy -----------------------
def _ce_kernel(labels_ref, logits_ref, out_ref):
    # labels_ref: SMEM (B, T) int32; logits_ref: (B, S, V) f32; out_ref: (1, 1) f32.
    # TODO(synk): ignore_index=-100 masking (PyTorch CE mean over non-ignored) not implemented;
    #             synthetic labels here never use -100.
    cols = jax.lax.broadcasted_iota(jnp.int32, (1, V), 1)
    total = jnp.zeros((1, 1), jnp.float32)
    for b in range(B):
        sl = logits_ref[b, NQ:S - 1, :]                               # (T-1, V) shifted logits
        m = jnp.max(sl, axis=-1, keepdims=True)
        lse = jnp.log(jnp.sum(jnp.exp(sl - m), axis=-1, keepdims=True)) + m
        onehot = jnp.concatenate(
            [(cols == labels_ref[b, t]).astype(jnp.float32) for t in range(1, T)], axis=0)
        tgt = jnp.sum(onehot * sl, axis=-1, keepdims=True)
        total = total + jnp.sum(lse - tgt, axis=0, keepdims=True)
    out_ref[...] = total


def cross_entropy_loss(logits, labels):
    b, t = labels.shape
    grid_spec = pltpu.PrefetchScalarGridSpec(
        num_scalar_prefetch=1,
        grid=(1,),
        in_specs=[pl.BlockSpec((b, S, V), lambda i, lab: (0, 0, 0))],
        out_specs=pl.BlockSpec((1, 1), lambda i, lab: (0, 0)),
    )
    total = pl.pallas_call(
        _ce_kernel,
        out_shape=jax.ShapeDtypeStruct((1, 1), jnp.float32),
        grid_spec=grid_spec,
    )(labels.astype(jnp.int32), logits)
    return total[0, 0] / (b * (t - 1))


# ------------------------- parameter initialization --------------------------
def _dense_init(key, fan_in, fan_out):
    return jax.random.normal(key, (fan_in, fan_out), jnp.float32) / jnp.sqrt(
        jnp.float32(fan_in))


def init_params(key):
    keys = iter(jax.random.split(key, 32))
    bf = lambda a: a.astype(jnp.bfloat16)
    p = {}

    p["query_tokens"] = 0.02 * jax.random.normal(next(keys), (NQ, D), jnp.float32)

    # Q-Former (one BERT-style layer), QKV / KV projections fused
    p["sa_wqkv"] = bf(jnp.concatenate([_dense_init(next(keys), D, D) for _ in range(3)], 1))
    p["sa_bqkv"] = jnp.zeros((3 * D,), jnp.float32)
    p["sa_wo"] = bf(_dense_init(next(keys), D, D)); p["sa_bo"] = jnp.zeros((D,), jnp.float32)
    p["ca_wq"] = bf(_dense_init(next(keys), D, D)); p["ca_bq"] = jnp.zeros((D,), jnp.float32)
    p["ca_wkv"] = bf(jnp.concatenate([_dense_init(next(keys), D, D) for _ in range(2)], 1))
    p["ca_bkv"] = jnp.zeros((2 * D,), jnp.float32)
    p["ca_wo"] = bf(_dense_init(next(keys), D, D)); p["ca_bo"] = jnp.zeros((D,), jnp.float32)
    p["ffn_w1"] = bf(_dense_init(next(keys), D, F)); p["ffn_b1"] = jnp.zeros((F,), jnp.float32)
    p["ffn_w2"] = bf(_dense_init(next(keys), F, D)); p["ffn_b2"] = jnp.zeros((D,), jnp.float32)
    for ln in ("ln1", "ln2", "ln3"):
        p[f"{ln}_g"] = jnp.ones((D,), jnp.float32)
        p[f"{ln}_b"] = jnp.zeros((D,), jnp.float32)

    # language projection
    p["proj_w"] = bf(_dense_init(next(keys), D, DL))
    p["proj_b"] = jnp.zeros((DL,), jnp.float32)

    # language model (decoder-only, one pre-LN layer)
    p["embed_table"] = bf(0.02 * jax.random.normal(next(keys), (V, DL), jnp.float32))
    p["l_wqkv"] = bf(jnp.concatenate([_dense_init(next(keys), DL, DL) for _ in range(3)], 1))
    p["l_bqkv"] = jnp.zeros((3 * DL,), jnp.float32)
    p["l_wo"] = bf(_dense_init(next(keys), DL, DL)); p["l_bo"] = jnp.zeros((DL,), jnp.float32)
    p["l_ffn_w1"] = bf(_dense_init(next(keys), DL, F)); p["l_ffn_b1"] = jnp.zeros((F,), jnp.float32)
    p["l_ffn_w2"] = bf(_dense_init(next(keys), F, DL)); p["l_ffn_b2"] = jnp.zeros((DL,), jnp.float32)
    p["lm_head_w"] = bf(_dense_init(next(keys), DL, V)); p["lm_head_b"] = jnp.zeros((V,), jnp.float32)
    for ln in ("l_ln1", "l_ln2", "lnf"):
        p[f"{ln}_g"] = jnp.ones((DL,), jnp.float32)
        p[f"{ln}_b"] = jnp.zeros((DL,), jnp.float32)
    return p


# --------------------------------- Blip3D forward ---------------------------------
def blip3d_forward(params, pc_values, input_ids, attention_mask=None, labels=None):
    # pc_model = Identity
    pc_embeds = pc_values                                             # (B, NPC, D)

    # Q-Former (query tokens expanded over batch inside the kernel) + language projection
    query_output, language_model_inputs = qformer_forward(params, pc_embeds)

    if attention_mask is None:
        attention_mask = jnp.ones_like(input_ids, dtype=jnp.int32)

    # config.image_token_index is None -> concat branch of the PyTorch forward
    # TODO(synk): masked_scatter path (image_token_index set) not implemented; concat path used.
    logits = lm_decoder_forward(params, input_ids, language_model_inputs, attention_mask)

    loss = None
    if labels is not None:
        loss = cross_entropy_loss(logits, labels)
    return loss, logits, pc_embeds, query_output


# ------------------------------------- main -------------------------------------
if __name__ == "__main__":
    key = jax.random.PRNGKey(0)
    k_par, k_pc, k_ids = jax.random.split(key, 3)

    params = init_params(k_par)
    pc_values = jax.random.normal(k_pc, (B, NPC, D), jnp.float32)
    input_ids = jax.random.randint(k_ids, (B, T), 0, V, jnp.int32)
    labels = input_ids  # standard LM labels

    fwd = jax.jit(blip3d_forward)
    loss, logits, pc_embeds, query_output = fwd(
        params, pc_values, input_ids, None, labels
    )
    jax.block_until_ready((loss, logits))

    assert logits.shape == (B, NQ + T, V)
    assert query_output.shape == (B, NQ, D)
    assert bool(jnp.isfinite(loss))
    print("KERNEL_OK")
</pallas_src>

<mosaic_0001>
module attributes {stable_mosaic.version = 11 : i64} {
  func.func @_lm_decoder_kernel(%arg0: i32, %arg1: memref<2x8xi32, #tpu.memory_space<smem>>, %arg2: memref<1x8x32xf32, #tpu.memory_space<vmem>>, %arg3: memref<1x1x16xf32, #tpu.memory_space<vmem>>, %arg4: memref<64x32xbf16, #tpu.memory_space<vmem>>, %arg5: memref<32x96xbf16, #tpu.memory_space<vmem>>, %arg6: memref<1x96xf32, #tpu.memory_space<vmem>>, %arg7: memref<32x32xbf16, #tpu.memory_space<vmem>>, %arg8: memref<1x32xf32, #tpu.memory_space<vmem>>, %arg9: memref<1x32xf32, #tpu.memory_space<vmem>>, %arg10: memref<1x32xf32, #tpu.memory_space<vmem>>, %arg11: memref<1x32xf32, #tpu.memory_space<vmem>>, %arg12: memref<1x32xf32, #tpu.memory_space<vmem>>, %arg13: memref<32x64xbf16, #tpu.memory_space<vmem>>, %arg14: memref<1x64xf32, #tpu.memory_space<vmem>>, %arg15: memref<64x32xbf16, #tpu.memory_space<vmem>>, %arg16: memref<1x32xf32, #tpu.memory_space<vmem>>, %arg17: memref<1x32xf32, #tpu.memory_space<vmem>>, %arg18: memref<1x32xf32, #tpu.memory_space<vmem>>, %arg19: memref<32x64xbf16, #tpu.memory_space<vmem>>, %arg20: memref<1x64xf32, #tpu.memory_space<vmem>>, %arg21: memref<1x16x64xf32, #tpu.memory_space<vmem>>) attributes {dimension_semantics = [#tpu.dimension_semantics<parallel>], iteration_bounds = array<i64: 2>, scalar_prefetch = 1 : i64, scratch_operands = 0 : i64, tpu.core_type = #tpu.core_type<tc>, window_params = [{transform_indices = @transform_0, window_bounds = array<i64: 1, 8, 32>}, {transform_indices = @transform_1, window_bounds = array<i64: 1, 1, 16>}, {pipeline_mode = #tpu.pipeline_mode<synchronous>, transform_indices = @transform_2, window_bounds = array<i64: 64, 32>}, {pipeline_mode = #tpu.pipeline_mode<synchronous>, transform_indices = @transform_3, window_bounds = array<i64: 32, 96>}, {pipeline_mode = #tpu.pipeline_mode<synchronous>, transform_indices = @transform_4, window_bounds = array<i64: 1, 96>}, {pipeline_mode = #tpu.pipeline_mode<synchronous>, transform_indices = @transform_5, window_bounds = array<i64: 32, 32>}, {pipeline_mode = #tpu.pipeline_mode<synchronous>, transform_indices = @transform_6, window_bounds = array<i64: 1, 32>}, {pipeline_mode = #tpu.pipeline_mode<synchronous>, transform_indices = @transform_7, window_bounds = array<i64: 1, 32>}, {pipeline_mode = #tpu.pipeline_mode<synchronous>, transform_indices = @transform_8, window_bounds = array<i64: 1, 32>}, {pipeline_mode = #tpu.pipeline_mode<synchronous>, transform_indices = @transform_9, window_bounds = array<i64: 1, 32>}, {pipeline_mode = #tpu.pipeline_mode<synchronous>, transform_indices = @transform_10, window_bounds = array<i64: 1, 32>}, {pipeline_mode = #tpu.pipeline_mode<synchronous>, transform_indices = @transform_11, window_bounds = array<i64: 32, 64>}, {pipeline_mode = #tpu.pipeline_mode<synchronous>, transform_indices = @transform_12, window_bounds = array<i64: 1, 64>}, {pipeline_mode = #tpu.pipeline_mode<synchronous>, transform_indices = @transform_13, window_bounds = array<i64: 64, 32>}, {pipeline_mode = #tpu.pipeline_mode<synchronous>, transform_indices = @transform_14, window_bounds = array<i64: 1, 32>}, {pipeline_mode = #tpu.pipeline_mode<synchronous>, transform_indices = @transform_15, window_bounds = array<i64: 1, 32>}, {pipeline_mode = #tpu.pipeline_mode<synchronous>, transform_indices = @transform_16, window_bounds = array<i64: 1, 32>}, {pipeline_mode = #tpu.pipeline_mode<synchronous>, transform_indices = @transform_17, window_bounds = array<i64: 32, 64>}, {pipeline_mode = #tpu.pipeline_mode<synchronous>, transform_indices = @transform_18, window_bounds = array<i64: 1, 64>}, {transform_indices = @transform_19, window_bounds = array<i64: 1, 16, 64>}]} {
    %0 = tpu.iota {dimensions = array<i32: 1>} : vector<1x64xi32>
    %1 = arith.index_cast %arg0 : i32 to index
    %c0 = arith.constant 0 : index
    %2 = memref.load %arg1[%1, %c0] : memref<2x8xi32, #tpu.memory_space<smem>>
    %3 = vector.broadcast %2 : i32 to vector<1x64xi32>
    %4 = arith.cmpi eq, %0, %3 : vector<1x64xi32>
    %5 = arith.extui %4 : vector<1x64xi1> to vector<1x64xi32>
    %6 = arith.sitofp %5 : vector<1x64xi32> to vector<1x64xf32>
    %7 = arith.index_cast %arg0 : i32 to index
    %c1 = arith.constant 1 : index
    %8 = memref.load %arg1[%7, %c1] : memref<2x8xi32, #tpu.memory_space<smem>>
    %9 = vector.broadcast %8 : i32 to vector<1x64xi32>
    %10 = arith.cmpi eq, %0, %9 : vector<1x64xi32>
    %11 = arith.extui %10 : vector<1x64xi1> to vector<1x64xi32>
    %12 = arith.sitofp %11 : vector<1x64xi32> to vector<1x64xf32>
    %13 = arith.index_cast %arg0 : i32 to index
    %c2 = arith.constant 2 : index
    %14 = memref.load %arg1[%13, %c2] : memref<2x8xi32, #tpu.memory_space<smem>>
    %15 = vector.broadcast %14 : i32 to vector<1x64xi32>
    %16 = arith.cmpi eq, %0, %15 : vector<1x64xi32>
    %17 = arith.extui %16 : vector<1x64xi1> to vector<1x64xi32>
    %18 = arith.sitofp %17 : vector<1x64xi32> to vector<1x64xf32>
    %19 = arith.index_cast %arg0 : i32 to index
    %c3 = arith.constant 3 : index
    %20 = memref.load %arg1[%19, %c3] : memref<2x8xi32, #tpu.memory_space<smem>>
    %21 = vector.broadcast %20 : i32 to vector<1x64xi32>
    %22 = arith.cmpi eq, %0, %21 : vector<1x64xi32>
    %23 = arith.extui %22 : vector<1x64xi1> to vector<1x64xi32>
    %24 = arith.sitofp %23 : vector<1x64xi32> to vector<1x64xf32>
    %25 = arith.index_cast %arg0 : i32 to index
    %c4 = arith.constant 4 : index
    %26 = memref.load %arg1[%25, %c4] : memref<2x8xi32, #tpu.memory_space<smem>>
    %27 = vector.broadcast %26 : i32 to vector<1x64xi32>
    %28 = arith.cmpi eq, %0, %27 : vector<1x64xi32>
    %29 = arith.extui %28 : vector<1x64xi1> to vector<1x64xi32>
    %30 = arith.sitofp %29 : vector<1x64xi32> to vector<1x64xf32>
    %31 = arith.index_cast %arg0 : i32 to index
    %c5 = arith.constant 5 : index
    %32 = memref.load %arg1[%31, %c5] : memref<2x8xi32, #tpu.memory_space<smem>>
    %33 = vector.broadcast %32 : i32 to vector<1x64xi32>
    %34 = arith.cmpi eq, %0, %33 : vector<1x64xi32>
    %35 = arith.extui %34 : vector<1x64xi1> to vector<1x64xi32>
    %36 = arith.sitofp %35 : vector<1x64xi32> to vector<1x64xf32>
    %37 = arith.index_cast %arg0 : i32 to index
    %c6 = arith.constant 6 : index
    %38 = memref.load %arg1[%37, %c6] : memref<2x8xi32, #tpu.memory_space<smem>>
    %39 = vector.broadcast %38 : i32 to vector<1x64xi32>
    %40 = arith.cmpi eq, %0, %39 : vector<1x64xi32>
    %41 = arith.extui %40 : vector<1x64xi1> to vector<1x64xi32>
    %42 = arith.sitofp %41 : vector<1x64xi32> to vector<1x64xf32>
    %43 = arith.index_cast %arg0 : i32 to index
    %c7 = arith.constant 7 : index
    %44 = memref.load %arg1[%43, %c7] : memref<2x8xi32, #tpu.memory_space<smem>>
    %45 = vector.broadcast %44 : i32 to vector<1x64xi32>
    %46 = arith.cmpi eq, %0, %45 : vector<1x64xi32>
    %47 = arith.extui %46 : vector<1x64xi1> to vector<1x64xi32>
    %48 = arith.sitofp %47 : vector<1x64xi32> to vector<1x64xf32>
    %49 = tpu.concatenate %6, %12, %18, %24, %30, %36, %42, %48 in 0 : vector<1x64xf32>, vector<1x64xf32>, vector<1x64xf32>, vector<1x64xf32>, vector<1x64xf32>, vector<1x64xf32>, vector<1x64xf32>, vector<1x64xf32> -> vector<8x64xf32>
    %50 = arith.truncf %49 : vector<8x64xf32> to vector<8x64xbf16>
    %c0_0 = arith.constant 0 : index
    %c0_1 = arith.constant 0 : index
    %51 = vector.load %arg4[%c0_0, %c0_1] : memref<64x32xbf16, #tpu.memory_space<vmem>>, vector<64x32xbf16>
    %cst = arith.constant dense<0.000000e+00> : vector<8x32xf32>
    %52 = tpu.matmul %50, %51, %cst {dimension_numbers = #tpu.dot_dimension_numbers<[1], [0], [0], [1], [0, 0, 1, 1], [], []>} : vector<8x64xbf16>, vector<64x32xbf16>, vector<8x32xf32> -> vector<8x32xf32>
    %c0_2 = arith.constant 0 : index
    %c0_3 = arith.constant 0 : index
    %c0_4 = arith.constant 0 : index
    %53 = vector.load %arg2[%c0_2, %c0_3, %c0_4] : memref<1x8x32xf32, #tpu.memory_space<vmem>>, vector<1x8x32xf32>
    %54 = vector.shape_cast %53 : vector<1x8x32xf32> to vector<8x32xf32>
    %55 = tpu.concatenate %54, %52 in 0 : vector<8x32xf32>, vector<8x32xf32> -> vector<16x32xf32>
    %c0_5 = arith.constant 0 : index
    %c0_6 = arith.constant 0 : index
    %56 = vector.load %arg9[%c0_5, %c0_6] : memref<1x32xf32, #tpu.memory_space<vmem>>, vector<1x32xf32>
    %c0_7 = arith.constant 0 : index
    %c0_8 = arith.constant 0 : index
    %57 = vector.load %arg10[%c0_7, %c0_8] : memref<1x32xf32, #tpu.memory_space<vmem>>, vector<1x32xf32>
    %cst_9 = arith.constant dense<0.000000e+00> : vector<16xf32>
    %58 = vector.multi_reduction <add>, %55, %cst_9 [1] : vector<16x32xf32> to vector<16xf32>
    %59 = vector.shape_cast %58 : vector<16xf32> to vector<16x1xf32>
    %cst_10 = arith.constant 3.200000e+01 : f32
    %60 = vector.broadcast %cst_10 : f32 to vector<16x1xf32>
    %61 = arith.divf %59, %60 : vector<16x1xf32>
    %62 = vector.broadcast %61 : vector<16x1xf32> to vector<16x32xf32>
    %63 = arith.subf %55, %62 : vector<16x32xf32>
    %64 = arith.mulf %63, %63 : vector<16x32xf32>
    %cst_11 = arith.constant dense<0.000000e+00> : vector<16xf32>
    %65 = vector.multi_reduction <add>, %64, %cst_11 [1] : vector<16x32xf32> to vector<16xf32>
    %66 = vector.shape_cast %65 : vector<16xf32> to vector<16x1xf32>
    %cst_12 = arith.constant 3.200000e+01 : f32
    %67 = vector.broadcast %cst_12 : f32 to vector<16x1xf32>
    %68 = arith.divf %66, %67 : vector<16x1xf32>
    %69 = vector.broadcast %61 : vector<16x1xf32> to vector<16x32xf32>
    %70 = arith.subf %55, %69 : vector<16x32xf32>
    %cst_13 = arith.constant 9.99999974E-6 : f32
    %71 = vector.broadcast %cst_13 : f32 to vector<16x1xf32>
    %72 = arith.addf %68, %71 : vector<16x1xf32>
    %73 = math.rsqrt %72 : vector<16x1xf32>
    %74 = vector.broadcast %73 : vector<16x1xf32> to vector<16x32xf32>
    %75 = arith.mulf %70, %74 : vector<16x32xf32>
    %76 = vector.broadcast %56 : vector<1x32xf32> to vector<16x32xf32>
    %77 = arith.mulf %75, %76 : vector<16x32xf32>
    %78 = vector.broadcast %57 : vector<1x32xf32> to vector<16x32xf32>
    %79 = arith.addf %77, %78 : vector<16x32xf32>
    %80 = arith.truncf %79 : vector<16x32xf32> to vector<16x32xbf16>
    %c0_14 = arith.constant 0 : index
    %c0_15 = arith.constant 0 : index
    %81 = vector.load %arg5[%c0_14, %c0_15] : memref<32x96xbf16, #tpu.memory_space<vmem>>, vector<32x96xbf16>
    %cst_16 = arith.constant dense<0.000000e+00> : vector<16x96xf32>
    %82 = tpu.matmul %80, %81, %cst_16 {dimension_numbers = #tpu.dot_dimension_numbers<[1], [0], [0], [1], [0, 0, 1, 1], [], []>} : vector<16x32xbf16>, vector<32x96xbf16>, vector<16x96xf32> -> vector<16x96xf32>
    %c0_17 = arith.constant 0 : index
    %c0_18 = arith.constant 0 : index
    %83 = vector.load %arg6[%c0_17, %c0_18] : memref<1x96xf32, #tpu.memory_space<vmem>>, vector<1x96xf32>
    %84 = vector.broadcast %83 : vector<1x96xf32> to vector<16x96xf32>
    %85 = arith.addf %82, %84 : vector<16x96xf32>
    %86 = tpu.iota {dimensions = array<i32: 0>} : vector<16x16xi32>
    %87 = tpu.iota {dimensions = array<i32: 1>} : vector<16x16xi32>
    %88 = arith.cmpi sle, %87, %86 : vector<16x16xi32>
    %cst_19 = arith.constant 0.000000e+00 : f32
    %cst_20 = arith.constant -1.000000e+09 : f32
    %89 = vector.broadcast %cst_19 : f32 to vector<16x16xf32>
    %90 = vector.broadcast %cst_20 : f32 to vector<16x16xf32>
    %91 = arith.select %88, %89, %90 : vector<16x16xi1>, vector<16x16xf32>
    %c0_21 = arith.constant 0 : index
    %c0_22 = arith.constant 0 : index
    %c0_23 = arith.constant 0 : index
    %92 = vector.load %arg3[%c0_21, %c0_22, %c0_23] : memref<1x1x16xf32, #tpu.memory_space<vmem>>, vector<1x1x16xf32>
    %93 = vector.shape_cast %92 : vector<1x1x16xf32> to vector<1x16xf32>
    %94 = vector.broadcast %93 : vector<1x16xf32> to vector<16x16xf32>
    %95 = arith.addf %91, %94 : vector<16x16xf32>
    %96 = vector.extract_strided_slice %85 {offsets = [0, 0], sizes = [16, 32], strides = [1, 1]} : vector<16x96xf32> to vector<16x32xf32>
    %97 = vector.extract_strided_slice %85 {offsets = [0, 32], sizes = [16, 32], strides = [1, 1]} : vector<16x96xf32> to vector<16x32xf32>
    %98 = vector.extract_strided_slice %85 {offsets = [0, 64], sizes = [16, 32], strides = [1, 1]} : vector<16x96xf32> to vector<16x32xf32>
    %99 = vector.extract_strided_slice %96 {offsets = [0, 0], sizes = [16, 8], strides = [1, 1]} : vector<16x32xf32> to vector<16x8xf32>
    %100 = vector.extract_strided_slice %97 {offsets = [0, 0], sizes = [16, 8], strides = [1, 1]} : vector<16x32xf32> to vector<16x8xf32>
    %101 = vector.extract_strided_slice %98 {offsets = [0, 0], sizes = [16, 8], strides = [1, 1]} : vector<16x32xf32> to vector<16x8xf32>
    %102 = arith.truncf %99 : vector<16x8xf32> to vector<16x8xbf16>
    %103 = tpu.transpose %100, [1, 0] : vector<16x8xf32> -> vector<8x16xf32>
    %104 = arith.truncf %103 : vector<8x16xf32> to vector<8x16xbf16>
    %cst_24 = arith.constant dense<0.000000e+00> : vector<16x16xf32>
    %105 = tpu.matmul %102, %104, %cst_24 {dimension_numbers = #tpu.dot_dimension_numbers<[1], [0], [0], [1], [0, 0, 1, 1], [], []>} : vector<16x8xbf16>, vector<8x16xbf16>, vector<16x16xf32> -> vector<16x16xf32>
    %cst_25 = arith.constant 0.353553385 : f32
    %106 = vector.broadcast %cst_25 : f32 to vector<16x16xf32>
    %107 = arith.mulf %105, %106 : vector<16x16xf32>
    %108 = arith.addf %107, %95 : vector<16x16xf32>
    %cst_26 = arith.constant dense<0xFF800000> : vector<16xf32>
    %109 = vector.multi_reduction <maximumf>, %108, %cst_26 [1] : vector<16x16xf32> to vector<16xf32>
    %110 = vector.shape_cast %109 : vector<16xf32> to vector<16x1xf32>
    %111 = vector.broadcast %110 : vector<16x1xf32> to vector<16x16xf32>
    %112 = arith.subf %108, %111 : vector<16x16xf32>
    %113 = math.exp %112 : vector<16x16xf32>
    %cst_27 = arith.constant dense<0.000000e+00> : vector<16xf32>
    %114 = vector.multi_reduction <add>, %113, %cst_27 [1] : vector<16x16xf32> to vector<16xf32>
    %115 = vector.shape_cast %114 : vector<16xf32> to vector<16x1xf32>
    %116 = tpu.reciprocal %115 {approx = true} : vector<16x1xf32> -> vector<16x1xf32>
    %117 = vector.broadcast %116 : vector<16x1xf32> to vector<16x16xf32>
    %118 = arith.mulf %113, %117 : vector<16x16xf32>
    %119 = arith.truncf %118 : vector<16x16xf32> to vector<16x16xbf16>
    %120 = arith.truncf %101 : vector<16x8xf32> to vector<16x8xbf16>
    %cst_28 = arith.constant dense<0.000000e+00> : vector<16x8xf32>
    %121 = tpu.matmul %119, %120, %cst_28 {dimension_numbers = #tpu.dot_dimension_numbers<[1], [0], [0], [1], [0, 0, 1, 1], [], []>} : vector<16x16xbf16>, vector<16x8xbf16>, vector<16x8xf32> -> vector<16x8xf32>
    %122 = vector.extract_strided_slice %96 {offsets = [0, 8], sizes = [16, 8], strides = [1, 1]} : vector<16x32xf32> to vector<16x8xf32>
    %123 = vector.extract_strided_slice %97 {offsets = [0, 8], sizes = [16, 8], strides = [1, 1]} : vector<16x32xf32> to vector<16x8xf32>
    %124 = vector.extract_strided_slice %98 {offsets = [0, 8], sizes = [16, 8], strides = [1, 1]} : vector<16x32xf32> to vector<16x8xf32>
    %125 = arith.truncf %122 : vector<16x8xf32> to vector<16x8xbf16>
    %126 = tpu.transpose %123, [1, 0] : vector<16x8xf32> -> vector<8x16xf32>
    %127 = arith.truncf %126 : vector<8x16xf32> to vector<8x16xbf16>
    %cst_29 = arith.constant dense<0.000000e+00> : vector<16x16xf32>
    %128 = tpu.matmul %125, %127, %cst_29 {dimension_numbers = #tpu.dot_dimension_numbers<[1], [0], [0], [1], [0, 0, 1, 1], [], []>} : vector<16x8xbf16>, vector<8x16xbf16>, vector<16x16xf32> -> vector<16x16xf32>
    %cst_30 = arith.constant 0.353553385 : f32
    %129 = vector.broadcast %cst_30 : f32 to vector<16x16xf32>
    %130 = arith.mulf %128, %129 : vector<16x16xf32>
    %131 = arith.addf %130, %95 : vector<16x16xf32>
    %cst_31 = arith.constant dense<0xFF800000> : vector<16xf32>
    %132 = vector.multi_reduction <maximumf>, %131, %cst_31 [1] : vector<16x16xf32> to vector<16xf32>
    %133 = vector.shape_cast %132 : vector<16xf32> to vector<16x1xf32>
    %134 = vector.broadcast %133 : vector<16x1xf32> to vector<16x16xf32>
    %135 = arith.subf %131, %134 : vector<16x16xf32>
    %136 = math.exp %135 : vector<16x16xf32>
    %cst_32 = arith.constant dense<0.000000e+00> : vector<16xf32>
    %137 = vector.multi_reduction <add>, %136, %cst_32 [1] : vector<16x16xf32> to vector<16xf32>
    %138 = vector.shape_cast %137 : vector<16xf32> to vector<16x1xf32>
    %139 = tpu.reciprocal %138 {approx = true} : vector<16x1xf32> -> vector<16x1xf32>
    %140 = vector.broadcast %139 : vector<16x1xf32> to vector<16x16xf32>
    %141 = arith.mulf %136, %140 : vector<16x16xf32>
    %142 = arith.truncf %141 : vector<16x16xf32> to vector<16x16xbf16>
    %143 = arith.truncf %124 : vector<16x8xf32> to vector<16x8xbf16>
    %cst_33 = arith.constant dense<0.000000e+00> : vector<16x8xf32>
    %144 = tpu.matmul %142, %143, %cst_33 {dimension_numbers = #tpu.dot_dimension_numbers<[1], [0], [0], [1], [0, 0, 1, 1], [], []>} : vector<16x16xbf16>, vector<16x8xbf16>, vector<16x8xf32> -> vector<16x8xf32>
    %145 = vector.extract_strided_slice %96 {offsets = [0, 16], sizes = [16, 8], strides = [1, 1]} : vector<16x32xf32> to vector<16x8xf32>
    %146 = vector.extract_strided_slice %97 {offsets = [0, 16], sizes = [16, 8], strides = [1, 1]} : vector<16x32xf32> to vector<16x8xf32>
    %147 = vector.extract_strided_slice %98 {offsets = [0, 16], sizes = [16, 8], strides = [1, 1]} : vector<16x32xf32> to vector<16x8xf32>
    %148 = arith.truncf %145 : vector<16x8xf32> to vector<16x8xbf16>
    %149 = tpu.transpose %146, [1, 0] : vector<16x8xf32> -> vector<8x16xf32>
    %150 = arith.truncf %149 : vector<8x16xf32> to vector<8x16xbf16>
    %cst_34 = arith.constant dense<0.000000e+00> : vector<16x16xf32>
    %151 = tpu.matmul %148, %150, %cst_34 {dimension_numbers = #tpu.dot_dimension_numbers<[1], [0], [0], [1], [0, 0, 1, 1], [], []>} : vector<16x8xbf16>, vector<8x16xbf16>, vector<16x16xf32> -> vector<16x16xf32>
    %cst_35 = arith.constant 0.353553385 : f32
    %152 = vector.broadcast %cst_35 : f32 to vector<16x16xf32>
    %153 = arith.mulf %151, %152 : vector<16x16xf32>
    %154 = arith.addf %153, %95 : vector<16x16xf32>
    %cst_36 = arith.constant dense<0xFF800000> : vector<16xf32>
    %155 = vector.multi_reduction <maximumf>, %154, %cst_36 [1] : vector<16x16xf32> to vector<16xf32>
    %156 = vector.shape_cast %155 : vector<16xf32> to vector<16x1xf32>
    %157 = vector.broadcast %156 : vector<16x1xf32> to vector<16x16xf32>
    %158 = arith.subf %154, %157 : vector<16x16xf32>
    %159 = math.exp %158 : vector<16x16xf32>
    %cst_37 = arith.constant dense<0.000000e+00> : vector<16xf32>
    %160 = vector.multi_reduction <add>, %159, %cst_37 [1] : vector<16x16xf32> to vector<16xf32>
    %161 = vector.shape_cast %160 : vector<16xf32> to vector<16x1xf32>
    %162 = tpu.reciprocal %161 {approx = true} : vector<16x1xf32> -> vector<16x1xf32>
    %163 = vector.broadcast %162 : vector<16x1xf32> to vector<16x16xf32>
    %164 = arith.mulf %159, %163 : vector<16x16xf32>
    %165 = arith.truncf %164 : vector<16x16xf32> to vector<16x16xbf16>
    %166 = arith.truncf %147 : vector<16x8xf32> to vector<16x8xbf16>
    %cst_38 = arith.constant dense<0.000000e+00> : vector<16x8xf32>
    %167 = tpu.matmul %165, %166, %cst_38 {dimension_numbers = #tpu.dot_dimension_numbers<[1], [0], [0], [1], [0, 0, 1, 1], [], []>} : vector<16x16xbf16>, vector<16x8xbf16>, vector<16x8xf32> -> vector<16x8xf32>
    %168 = vector.extract_strided_slice %96 {offsets = [0, 24], sizes = [16, 8], strides = [1, 1]} : vector<16x32xf32> to vector<16x8xf32>
    %169 = vector.extract_strided_slice %97 {offsets = [0, 24], sizes = [16, 8], strides = [1, 1]} : vector<16x32xf32> to vector<16x8xf32>
    %170 = vector.extract_strided_slice %98 {offsets = [0, 24], sizes = [16, 8], strides = [1, 1]} : vector<16x32xf32> to vector<16x8xf32>
    %171 = arith.truncf %168 : vector<16x8xf32> to vector<16x8xbf16>
    %172 = tpu.transpose %169, [1, 0] : vector<16x8xf32> -> vector<8x16xf32>
    %173 = arith.truncf %172 : vector<8x16xf32> to vector<8x16xbf16>
    %cst_39 = arith.constant dense<0.000000e+00> : vector<16x16xf32>
    %174 = tpu.matmul %171, %173, %cst_39 {dimension_numbers = #tpu.dot_dimension_numbers<[1], [0], [0], [1], [0, 0, 1, 1], [], []>} : vector<16x8xbf16>, vector<8x16xbf16>, vector<16x16xf32> -> vector<16x16xf32>
    %cst_40 = arith.constant 0.353553385 : f32
    %175 = vector.broadcast %cst_40 : f32 to vector<16x16xf32>
    %176 = arith.mulf %174, %175 : vector<16x16xf32>
    %177 = arith.addf %176, %95 : vector<16x16xf32>
    %cst_41 = arith.constant dense<0xFF800000> : vector<16xf32>
    %178 = vector.multi_reduction <maximumf>, %177, %cst_41 [1] : vector<16x16xf32> to vector<16xf32>
    %179 = vector.shape_cast %178 : vector<16xf32> to vector<16x1xf32>
    %180 = vector.broadcast %179 : vector<16x1xf32> to vector<16x16xf32>
    %181 = arith.subf %177, %180 : vector<16x16xf32>
    %182 = math.exp %181 : vector<16x16xf32>
    %cst_42 = arith.constant dense<0.000000e+00> : vector<16xf32>
    %183 = vector.multi_reduction <add>, %182, %cst_42 [1] : vector<16x16xf32> to vector<16xf32>
    %184 = vector.shape_cast %183 : vector<16xf32> to vector<16x1xf32>
    %185 = tpu.reciprocal %184 {approx = true} : vector<16x1xf32> -> vector<16x1xf32>
    %186 = vector.broadcast %185 : vector<16x1xf32> to vector<16x16xf32>
    %187 = arith.mulf %182, %186 : vector<16x16xf32>
    %188 = arith.truncf %187 : vector<16x16xf32> to vector<16x16xbf16>
    %189 = arith.truncf %170 : vector<16x8xf32> to vector<16x8xbf16>
    %cst_43 = arith.constant dense<0.000000e+00> : vector<16x8xf32>
    %190 = tpu.matmul %188, %189, %cst_43 {dimension_numbers = #tpu.dot_dimension_numbers<[1], [0], [0], [1], [0, 0, 1, 1], [], []>} : vector<16x16xbf16>, vector<16x8xbf16>, vector<16x8xf32> -> vector<16x8xf32>
    %191 = tpu.concatenate %121, %144, %167, %190 in 1 : vector<16x8xf32>, vector<16x8xf32>, vector<16x8xf32>, vector<16x8xf32> -> vector<16x32xf32>
    %192 = arith.truncf %191 : vector<16x32xf32> to vector<16x32xbf16>
    %c0_44 = arith.constant 0 : index
    %c0_45 = arith.constant 0 : index
    %193 = vector.load %arg7[%c0_44, %c0_45] : memref<32x32xbf16, #tpu.memory_space<vmem>>, vector<32x32xbf16>
    %cst_46 = arith.constant dense<0.000000e+00> : vector<16x32xf32>
    %194 = tpu.matmul %192, %193, %cst_46 {dimension_numbers = #tpu.dot_dimension_numbers<[1], [0], [0], [1], [0, 0, 1, 1], [], []>} : vector<16x32xbf16>, vector<32x32xbf16>, vector<16x32xf32> -> vector<16x32xf32>
    %c0_47 = arith.constant 0 : index
    %c0_48 = arith.constant 0 : index
    %195 = vector.load %arg8[%c0_47, %c0_48] : memref<1x32xf32, #tpu.memory_space<vmem>>, vector<1x32xf32>
    %196 = vector.broadcast %195 : vector<1x32xf32> to vector<16x32xf32>
    %197 = arith.addf %194, %196 : vector<16x32xf32>
    %198 = arith.addf %55, %197 : vector<16x32xf32>
    %c0_49 = arith.constant 0 : index
    %c0_50 = arith.constant 0 : index
    %199 = vector.load %arg11[%c0_49, %c0_50] : memref<1x32xf32, #tpu.memory_space<vmem>>, vector<1x32xf32>
    %c0_51 = arith.constant 0 : index
    %c0_52 = arith.constant 0 : index
    %200 = vector.load %arg12[%c0_51, %c0_52] : memref<1x32xf32, #tpu.memory_space<vmem>>, vector<1x32xf32>
    %cst_53 = arith.constant dense<0.000000e+00> : vector<16xf32>
    %201 = vector.multi_reduction <add>, %198, %cst_53 [1] : vector<16x32xf32> to vector<16xf32>
    %202 = vector.shape_cast %201 : vector<16xf32> to vector<16x1xf32>
    %cst_54 = arith.constant 3.200000e+01 : f32
    %203 = vector.broadcast %cst_54 : f32 to vector<16x1xf32>
    %204 = arith.divf %202, %203 : vector<16x1xf32>
    %205 = vector.broadcast %204 : vector<16x1xf32> to vector<16x32xf32>
    %206 = arith.subf %198, %205 : vector<16x32xf32>
    %207 = arith.mulf %206, %206 : vector<16x32xf32>
    %cst_55 = arith.constant dense<0.000000e+00> : vector<16xf32>
    %208 = vector.multi_reduction <add>, %207, %cst_55 [1] : vector<16x32xf32> to vector<16xf32>
    %209 = vector.shape_cast %208 : vector<16xf32> to vector<16x1xf32>
    %cst_56 = arith.constant 3.200000e+01 : f32
    %210 = vector.broadcast %cst_56 : f32 to vector<16x1xf32>
    %211 = arith.divf %209, %210 : vector<16x1xf32>
    %212 = vector.broadcast %204 : vector<16x1xf32> to vector<16x32xf32>
    %213 = arith.subf %198, %212 : vector<16x32xf32>
    %cst_57 = arith.constant 9.99999974E-6 : f32
    %214 = vector.broadcast %cst_57 : f32 to vector<16x1xf32>
    %215 = arith.addf %211, %214 : vector<16x1xf32>
    %216 = math.rsqrt %215 : vector<16x1xf32>
    %217 = vector.broadcast %216 : vector<16x1xf32> to vector<16x32xf32>
    %218 = arith.mulf %213, %217 : vector<16x32xf32>
    %219 = vector.broadcast %199 : vector<1x32xf32> to vector<16x32xf32>
    %220 = arith.mulf %218, %219 : vector<16x32xf32>
    %221 = vector.broadcast %200 : vector<1x32xf32> to vector<16x32xf32>
    %222 = arith.addf %220, %221 : vector<16x32xf32>
    %223 = arith.truncf %222 : vector<16x32xf32> to vector<16x32xbf16>
    %c0_58 = arith.constant 0 : index
    %c0_59 = arith.constant 0 : index
    %224 = vector.load %arg13[%c0_58, %c0_59] : memref<32x64xbf16, #tpu.memory_space<vmem>>, vector<32x64xbf16>
    %cst_60 = arith.constant dense<0.000000e+00> : vector<16x64xf32>
    %225 = tpu.matmul %223, %224, %cst_60 {dimension_numbers = #tpu.dot_dimension_numbers<[1], [0], [0], [1], [0, 0, 1, 1], [], []>} : vector<16x32xbf16>, vector<32x64xbf16>, vector<16x64xf32> -> vector<16x64xf32>
    %c0_61 = arith.constant 0 : index
    %c0_62 = arith.constant 0 : index
    %226 = vector.load %arg14[%c0_61, %c0_62] : memref<1x64xf32, #tpu.memory_space<vmem>>, vector<1x64xf32>
    %227 = vector.broadcast %226 : vector<1x64xf32> to vector<16x64xf32>
    %228 = arith.addf %225, %227 : vector<16x64xf32>
    %229 = arith.mulf %228, %228 : vector<16x64xf32>
    %230 = arith.mulf %228, %229 : vector<16x64xf32>
    %cst_63 = arith.constant 4.471500e-02 : f32
    %231 = vector.broadcast %cst_63 : f32 to vector<16x64xf32>
    %232 = arith.mulf %231, %230 : vector<16x64xf32>
    %233 = arith.addf %228, %232 : vector<16x64xf32>
    %cst_64 = arith.constant 0.797884583 : f32
    %234 = vector.broadcast %cst_64 : f32 to vector<16x64xf32>
    %235 = arith.mulf %234, %233 : vector<16x64xf32>
    %236 = math.tanh %235 : vector<16x64xf32>
    %cst_65 = arith.constant 1.000000e+00 : f32
    %237 = vector.broadcast %cst_65 : f32 to vector<16x64xf32>
    %238 = arith.addf %237, %236 : vector<16x64xf32>
    %cst_66 = arith.constant 5.000000e-01 : f32
    %239 = vector.broadcast %cst_66 : f32 to vector<16x64xf32>
    %240 = arith.mulf %239, %238 : vector<16x64xf32>
    %241 = arith.mulf %228, %240 : vector<16x64xf32>
    %242 = arith.truncf %241 : vector<16x64xf32> to vector<16x64xbf16>
    %c0_67 = arith.constant 0 : index
    %c0_68 = arith.constant 0 : index
    %243 = vector.load %arg15[%c0_67, %c0_68] : memref<64x32xbf16, #tpu.memory_space<vmem>>, vector<64x32xbf16>
    %cst_69 = arith.constant dense<0.000000e+00> : vector<16x32xf32>
    %244 = tpu.matmul %242, %243, %cst_69 {dimension_numbers = #tpu.dot_dimension_numbers<[1], [0], [0], [1], [0, 0, 1, 1], [], []>} : vector<16x64xbf16>, vector<64x32xbf16>, vector<16x32xf32> -> vector<16x32xf32>
    %c0_70 = arith.constant 0 : index
    %c0_71 = arith.constant 0 : index
    %245 = vector.load %arg16[%c0_70, %c0_71] : memref<1x32xf32, #tpu.memory_space<vmem>>, vector<1x32xf32>
    %246 = vector.broadcast %245 : vector<1x32xf32> to vector<16x32xf32>
    %247 = arith.addf %244, %246 : vector<16x32xf32>
    %248 = arith.addf %198, %247 : vector<16x32xf32>
    %c0_72 = arith.constant 0 : index
    %c0_73 = arith.constant 0 : index
    %249 = vector.load %arg17[%c0_72, %c0_73] : memref<1x32xf32, #tpu.memory_space<vmem>>, vector<1x32xf32>
    %c0_74 = arith.constant 0 : index
    %c0_75 = arith.constant 0 : index
    %250 = vector.load %arg18[%c0_74, %c0_75] : memref<1x32xf32, #tpu.memory_space<vmem>>, vector<1x32xf32>
    %cst_76 = arith.constant dense<0.000000e+00> : vector<16xf32>
    %251 = vector.multi_reduction <add>, %248, %cst_76 [1] : vector<16x32xf32> to vector<16xf32>
    %252 = vector.shape_cast %251 : vector<16xf32> to vector<16x1xf32>
    %cst_77 = arith.constant 3.200000e+01 : f32
    %253 = vector.broadcast %cst_77 : f32 to vector<16x1xf32>
    %254 = arith.divf %252, %253 : vector<16x1xf32>
    %255 = vector.broadcast %254 : vector<16x1xf32> to vector<16x32xf32>
    %256 = arith.subf %248, %255 : vector<16x32xf32>
    %257 = arith.mulf %256, %256 : vector<16x32xf32>
    %cst_78 = arith.constant dense<0.000000e+00> : vector<16xf32>
    %258 = vector.multi_reduction <add>, %257, %cst_78 [1] : vector<16x32xf32> to vector<16xf32>
    %259 = vector.shape_cast %258 : vector<16xf32> to vector<16x1xf32>
    %cst_79 = arith.constant 3.200000e+01 : f32
    %260 = vector.broadcast %cst_79 : f32 to vector<16x1xf32>
    %261 = arith.divf %259, %260 : vector<16x1xf32>
    %262 = vector.broadcast %254 : vector<16x1xf32> to vector<16x32xf32>
    %263 = arith.subf %248, %262 : vector<16x32xf32>
    %cst_80 = arith.constant 9.99999974E-6 : f32
    %264 = vector.broadcast %cst_80 : f32 to vector<16x1xf32>
    %265 = arith.addf %261, %264 : vector<16x1xf32>
    %266 = math.rsqrt %265 : vector<16x1xf32>
    %267 = vector.broadcast %266 : vector<16x1xf32> to vector<16x32xf32>
    %268 = arith.mulf %263, %267 : vector<16x32xf32>
    %269 = vector.broadcast %249 : vector<1x32xf32> to vector<16x32xf32>
    %270 = arith.mulf %268, %269 : vector<16x32xf32>
    %271 = vector.broadcast %250 : vector<1x32xf32> to vector<16x32xf32>
    %272 = arith.addf %270, %271 : vector<16x32xf32>
    %273 = arith.truncf %272 : vector<16x32xf32> to vector<16x32xbf16>
    %c0_81 = arith.constant 0 : index
    %c0_82 = arith.constant 0 : index
    %274 = vector.load %arg19[%c0_81, %c0_82] : memref<32x64xbf16, #tpu.memory_space<vmem>>, vector<32x64xbf16>
    %cst_83 = arith.constant dense<0.000000e+00> : vector<16x64xf32>
    %275 = tpu.matmul %273, %274, %cst_83 {dimension_numbers = #tpu.dot_dimension_numbers<[1], [0], [0], [1], [0, 0, 1, 1], [], []>} : vector<16x32xbf16>, vector<32x64xbf16>, vector<16x64xf32> -> vector<16x64xf32>
    %c0_84 = arith.constant 0 : index
    %c0_85 = arith.constant 0 : index
    %276 = vector.load %arg20[%c0_84, %c0_85] : memref<1x64xf32, #tpu.memory_space<vmem>>, vector<1x64xf32>
    %277 = vector.broadcast %276 : vector<1x64xf32> to vector<16x64xf32>
    %278 = arith.addf %275, %277 : vector<16x64xf32>
    %c0_86 = arith.constant 0 : index
    %c0_87 = arith.constant 0 : index
    %c0_88 = arith.constant 0 : index
    %279 = vector.load %arg21[%c0_86, %c0_87, %c0_88] : memref<1x16x64xf32, #tpu.memory_space<vmem>>, vector<1x16x64xf32>
    %280 = vector.shape_cast %279 : vector<1x16x64xf32> to vector<16x64xf32>
    %281 = vector.shape_cast %278 : vector<16x64xf32> to vector<1x16x64xf32>
    tpu.vector_store %arg21[%c0_86, %c0_87, %c0_88], %281 {strides = array<i32>} : memref<1x16x64xf32, #tpu.memory_space<vmem>>, vector<1x16x64xf32>,
    return
  }
  func.func @transform_0(%arg0: i32, %arg1: memref<2x8xi32, #tpu.memory_space<smem>>) -> (i32, i32, i32) {
    %c0_i32 = arith.constant 0 : i32
    %c0_i32_0 = arith.constant 0 : i32
    %c0_i32_1 = arith.constant 0 : i32
    return %arg0, %c0_i32, %c0_i32_0 : i32, i32, i32
  }
  func.func @transform_1(%arg0: i32, %arg1: memref<2x8xi32, #tpu.memory_space<smem>>) -> (i32, i32, i32) {
    %c0_i32 = arith.constant 0 : i32
    %c0_i32_0 = arith.constant 0 : i32
    %c0_i32_1 = arith.constant 0 : i32
    return %arg0, %c0_i32, %c0_i32_0 : i32, i32, i32
  }
  func.func @transform_2(%arg0: i32, %arg1: memref<2x8xi32, #tpu.memory_space<smem>>) -> (i32, i32) {
    %c0_i32 = arith.constant 0 : i32
    %c0_i32_0 = arith.constant 0 : i32
    %c0_i32_1 = arith.constant 0 : i32
    return %c0_i32, %c0_i32_0 : i32, i32
  }
  func.func @transform_3(%arg0: i32, %arg1: memref<2x8xi32, #tpu.memory_space<smem>>) -> (i32, i32) {
    %c0_i32 = arith.constant 0 : i32
    %c0_i32_0 = arith.constant 0 : i32
    %c0_i32_1 = arith.constant 0 : i32
    return %c0_i32, %c0_i32_0 : i32, i32
  }
  func.func @transform_4(%arg0: i32, %arg1: memref<2x8xi32, #tpu.memory_space<smem>>) -> (i32, i32) {
    %c0_i32 = arith.constant 0 : i32
    %c0_i32_0 = arith.constant 0 : i32
    %c0_i32_1 = arith.constant 0 : i32
    return %c0_i32, %c0_i32_0 : i32, i32
  }
  func.func @transform_5(%arg0: i32, %arg1: memref<2x8xi32, #tpu.memory_space<smem>>) -> (i32, i32) {
    %c0_i32 = arith.constant 0 : i32
    %c0_i32_0 = arith.constant 0 : i32
    %c0_i32_1 = arith.constant 0 : i32
    return %c0_i32, %c0_i32_0 : i32, i32
  }
  func.func @transform_6(%arg0: i32, %arg1: memref<2x8xi32, #tpu.memory_space<smem>>) -> (i32, i32) {
    %c0_i32 = arith.constant 0 : i32
    %c0_i32_0 = arith.constant 0 : i32
    %c0_i32_1 = arith.constant 0 : i32
    return %c0_i32, %c0_i32_0 : i32, i32
  }
  func.func @transform_7(%arg0: i32, %arg1: memref<2x8xi32, #tpu.memory_space<smem>>) -> (i32, i32) {
    %c0_i32 = arith.constant 0 : i32
    %c0_i32_0 = arith.constant 0 : i32
    %c0_i32_1 = arith.constant 0 : i32
    return %c0_i32, %c0_i32_0 : i32, i32
  }
  func.func @transform_8(%arg0: i32, %arg1: memref<2x8xi32, #tpu.memory_space<smem>>) -> (i32, i32) {
    %c0_i32 = arith.constant 0 : i32
    %c0_i32_0 = arith.constant 0 : i32
    %c0_i32_1 = arith.constant 0 : i32
    return %c0_i32, %c0_i32_0 : i32, i32
  }
  func.func @transform_9(%arg0: i32, %arg1: memref<2x8xi32, #tpu.memory_space<smem>>) -> (i32, i32) {
    %c0_i32 = arith.constant 0 : i32
    %c0_i32_0 = arith.constant 0 : i32
    %c0_i32_1 = arith.constant 0 : i32
    return %c0_i32, %c0_i32_0 : i32, i32
  }
  func.func @transform_10(%arg0: i32, %arg1: memref<2x8xi32, #tpu.memory_space<smem>>) -> (i32, i32) {
    %c0_i32 = arith.constant 0 : i32
    %c0_i32_0 = arith.constant 0 : i32
    %c0_i32_1 = arith.constant 0 : i32
    return %c0_i32, %c0_i32_0 : i32, i32
  }
  func.func @transform_11(%arg0: i32, %arg1: memref<2x8xi32, #tpu.memory_space<smem>>) -> (i32, i32) {
    %c0_i32 = arith.constant 0 : i32
    %c0_i32_0 = arith.constant 0 : i32
    %c0_i32_1 = arith.constant 0 : i32
    return %c0_i32, %c0_i32_0 : i32, i32
  }
  func.func @transform_12(%arg0: i32, %arg1: memref<2x8xi32, #tpu.memory_space<smem>>) -> (i32, i32) {
    %c0_i32 = arith.constant 0 : i32
    %c0_i32_0 = arith.constant 0 : i32
    %c0_i32_1 = arith.constant 0 : i32
    return %c0_i32, %c0_i32_0 : i32, i32
  }
  func.func @transform_13(%arg0: i32, %arg1: memref<2x8xi32, #tpu.memory_space<smem>>) -> (i32, i32) {
    %c0_i32 = arith.constant 0 : i32
    %c0_i32_0 = arith.constant 0 : i32
    %c0_i32_1 = arith.constant 0 : i32
    return %c0_i32, %c0_i32_0 : i32, i32
  }
  func.func @transform_14(%arg0: i32, %arg1: memref<2x8xi32, #tpu.memory_space<smem>>) -> (i32, i32) {
    %c0_i32 = arith.constant 0 : i32
    %c0_i32_0 = arith.constant 0 : i32
    %c0_i32_1 = arith.constant 0 : i32
    return %c0_i32, %c0_i32_0 : i32, i32
  }
  func.func @transform_15(%arg0: i32, %arg1: memref<2x8xi32, #tpu.memory_space<smem>>) -> (i32, i32) {
    %c0_i32 = arith.constant 0 : i32
    %c0_i32_0 = arith.constant 0 : i32
    %c0_i32_1 = arith.constant 0 : i32
    return %c0_i32, %c0_i32_0 : i32, i32
  }
  func.func @transform_16(%arg0: i32, %arg1: memref<2x8xi32, #tpu.memory_space<smem>>) -> (i32, i32) {
    %c0_i32 = arith.constant 0 : i32
    %c0_i32_0 = arith.constant 0 : i32
    %c0_i32_1 = arith.constant 0 : i32
    return %c0_i32, %c0_i32_0 : i32, i32
  }
  func.func @transform_17(%arg0: i32, %arg1: memref<2x8xi32, #tpu.memory_space<smem>>) -> (i32, i32) {
    %c0_i32 = arith.constant 0 : i32
    %c0_i32_0 = arith.constant 0 : i32
    %c0_i32_1 = arith.constant 0 : i32
    return %c0_i32, %c0_i32_0 : i32, i32
  }
  func.func @transform_18(%arg0: i32, %arg1: memref<2x8xi32, #tpu.memory_space<smem>>) -> (i32, i32) {
    %c0_i32 = arith.constant 0 : i32
    %c0_i32_0 = arith.constant 0 : i32
    %c0_i32_1 = arith.constant 0 : i32
    return %c0_i32, %c0_i32_0 : i32, i32
  }
  func.func @transform_19(%arg0: i32, %arg1: memref<2x8xi32, #tpu.memory_space<smem>>) -> (i32, i32, i32) {
    %c0_i32 = arith.constant 0 : i32
    %c0_i32_0 = arith.constant 0 : i32
    %c0_i32_1 = arith.constant 0 : i32
    return %arg0, %c0_i32, %c0_i32_0 : i32, i32, i32
  }
}

module attributes {stable_mosaic.version = 11 : i64} {
  func.func @_qformer_kernel(%arg0: i32, %arg1: memref<8x32xf32, #tpu.memory_space<vmem>>, %arg2: memref<1x8x32xf32, #tpu.memory_space<vmem>>, %arg3: memref<32x96xbf16, #tpu.memory_space<vmem>>, %arg4: memref<1x96xf32, #tpu.memory_space<vmem>>, %arg5: memref<32x32xbf16, #tpu.memory_space<vmem>>, %arg6: memref<1x32xf32, #tpu.memory_space<vmem>>, %arg7: memref<1x32xf32, #tpu.memory_space<vmem>>, %arg8: memref<1x32xf32, #tpu.memory_space<vmem>>, %arg9: memref<32x32xbf16, #tpu.memory_space<vmem>>, %arg10: memref<1x32xf32, #tpu.memory_space<vmem>>, %arg11: memref<32x64xbf16, #tpu.memory_space<vmem>>, %arg12: memref<1x64xf32, #tpu.memory_space<vmem>>, %arg13: memref<32x32xbf16, #tpu.memory_space<vmem>>, %arg14: memref<1x32xf32, #tpu.memory_space<vmem>>, %arg15: memref<1x32xf32, #tpu.memory_space<vmem>>, %arg16: memref<1x32xf32, #tpu.memory_space<vmem>>, %arg17: memref<32x64xbf16, #tpu.memory_space<vmem>>, %arg18: memref<1x64xf32, #tpu.memory_space<vmem>>, %arg19: memref<64x32xbf16, #tpu.memory_space<vmem>>, %arg20: memref<1x32xf32, #tpu.memory_space<vmem>>, %arg21: memref<1x32xf32, #tpu.memory_space<vmem>>, %arg22: memref<1x32xf32, #tpu.memory_space<vmem>>, %arg23: memref<32x32xbf16, #tpu.memory_space<vmem>>, %arg24: memref<1x32xf32, #tpu.memory_space<vmem>>, %arg25: memref<1x8x32xf32, #tpu.memory_space<vmem>>, %arg26: memref<1x8x32xf32, #tpu.memory_space<vmem>>) attributes {dimension_semantics = [#tpu.dimension_semantics<parallel>], iteration_bounds = array<i64: 2>, scalar_prefetch = 0 : i64, scratch_operands = 0 : i64, tpu.core_type = #tpu.core_type<tc>, window_params = [{pipeline_mode = #tpu.pipeline_mode<synchronous>, transform_indices = @transform_0, window_bounds = array<i64: 8, 32>}, {transform_indices = @transform_1, window_bounds = array<i64: 1, 8, 32>}, {pipeline_mode = #tpu.pipeline_mode<synchronous>, transform_indices = @transform_2, window_bounds = array<i64: 32, 96>}, {pipeline_mode = #tpu.pipeline_mode<synchronous>, transform_indices = @transform_3, window_bounds = array<i64: 1, 96>}, {pipeline_mode = #tpu.pipeline_mode<synchronous>, transform_indices = @transform_4, window_bounds = array<i64: 32, 32>}, {pipeline_mode = #tpu.pipeline_mode<synchronous>, transform_indices = @transform_5, window_bounds = array<i64: 1, 32>}, {pipeline_mode = #tpu.pipeline_mode<synchronous>, transform_indices = @transform_6, window_bounds = array<i64: 1, 32>}, {pipeline_mode = #tpu.pipeline_mode<synchronous>, transform_indices = @transform_7, window_bounds = array<i64: 1, 32>}, {pipeline_mode = #tpu.pipeline_mode<synchronous>, transform_indices = @transform_8, window_bounds = array<i64: 32, 32>}, {pipeline_mode = #tpu.pipeline_mode<synchronous>, transform_indices = @transform_9, window_bounds = array<i64: 1, 32>}, {pipeline_mode = #tpu.pipeline_mode<synchronous>, transform_indices = @transform_10, window_bounds = array<i64: 32, 64>}, {pipeline_mode = #tpu.pipeline_mode<synchronous>, transform_indices = @transform_11, window_bounds = array<i64: 1, 64>}, {pipeline_mode = #tpu.pipeline_mode<synchronous>, transform_indices = @transform_12, window_bounds = array<i64: 32, 32>}, {pipeline_mode = #tpu.pipeline_mode<synchronous>, transform_indices = @transform_13, window_bounds = array<i64: 1, 32>}, {pipeline_mode = #tpu.pipeline_mode<synchronous>, transform_indices = @transform_14, window_bounds = array<i64: 1, 32>}, {pipeline_mode = #tpu.pipeline_mode<synchronous>, transform_indices = @transform_15, window_bounds = array<i64: 1, 32>}, {pipeline_mode = #tpu.pipeline_mode<synchronous>, transform_indices = @transform_16, window_bounds = array<i64: 32, 64>}, {pipeline_mode = #tpu.pipeline_mode<synchronous>, transform_indices = @transform_17, window_bounds = array<i64: 1, 64>}, {pipeline_mode = #tpu.pipeline_mode<synchronous>, transform_indices = @transform_18, window_bounds = array<i64: 64, 32>}, {pipeline_mode = #tpu.pipeline_mode<synchronous>, transform_indices = @transform_19, window_bounds = array<i64: 1, 32>}, {pipeline_mode = #tpu.pipeline_mode<synchronous>, transform_indices = @transform_20, window_bounds = array<i64: 1, 32>}, {pipeline_mode = #tpu.pipeline_mode<synchronous>, transform_indices = @transform_21, window_bounds = array<i64: 1, 32>}, {pipeline_mode = #tpu.pipeline_mode<synchronous>, transform_indices = @transform_22, window_bounds = array<i64: 32, 32>}, {pipeline_mode = #tpu.pipeline_mode<synchronous>, transform_indices = @transform_23, window_bounds = array<i64: 1, 32>}, {transform_indices = @transform_24, window_bounds = array<i64: 1, 8, 32>}, {transform_indices = @transform_25, window_bounds = array<i64: 1, 8, 32>}]} {
    %c0 = arith.constant 0 : index
    %c0_0 = arith.constant 0 : index
    %0 = vector.load %arg1[%c0, %c0_0] : memref<8x32xf32, #tpu.memory_space<vmem>>, vector<8x32xf32>
    %c0_1 = arith.constant 0 : index
    %c0_2 = arith.constant 0 : index
    %c0_3 = arith.constant 0 : index
    %1 = vector.load %arg2[%c0_1, %c0_2, %c0_3] : memref<1x8x32xf32, #tpu.memory_space<vmem>>, vector<1x8x32xf32>
    %2 = vector.shape_cast %1 : vector<1x8x32xf32> to vector<8x32xf32>
    %3 = arith.truncf %0 : vector<8x32xf32> to vector<8x32xbf16>
    %c0_4 = arith.constant 0 : index
    %c0_5 = arith.constant 0 : index
    %4 = vector.load %arg3[%c0_4, %c0_5] : memref<32x96xbf16, #tpu.memory_space<vmem>>, vector<32x96xbf16>
    %cst = arith.constant dense<0.000000e+00> : vector<8x96xf32>
    %5 = tpu.matmul %3, %4, %cst {dimension_numbers = #tpu.dot_dimension_numbers<[1], [0], [0], [1], [0, 0, 1, 1], [], []>} : vector<8x32xbf16>, vector<32x96xbf16>, vector<8x96xf32> -> vector<8x96xf32>
    %c0_6 = arith.constant 0 : index
    %c0_7 = arith.constant 0 : index
    %6 = vector.load %arg4[%c0_6, %c0_7] : memref<1x96xf32, #tpu.memory_space<vmem>>, vector<1x96xf32>
    %7 = vector.broadcast %6 : vector<1x96xf32> to vector<8x96xf32>
    %8 = arith.addf %5, %7 : vector<8x96xf32>
    %9 = vector.extract_strided_slice %8 {offsets = [0, 0], sizes = [8, 32], strides = [1, 1]} : vector<8x96xf32> to vector<8x32xf32>
    %10 = vector.extract_strided_slice %8 {offsets = [0, 32], sizes = [8, 32], strides = [1, 1]} : vector<8x96xf32> to vector<8x32xf32>
    %11 = vector.extract_strided_slice %8 {offsets = [0, 64], sizes = [8, 32], strides = [1, 1]} : vector<8x96xf32> to vector<8x32xf32>
    %12 = vector.extract_strided_slice %9 {offsets = [0, 0], sizes = [8, 8], strides = [1, 1]} : vector<8x32xf32> to vector<8x8xf32>
    %13 = vector.extract_strided_slice %10 {offsets = [0, 0], sizes = [8, 8], strides = [1, 1]} : vector<8x32xf32> to vector<8x8xf32>
    %14 = vector.extract_strided_slice %11 {offsets = [0, 0], sizes = [8, 8], strides = [1, 1]} : vector<8x32xf32> to vector<8x8xf32>
    %15 = arith.truncf %12 : vector<8x8xf32> to vector<8x8xbf16>
    %16 = tpu.transpose %13, [1, 0] : vector<8x8xf32> -> vector<8x8xf32>
    %17 = arith.truncf %16 : vector<8x8xf32> to vector<8x8xbf16>
    %cst_8 = arith.constant dense<0.000000e+00> : vector<8x8xf32>
    %18 = tpu.matmul %15, %17, %cst_8 {dimension_numbers = #tpu.dot_dimension_numbers<[1], [0], [0], [1], [0, 0, 1, 1], [], []>} : vector<8x8xbf16>, vector<8x8xbf16>, vector<8x8xf32> -> vector<8x8xf32>
    %cst_9 = arith.constant 0.353553385 : f32
    %19 = vector.broadcast %cst_9 : f32 to vector<8x8xf32>
    %20 = arith.mulf %18, %19 : vector<8x8xf32>
    %cst_10 = arith.constant dense<0xFF800000> : vector<8xf32>
    %21 = vector.multi_reduction <maximumf>, %20, %cst_10 [1] : vector<8x8xf32> to vector<8xf32>
    %22 = vector.shape_cast %21 : vector<8xf32> to vector<8x1xf32>
    %23 = vector.broadcast %22 : vector<8x1xf32> to vector<8x8xf32>
    %24 = arith.subf %20, %23 : vector<8x8xf32>
    %25 = math.exp %24 : vector<8x8xf32>
    %cst_11 = arith.constant dense<0.000000e+00> : vector<8xf32>
    %26 = vector.multi_reduction <add>, %25, %cst_11 [1] : vector<8x8xf32> to vector<8xf32>
    %27 = vector.shape_cast %26 : vector<8xf32> to vector<8x1xf32>
    %28 = tpu.reciprocal %27 {approx = true} : vector<8x1xf32> -> vector<8x1xf32>
    %29 = vector.broadcast %28 : vector<8x1xf32> to vector<8x8xf32>
    %30 = arith.mulf %25, %29 : vector<8x8xf32>
    %31 = arith.truncf %30 : vector<8x8xf32> to vector<8x8xbf16>
    %32 = arith.truncf %14 : vector<8x8xf32> to vector<8x8xbf16>
    %cst_12 = arith.constant dense<0.000000e+00> : vector<8x8xf32>
    %33 = tpu.matmul %31, %32, %cst_12 {dimension_numbers = #tpu.dot_dimension_numbers<[1], [0], [0], [1], [0, 0, 1, 1], [], []>} : vector<8x8xbf16>, vector<8x8xbf16>, vector<8x8xf32> -> vector<8x8xf32>
    %34 = vector.extract_strided_slice %9 {offsets = [0, 8], sizes = [8, 8], strides = [1, 1]} : vector<8x32xf32> to vector<8x8xf32>
    %35 = vector.extract_strided_slice %10 {offsets = [0, 8], sizes = [8, 8], strides = [1, 1]} : vector<8x32xf32> to vector<8x8xf32>
    %36 = vector.extract_strided_slice %11 {offsets = [0, 8], sizes = [8, 8], strides = [1, 1]} : vector<8x32xf32> to vector<8x8xf32>
    %37 = arith.truncf %34 : vector<8x8xf32> to vector<8x8xbf16>
    %38 = tpu.transpose %35, [1, 0] : vector<8x8xf32> -> vector<8x8xf32>
    %39 = arith.truncf %38 : vector<8x8xf32> to vector<8x8xbf16>
    %cst_13 = arith.constant dense<0.000000e+00> : vector<8x8xf32>
    %40 = tpu.matmul %37, %39, %cst_13 {dimension_numbers = #tpu.dot_dimension_numbers<[1], [0], [0], [1], [0, 0, 1, 1], [], []>} : vector<8x8xbf16>, vector<8x8xbf16>, vector<8x8xf32> -> vector<8x8xf32>
    %cst_14 = arith.constant 0.353553385 : f32
    %41 = vector.broadcast %cst_14 : f32 to vector<8x8xf32>
    %42 = arith.mulf %40, %41 : vector<8x8xf32>
    %cst_15 = arith.constant dense<0xFF800000> : vector<8xf32>
    %43 = vector.multi_reduction <maximumf>, %42, %cst_15 [1] : vector<8x8xf32> to vector<8xf32>
    %44 = vector.shape_cast %43 : vector<8xf32> to vector<8x1xf32>
    %45 = vector.broadcast %44 : vector<8x1xf32> to vector<8x8xf32>
    %46 = arith.subf %42, %45 : vector<8x8xf32>
    %47 = math.exp %46 : vector<8x8xf32>
    %cst_16 = arith.constant dense<0.000000e+00> : vector<8xf32>
    %48 = vector.multi_reduction <add>, %47, %cst_16 [1] : vector<8x8xf32> to vector<8xf32>
    %49 = vector.shape_cast %48 : vector<8xf32> to vector<8x1xf32>
    %50 = tpu.reciprocal %49 {approx = true} : vector<8x1xf32> -> vector<8x1xf32>
    %51 = vector.broadcast %50 : vector<8x1xf32> to vector<8x8xf32>
    %52 = arith.mulf %47, %51 : vector<8x8xf32>
    %53 = arith.truncf %52 : vector<8x8xf32> to vector<8x8xbf16>
    %54 = arith.truncf %36 : vector<8x8xf32> to vector<8x8xbf16>
    %cst_17 = arith.constant dense<0.000000e+00> : vector<8x8xf32>
    %55 = tpu.matmul %53, %54, %cst_17 {dimension_numbers = #tpu.dot_dimension_numbers<[1], [0], [0], [1], [0, 0, 1, 1], [], []>} : vector<8x8xbf16>, vector<8x8xbf16>, vector<8x8xf32> -> vector<8x8xf32>
    %56 = vector.extract_strided_slice %9 {offsets = [0, 16], sizes = [8, 8], strides = [1, 1]} : vector<8x32xf32> to vector<8x8xf32>
    %57 = vector.extract_strided_slice %10 {offsets = [0, 16], sizes = [8, 8], strides = [1, 1]} : vector<8x32xf32> to vector<8x8xf32>
    %58 = vector.extract_strided_slice %11 {offsets = [0, 16], sizes = [8, 8], strides = [1, 1]} : vector<8x32xf32> to vector<8x8xf32>
    %59 = arith.truncf %56 : vector<8x8xf32> to vector<8x8xbf16>
    %60 = tpu.transpose %57, [1, 0] : vector<8x8xf32> -> vector<8x8xf32>
    %61 = arith.truncf %60 : vector<8x8xf32> to vector<8x8xbf16>
    %cst_18 = arith.constant dense<0.000000e+00> : vector<8x8xf32>
    %62 = tpu.matmul %59, %61, %cst_18 {dimension_numbers = #tpu.dot_dimension_numbers<[1], [0], [0], [1], [0, 0, 1, 1], [], []>} : vector<8x8xbf16>, vector<8x8xbf16>, vector<8x8xf32> -> vector<8x8xf32>
    %cst_19 = arith.constant 0.353553385 : f32
    %63 = vector.broadcast %cst_19 : f32 to vector<8x8xf32>
    %64 = arith.mulf %62, %63 : vector<8x8xf32>
    %cst_20 = arith.constant dense<0xFF800000> : vector<8xf32>
    %65 = vector.multi_reduction <maximumf>, %64, %cst_20 [1] : vector<8x8xf32> to vector<8xf32>
    %66 = vector.shape_cast %65 : vector<8xf32> to vector<8x1xf32>
    %67 = vector.broadcast %66 : vector<8x1xf32> to vector<8x8xf32>
    %68 = arith.subf %64, %67 : vector<8x8xf32>
    %69 = math.exp %68 : vector<8x8xf32>
    %cst_21 = arith.constant dense<0.000000e+00> : vector<8xf32>
    %70 = vector.multi_reduction <add>, %69, %cst_21 [1] : vector<8x8xf32> to vector<8xf32>
    %71 = vector.shape_cast %70 : vector<8xf32> to vector<8x1xf32>
    %72 = tpu.reciprocal %71 {approx = true} : vector<8x1xf32> -> vector<8x1xf32>
    %73 = vector.broadcast %72 : vector<8x1xf32> to vector<8x8xf32>
    %74 = arith.mulf %69, %73 : vector<8x8xf32>
    %75 = arith.truncf %74 : vector<8x8xf32> to vector<8x8xbf16>
    %76 = arith.truncf %58 : vector<8x8xf32> to vector<8x8xbf16>
    %cst_22 = arith.constant dense<0.000000e+00> : vector<8x8xf32>
    %77 = tpu.matmul %75, %76, %cst_22 {dimension_numbers = #tpu.dot_dimension_numbers<[1], [0], [0], [1], [0, 0, 1, 1], [], []>} : vector<8x8xbf16>, vector<8x8xbf16>, vector<8x8xf32> -> vector<8x8xf32>
    %78 = vector.extract_strided_slice %9 {offsets = [0, 24], sizes = [8, 8], strides = [1, 1]} : vector<8x32xf32> to vector<8x8xf32>
    %79 = vector.extract_strided_slice %10 {offsets = [0, 24], sizes = [8, 8], strides = [1, 1]} : vector<8x32xf32> to vector<8x8xf32>
    %80 = vector.extract_strided_slice %11 {offsets = [0, 24], sizes = [8, 8], strides = [1, 1]} : vector<8x32xf32> to vector<8x8xf32>
    %81 = arith.truncf %78 : vector<8x8xf32> to vector<8x8xbf16>
    %82 = tpu.transpose %79, [1, 0] : vector<8x8xf32> -> vector<8x8xf32>
    %83 = arith.truncf %82 : vector<8x8xf32> to vector<8x8xbf16>
    %cst_23 = arith.constant dense<0.000000e+00> : vector<8x8xf32>
    %84 = tpu.matmul %81, %83, %cst_23 {dimension_numbers = #tpu.dot_dimension_numbers<[1], [0], [0], [1], [0, 0, 1, 1], [], []>} : vector<8x8xbf16>, vector<8x8xbf16>, vector<8x8xf32> -> vector<8x8xf32>
    %cst_24 = arith.constant 0.353553385 : f32
    %85 = vector.broadcast %cst_24 : f32 to vector<8x8xf32>
    %86 = arith.mulf %84, %85 : vector<8x8xf32>
    %cst_25 = arith.constant dense<0xFF800000> : vector<8xf32>
    %87 = vector.multi_reduction <maximumf>, %86, %cst_25 [1] : vector<8x8xf32> to vector<8xf32>
    %88 = vector.shape_cast %87 : vector<8xf32> to vector<8x1xf32>
    %89 = vector.broadcast %88 : vector<8x1xf32> to vector<8x8xf32>
    %90 = arith.subf %86, %89 : vector<8x8xf32>
    %91 = math.exp %90 : vector<8x8xf32>
    %cst_26 = arith.constant dense<0.000000e+00> : vector<8xf32>
    %92 = vector.multi_reduction <add>, %91, %cst_26 [1] : vector<8x8xf32> to vector<8xf32>
    %93 = vector.shape_cast %92 : vector<8xf32> to vector<8x1xf32>
    %94 = tpu.reciprocal %93 {approx = true} : vector<8x1xf32> -> vector<8x1xf32>
    %95 = vector.broadcast %94 : vector<8x1xf32> to vector<8x8xf32>
    %96 = arith.mulf %91, %95 : vector<8x8xf32>
    %97 = arith.truncf %96 : vector<8x8xf32> to vector<8x8xbf16>
    %98 = arith.truncf %80 : vector<8x8xf32> to vector<8x8xbf16>
    %cst_27 = arith.constant dense<0.000000e+00> : vector<8x8xf32>
    %99 = tpu.matmul %97, %98, %cst_27 {dimension_numbers = #tpu.dot_dimension_numbers<[1], [0], [0], [1], [0, 0, 1, 1], [], []>} : vector<8x8xbf16>, vector<8x8xbf16>, vector<8x8xf32> -> vector<8x8xf32>
    %100 = tpu.concatenate %33, %55, %77, %99 in 1 : vector<8x8xf32>, vector<8x8xf32>, vector<8x8xf32>, vector<8x8xf32> -> vector<8x32xf32>
    %101 = arith.truncf %100 : vector<8x32xf32> to vector<8x32xbf16>
    %c0_28 = arith.constant 0 : index
    %c0_29 = arith.constant 0 : index
    %102 = vector.load %arg5[%c0_28, %c0_29] : memref<32x32xbf16, #tpu.memory_space<vmem>>, vector<32x32xbf16>
    %cst_30 = arith.constant dense<0.000000e+00> : vector<8x32xf32>
    %103 = tpu.matmul %101, %102, %cst_30 {dimension_numbers = #tpu.dot_dimension_numbers<[1], [0], [0], [1], [0, 0, 1, 1], [], []>} : vector<8x32xbf16>, vector<32x32xbf16>, vector<8x32xf32> -> vector<8x32xf32>
    %c0_31 = arith.constant 0 : index
    %c0_32 = arith.constant 0 : index
    %104 = vector.load %arg6[%c0_31, %c0_32] : memref<1x32xf32, #tpu.memory_space<vmem>>, vector<1x32xf32>
    %105 = vector.broadcast %104 : vector<1x32xf32> to vector<8x32xf32>
    %106 = arith.addf %103, %105 : vector<8x32xf32>
    %107 = arith.addf %0, %106 : vector<8x32xf32>
    %c0_33 = arith.constant 0 : index
    %c0_34 = arith.constant 0 : index
    %108 = vector.load %arg7[%c0_33, %c0_34] : memref<1x32xf32, #tpu.memory_space<vmem>>, vector<1x32xf32>
    %c0_35 = arith.constant 0 : index
    %c0_36 = arith.constant 0 : index
    %109 = vector.load %arg8[%c0_35, %c0_36] : memref<1x32xf32, #tpu.memory_space<vmem>>, vector<1x32xf32>
    %cst_37 = arith.constant dense<0.000000e+00> : vector<8xf32>
    %110 = vector.multi_reduction <add>, %107, %cst_37 [1] : vector<8x32xf32> to vector<8xf32>
    %111 = vector.shape_cast %110 : vector<8xf32> to vector<8x1xf32>
    %cst_38 = arith.constant 3.200000e+01 : f32
    %112 = vector.broadcast %cst_38 : f32 to vector<8x1xf32>
    %113 = arith.divf %111, %112 : vector<8x1xf32>
    %114 = vector.broadcast %113 : vector<8x1xf32> to vector<8x32xf32>
    %115 = arith.subf %107, %114 : vector<8x32xf32>
    %116 = arith.mulf %115, %115 : vector<8x32xf32>
    %cst_39 = arith.constant dense<0.000000e+00> : vector<8xf32>
    %117 = vector.multi_reduction <add>, %116, %cst_39 [1] : vector<8x32xf32> to vector<8xf32>
    %118 = vector.shape_cast %117 : vector<8xf32> to vector<8x1xf32>
    %cst_40 = arith.constant 3.200000e+01 : f32
    %119 = vector.broadcast %cst_40 : f32 to vector<8x1xf32>
    %120 = arith.divf %118, %119 : vector<8x1xf32>
    %121 = vector.broadcast %113 : vector<8x1xf32> to vector<8x32xf32>
    %122 = arith.subf %107, %121 : vector<8x32xf32>
    %cst_41 = arith.constant 9.99999974E-6 : f32
    %123 = vector.broadcast %cst_41 : f32 to vector<8x1xf32>
    %124 = arith.addf %120, %123 : vector<8x1xf32>
    %125 = math.rsqrt %124 : vector<8x1xf32>
    %126 = vector.broadcast %125 : vector<8x1xf32> to vector<8x32xf32>
    %127 = arith.mulf %122, %126 : vector<8x32xf32>
    %128 = vector.broadcast %108 : vector<1x32xf32> to vector<8x32xf32>
    %129 = arith.mulf %127, %128 : vector<8x32xf32>
    %130 = vector.broadcast %109 : vector<1x32xf32> to vector<8x32xf32>
    %131 = arith.addf %129, %130 : vector<8x32xf32>
    %132 = arith.truncf %131 : vector<8x32xf32> to vector<8x32xbf16>
    %c0_42 = arith.constant 0 : index
    %c0_43 = arith.constant 0 : index
    %133 = vector.load %arg9[%c0_42, %c0_43] : memref<32x32xbf16, #tpu.memory_space<vmem>>, vector<32x32xbf16>
    %cst_44 = arith.constant dense<0.000000e+00> : vector<8x32xf32>
    %134 = tpu.matmul %132, %133, %cst_44 {dimension_numbers = #tpu.dot_dimension_numbers<[1], [0], [0], [1], [0, 0, 1, 1], [], []>} : vector<8x32xbf16>, vector<32x32xbf16>, vector<8x32xf32> -> vector<8x32xf32>
    %c0_45 = arith.constant 0 : index
    %c0_46 = arith.constant 0 : index
    %135 = vector.load %arg10[%c0_45, %c0_46] : memref<1x32xf32, #tpu.memory_space<vmem>>, vector<1x32xf32>
    %136 = vector.broadcast %135 : vector<1x32xf32> to vector<8x32xf32>
    %137 = arith.addf %134, %136 : vector<8x32xf32>
    %138 = arith.truncf %2 : vector<8x32xf32> to vector<8x32xbf16>
    %c0_47 = arith.constant 0 : index
    %c0_48 = arith.constant 0 : index
    %139 = vector.load %arg11[%c0_47, %c0_48] : memref<32x64xbf16, #tpu.memory_space<vmem>>, vector<32x64xbf16>
    %cst_49 = arith.constant dense<0.000000e+00> : vector<8x64xf32>
    %140 = tpu.matmul %138, %139, %cst_49 {dimension_numbers = #tpu.dot_dimension_numbers<[1], [0], [0], [1], [0, 0, 1, 1], [], []>} : vector<8x32xbf16>, vector<32x64xbf16>, vector<8x64xf32> -> vector<8x64xf32>
    %c0_50 = arith.constant 0 : index
    %c0_51 = arith.constant 0 : index
    %141 = vector.load %arg12[%c0_50, %c0_51] : memref<1x64xf32, #tpu.memory_space<vmem>>, vector<1x64xf32>
    %142 = vector.broadcast %141 : vector<1x64xf32> to vector<8x64xf32>
    %143 = arith.addf %140, %142 : vector<8x64xf32>
    %144 = vector.extract_strided_slice %143 {offsets = [0, 0], sizes = [8, 32], strides = [1, 1]} : vector<8x64xf32> to vector<8x32xf32>
    %145 = vector.extract_strided_slice %143 {offsets = [0, 32], sizes = [8, 32], strides = [1, 1]} : vector<8x64xf32> to vector<8x32xf32>
    %146 = vector.extract_strided_slice %137 {offsets = [0, 0], sizes = [8, 8], strides = [1, 1]} : vector<8x32xf32> to vector<8x8xf32>
    %147 = vector.extract_strided_slice %144 {offsets = [0, 0], sizes = [8, 8], strides = [1, 1]} : vector<8x32xf32> to vector<8x8xf32>
    %148 = vector.extract_strided_slice %145 {offsets = [0, 0], sizes = [8, 8], strides = [1, 1]} : vector<8x32xf32> to vector<8x8xf32>
    %149 = arith.truncf %146 : vector<8x8xf32> to vector<8x8xbf16>
    %150 = tpu.transpose %147, [1, 0] : vector<8x8xf32> -> vector<8x8xf32>
    %151 = arith.truncf %150 : vector<8x8xf32> to vector<8x8xbf16>
    %cst_52 = arith.constant dense<0.000000e+00> : vector<8x8xf32>
    %152 = tpu.matmul %149, %151, %cst_52 {dimension_numbers = #tpu.dot_dimension_numbers<[1], [0], [0], [1], [0, 0, 1, 1], [], []>} : vector<8x8xbf16>, vector<8x8xbf16>, vector<8x8xf32> -> vector<8x8xf32>
    %cst_53 = arith.constant 0.353553385 : f32
    %153 = vector.broadcast %cst_53 : f32 to vector<8x8xf32>
    %154 = arith.mulf %152, %153 : vector<8x8xf32>
    %cst_54 = arith.constant dense<0xFF800000> : vector<8xf32>
    %155 = vector.multi_reduction <maximumf>, %154, %cst_54 [1] : vector<8x8xf32> to vector<8xf32>
    %156 = vector.shape_cast %155 : vector<8xf32> to vector<8x1xf32>
    %157 = vector.broadcast %156 : vector<8x1xf32> to vector<8x8xf32>
    %158 = arith.subf %154, %157 : vector<8x8xf32>
    %159 = math.exp %158 : vector<8x8xf32>
    %cst_55 = arith.constant dense<0.000000e+00> : vector<8xf32>
    %160 = vector.multi_reduction <add>, %159, %cst_55 [1] : vector<8x8xf32> to vector<8xf32>
    %161 = vector.shape_cast %160 : vector<8xf32> to vector<8x1xf32>
    %162 = tpu.reciprocal %161 {approx = true} : vector<8x1xf32> -> vector<8x1xf32>
    %163 = vector.broadcast %162 : vector<8x1xf32> to vector<8x8xf32>
    %164 = arith.mulf %159, %163 : vector<8x8xf32>
    %165 = arith.truncf %164 : vector<8x8xf32> to vector<8x8xbf16>
    %166 = arith.truncf %148 : vector<8x8xf32> to vector<8x8xbf16>
    %cst_56 = arith.constant dense<0.000000e+00> : vector<8x8xf32>
    %167 = tpu.matmul %165, %166, %cst_56 {dimension_numbers = #tpu.dot_dimension_numbers<[1], [0], [0], [1], [0, 0, 1, 1], [], []>} : vector<8x8xbf16>, vector<8x8xbf16>, vector<8x8xf32> -> vector<8x8xf32>
    %168 = vector.extract_strided_slice %137 {offsets = [0, 8], sizes = [8, 8], strides = [1, 1]} : vector<8x32xf32> to vector<8x8xf32>
    %169 = vector.extract_strided_slice %144 {offsets = [0, 8], sizes = [8, 8], strides = [1, 1]} : vector<8x32xf32> to vector<8x8xf32>
    %170 = vector.extract_strided_slice %145 {offsets = [0, 8], sizes = [8, 8], strides = [1, 1]} : vector<8x32xf32> to vector<8x8xf32>
    %171 = arith.truncf %168 : vector<8x8xf32> to vector<8x8xbf16>
    %172 = tpu.transpose %169, [1, 0] : vector<8x8xf32> -> vector<8x8xf32>
    %173 = arith.truncf %172 : vector<8x8xf32> to vector<8x8xbf16>
    %cst_57 = arith.constant dense<0.000000e+00> : vector<8x8xf32>
    %174 = tpu.matmul %171, %173, %cst_57 {dimension_numbers = #tpu.dot_dimension_numbers<[1], [0], [0], [1], [0, 0, 1, 1], [], []>} : vector<8x8xbf16>, vector<8x8xbf16>, vector<8x8xf32> -> vector<8x8xf32>
    %cst_58 = arith.constant 0.353553385 : f32
    %175 = vector.broadcast %cst_58 : f32 to vector<8x8xf32>
    %176 = arith.mulf %174, %175 : vector<8x8xf32>
    %cst_59 = arith.constant dense<0xFF800000> : vector<8xf32>
    %177 = vector.multi_reduction <maximumf>, %176, %cst_59 [1] : vector<8x8xf32> to vector<8xf32>
    %178 = vector.shape_cast %177 : vector<8xf32> to vector<8x1xf32>
    %179 = vector.broadcast %178 : vector<8x1xf32> to vector<8x8xf32>
    %180 = arith.subf %176, %179 : vector<8x8xf32>
    %181 = math.exp %180 : vector<8x8xf32>
    %cst_60 = arith.constant dense<0.000000e+00> : vector<8xf32>
    %182 = vector.multi_reduction <add>, %181, %cst_60 [1] : vector<8x8xf32> to vector<8xf32>
    %183 = vector.shape_cast %182 : vector<8xf32> to vector<8x1xf32>
    %184 = tpu.reciprocal %183 {approx = true} : vector<8x1xf32> -> vector<8x1xf32>
    %185 = vector.broadcast %184 : vector<8x1xf32> to vector<8x8xf32>
    %186 = arith.mulf %181, %185 : vector<8x8xf32>
    %187 = arith.truncf %186 : vector<8x8xf32> to vector<8x8xbf16>
    %188 = arith.truncf %170 : vector<8x8xf32> to vector<8x8xbf16>
    %cst_61 = arith.constant dense<0.000000e+00> : vector<8x8xf32>
    %189 = tpu.matmul %187, %188, %cst_61 {dimension_numbers = #tpu.dot_dimension_numbers<[1], [0], [0], [1], [0, 0, 1, 1], [], []>} : vector<8x8xbf16>, vector<8x8xbf16>, vector<8x8xf32> -> vector<8x8xf32>
    %190 = vector.extract_strided_slice %137 {offsets = [0, 16], sizes = [8, 8], strides = [1, 1]} : vector<8x32xf32> to vector<8x8xf32>
    %191 = vector.extract_strided_slice %144 {offsets = [0, 16], sizes = [8, 8], strides = [1, 1]} : vector<8x32xf32> to vector<8x8xf32>
    %192 = vector.extract_strided_slice %145 {offsets = [0, 16], sizes = [8, 8], strides = [1, 1]} : vector<8x32xf32> to vector<8x8xf32>
    %193 = arith.truncf %190 : vector<8x8xf32> to vector<8x8xbf16>
    %194 = tpu.transpose %191, [1, 0] : vector<8x8xf32> -> vector<8x8xf32>
    %195 = arith.truncf %194 : vector<8x8xf32> to vector<8x8xbf16>
    %cst_62 = arith.constant dense<0.000000e+00> : vector<8x8xf32>
    %196 = tpu.matmul %193, %195, %cst_62 {dimension_numbers = #tpu.dot_dimension_numbers<[1], [0], [0], [1], [0, 0, 1, 1], [], []>} : vector<8x8xbf16>, vector<8x8xbf16>, vector<8x8xf32> -> vector<8x8xf32>
    %cst_63 = arith.constant 0.353553385 : f32
    %197 = vector.broadcast %cst_63 : f32 to vector<8x8xf32>
    %198 = arith.mulf %196, %197 : vector<8x8xf32>
    %cst_64 = arith.constant dense<0xFF800000> : vector<8xf32>
    %199 = vector.multi_reduction <maximumf>, %198, %cst_64 [1] : vector<8x8xf32> to vector<8xf32>
    %200 = vector.shape_cast %199 : vector<8xf32> to vector<8x1xf32>
    %201 = vector.broadcast %200 : vector<8x1xf32> to vector<8x8xf32>
    %202 = arith.subf %198, %201 : vector<8x8xf32>
    %203 = math.exp %202 : vector<8x8xf32>
    %cst_65 = arith.constant dense<0.000000e+00> : vector<8xf32>
    %204 = vector.multi_reduction <add>, %203, %cst_65 [1] : vector<8x8xf32> to vector<8xf32>
    %205 = vector.shape_cast %204 : vector<8xf32> to vector<8x1xf32>
    %206 = tpu.reciprocal %205 {approx = true} : vector<8x1xf32> -> vector<8x1xf32>
    %207 = vector.broadcast %206 : vector<8x1xf32> to vector<8x8xf32>
    %208 = arith.mulf %203, %207 : vector<8x8xf32>
    %209 = arith.truncf %208 : vector<8x8xf32> to vector<8x8xbf16>
    %210 = arith.truncf %192 : vector<8x8xf32> to vector<8x8xbf16>
    %cst_66 = arith.constant dense<0.000000e+00> : vector<8x8xf32>
    %211 = tpu.matmul %209, %210, %cst_66 {dimension_numbers = #tpu.dot_dimension_numbers<[1], [0], [0], [1], [0, 0, 1, 1], [], []>} : vector<8x8xbf16>, vector<8x8xbf16>, vector<8x8xf32> -> vector<8x8xf32>
    %212 = vector.extract_strided_slice %137 {offsets = [0, 24], sizes = [8, 8], strides = [1, 1]} : vector<8x32xf32> to vector<8x8xf32>
    %213 = vector.extract_strided_slice %144 {offsets = [0, 24], sizes = [8, 8], strides = [1, 1]} : vector<8x32xf32> to vector<8x8xf32>
    %214 = vector.extract_strided_slice %145 {offsets = [0, 24], sizes = [8, 8], strides = [1, 1]} : vector<8x32xf32> to vector<8x8xf32>
    %215 = arith.truncf %212 : vector<8x8xf32> to vector<8x8xbf16>
    %216 = tpu.transpose %213, [1, 0] : vector<8x8xf32> -> vector<8x8xf32>
    %217 = arith.truncf %216 : vector<8x8xf32> to vector<8x8xbf16>
    %cst_67 = arith.constant dense<0.000000e+00> : vector<8x8xf32>
    %218 = tpu.matmul %215, %217, %cst_67 {dimension_numbers = #tpu.dot_dimension_numbers<[1], [0], [0], [1], [0, 0, 1, 1], [], []>} : vector<8x8xbf16>, vector<8x8xbf16>, vector<8x8xf32> -> vector<8x8xf32>
    %cst_68 = arith.constant 0.353553385 : f32
    %219 = vector.broadcast %cst_68 : f32 to vector<8x8xf32>
    %220 = arith.mulf %218, %219 : vector<8x8xf32>
    %cst_69 = arith.constant dense<0xFF800000> : vector<8xf32>
    %221 = vector.multi_reduction <maximumf>, %220, %cst_69 [1] : vector<8x8xf32> to vector<8xf32>
    %222 = vector.shape_cast %221 : vector<8xf32> to vector<8x1xf32>
    %223 = vector.broadcast %222 : vector<8x1xf32> to vector<8x8xf32>
    %224 = arith.subf %220, %223 : vector<8x8xf32>
    %225 = math.exp %224 : vector<8x8xf32>
    %cst_70 = arith.constant dense<0.000000e+00> : vector<8xf32>
    %226 = vector.multi_reduction <add>, %225, %cst_70 [1] : vector<8x8xf32> to vector<8xf32>
    %227 = vector.shape_cast %226 : vector<8xf32> to vector<8x1xf32>
    %228 = tpu.reciprocal %227 {approx = true} : vector<8x1xf32> -> vector<8x1xf32>
    %229 = vector.broadcast %228 : vector<8x1xf32> to vector<8x8xf32>
    %230 = arith.mulf %225, %229 : vector<8x8xf32>
    %231 = arith.truncf %230 : vector<8x8xf32> to vector<8x8xbf16>
    %232 = arith.truncf %214 : vector<8x8xf32> to vector<8x8xbf16>
    %cst_71 = arith.constant dense<0.000000e+00> : vector<8x8xf32>
    %233 = tpu.matmul %231, %232, %cst_71 {dimension_numbers = #tpu.dot_dimension_numbers<[1], [0], [0], [1], [0, 0, 1, 1], [], []>} : vector<8x8xbf16>, vector<8x8xbf16>, vector<8x8xf32> -> vector<8x8xf32>
    %234 = tpu.concatenate %167, %189, %211, %233 in 1 : vector<8x8xf32>, vector<8x8xf32>, vector<8x8xf32>, vector<8x8xf32> -> vector<8x32xf32>
    %235 = arith.truncf %234 : vector<8x32xf32> to vector<8x32xbf16>
    %c0_72 = arith.constant 0 : index
    %c0_73 = arith.constant 0 : index
    %236 = vector.load %arg13[%c0_72, %c0_73] : memref<32x32xbf16, #tpu.memory_space<vmem>>, vector<32x32xbf16>
    %cst_74 = arith.constant dense<0.000000e+00> : vector<8x32xf32>
    %237 = tpu.matmul %235, %236, %cst_74 {dimension_numbers = #tpu.dot_dimension_numbers<[1], [0], [0], [1], [0, 0, 1, 1], [], []>} : vector<8x32xbf16>, vector<32x32xbf16>, vector<8x32xf32> -> vector<8x32xf32>
    %c0_75 = arith.constant 0 : index
    %c0_76 = arith.constant 0 : index
    %238 = vector.load %arg14[%c0_75, %c0_76] : memref<1x32xf32, #tpu.memory_space<vmem>>, vector<1x32xf32>
    %239 = vector.broadcast %238 : vector<1x32xf32> to vector<8x32xf32>
    %240 = arith.addf %237, %239 : vector<8x32xf32>
    %241 = arith.addf %131, %240 : vector<8x32xf32>
    %c0_77 = arith.constant 0 : index
    %c0_78 = arith.constant 0 : index
    %242 = vector.load %arg15[%c0_77, %c0_78] : memref<1x32xf32, #tpu.memory_space<vmem>>, vector<1x32xf32>
    %c0_79 = arith.constant 0 : index
    %c0_80 = arith.constant 0 : index
    %243 = vector.load %arg16[%c0_79, %c0_80] : memref<1x32xf32, #tpu.memory_space<vmem>>, vector<1x32xf32>
    %cst_81 = arith.constant dense<0.000000e+00> : vector<8xf32>
    %244 = vector.multi_reduction <add>, %241, %cst_81 [1] : vector<8x32xf32> to vector<8xf32>
    %245 = vector.shape_cast %244 : vector<8xf32> to vector<8x1xf32>
    %cst_82 = arith.constant 3.200000e+01 : f32
    %246 = vector.broadcast %cst_82 : f32 to vector<8x1xf32>
    %247 = arith.divf %245, %246 : vector<8x1xf32>
    %248 = vector.broadcast %247 : vector<8x1xf32> to vector<8x32xf32>
    %249 = arith.subf %241, %248 : vector<8x32xf32>
    %250 = arith.mulf %249, %249 : vector<8x32xf32>
    %cst_83 = arith.constant dense<0.000000e+00> : vector<8xf32>
    %251 = vector.multi_reduction <add>, %250, %cst_83 [1] : vector<8x32xf32> to vector<8xf32>
    %252 = vector.shape_cast %251 : vector<8xf32> to vector<8x1xf32>
    %cst_84 = arith.constant 3.200000e+01 : f32
    %253 = vector.broadcast %cst_84 : f32 to vector<8x1xf32>
    %254 = arith.divf %252, %253 : vector<8x1xf32>
    %255 = vector.broadcast %247 : vector<8x1xf32> to vector<8x32xf32>
    %256 = arith.subf %241, %255 : vector<8x32xf32>
    %cst_85 = arith.constant 9.99999974E-6 : f32
    %257 = vector.broadcast %cst_85 : f32 to vector<8x1xf32>
    %258 = arith.addf %254, %257 : vector<8x1xf32>
    %259 = math.rsqrt %258 : vector<8x1xf32>
    %260 = vector.broadcast %259 : vector<8x1xf32> to vector<8x32xf32>
    %261 = arith.mulf %256, %260 : vector<8x32xf32>
    %262 = vector.broadcast %242 : vector<1x32xf32> to vector<8x32xf32>
    %263 = arith.mulf %261, %262 : vector<8x32xf32>
    %264 = vector.broadcast %243 : vector<1x32xf32> to vector<8x32xf32>
    %265 = arith.addf %263, %264 : vector<8x32xf32>
    %266 = arith.truncf %265 : vector<8x32xf32> to vector<8x32xbf16>
    %c0_86 = arith.constant 0 : index
    %c0_87 = arith.constant 0 : index
    %267 = vector.load %arg17[%c0_86, %c0_87] : memref<32x64xbf16, #tpu.memory_space<vmem>>, vector<32x64xbf16>
    %cst_88 = arith.constant dense<0.000000e+00> : vector<8x64xf32>
    %268 = tpu.matmul %266, %267, %cst_88 {dimension_numbers = #tpu.dot_dimension_numbers<[1], [0], [0], [1], [0, 0, 1, 1], [], []>} : vector<8x32xbf16>, vector<32x64xbf16>, vector<8x64xf32> -> vector<8x64xf32>
    %c0_89 = arith.constant 0 : index
    %c0_90 = arith.constant 0 : index
    %269 = vector.load %arg18[%c0_89, %c0_90] : memref<1x64xf32, #tpu.memory_space<vmem>>, vector<1x64xf32>
    %270 = vector.broadcast %269 : vector<1x64xf32> to vector<8x64xf32>
    %271 = arith.addf %268, %270 : vector<8x64xf32>
    %272 = arith.mulf %271, %271 : vector<8x64xf32>
    %273 = arith.mulf %271, %272 : vector<8x64xf32>
    %cst_91 = arith.constant 4.471500e-02 : f32
    %274 = vector.broadcast %cst_91 : f32 to vector<8x64xf32>
    %275 = arith.mulf %274, %273 : vector<8x64xf32>
    %276 = arith.addf %271, %275 : vector<8x64xf32>
    %cst_92 = arith.constant 0.797884583 : f32
    %277 = vector.broadcast %cst_92 : f32 to vector<8x64xf32>
    %278 = arith.mulf %277, %276 : vector<8x64xf32>
    %279 = math.tanh %278 : vector<8x64xf32>
    %cst_93 = arith.constant 1.000000e+00 : f32
    %280 = vector.broadcast %cst_93 : f32 to vector<8x64xf32>
    %281 = arith.addf %280, %279 : vector<8x64xf32>
    %cst_94 = arith.constant 5.000000e-01 : f32
    %282 = vector.broadcast %cst_94 : f32 to vector<8x64xf32>
    %283 = arith.mulf %282, %281 : vector<8x64xf32>
    %284 = arith.mulf %271, %283 : vector<8x64xf32>
    %285 = arith.truncf %284 : vector<8x64xf32> to vector<8x64xbf16>
    %c0_95 = arith.constant 0 : index
    %c0_96 = arith.constant 0 : index
    %286 = vector.load %arg19[%c0_95, %c0_96] : memref<64x32xbf16, #tpu.memory_space<vmem>>, vector<64x32xbf16>
    %cst_97 = arith.constant dense<0.000000e+00> : vector<8x32xf32>
    %287 = tpu.matmul %285, %286, %cst_97 {dimension_numbers = #tpu.dot_dimension_numbers<[1], [0], [0], [1], [0, 0, 1, 1], [], []>} : vector<8x64xbf16>, vector<64x32xbf16>, vector<8x32xf32> -> vector<8x32xf32>
    %c0_98 = arith.constant 0 : index
    %c0_99 = arith.constant 0 : index
    %288 = vector.load %arg20[%c0_98, %c0_99] : memref<1x32xf32, #tpu.memory_space<vmem>>, vector<1x32xf32>
    %289 = vector.broadcast %288 : vector<1x32xf32> to vector<8x32xf32>
    %290 = arith.addf %287, %289 : vector<8x32xf32>
    %291 = arith.addf %265, %290 : vector<8x32xf32>
    %c0_100 = arith.constant 0 : index
    %c0_101 = arith.constant 0 : index
    %292 = vector.load %arg21[%c0_100, %c0_101] : memref<1x32xf32, #tpu.memory_space<vmem>>, vector<1x32xf32>
    %c0_102 = arith.constant 0 : index
    %c0_103 = arith.constant 0 : index
    %293 = vector.load %arg22[%c0_102, %c0_103] : memref<1x32xf32, #tpu.memory_space<vmem>>, vector<1x32xf32>
    %cst_104 = arith.constant dense<0.000000e+00> : vector<8xf32>
    %294 = vector.multi_reduction <add>, %291, %cst_104 [1] : vector<8x32xf32> to vector<8xf32>
    %295 = vector.shape_cast %294 : vector<8xf32> to vector<8x1xf32>
    %cst_105 = arith.constant 3.200000e+01 : f32
    %296 = vector.broadcast %cst_105 : f32 to vector<8x1xf32>
    %297 = arith.divf %295, %296 : vector<8x1xf32>
    %298 = vector.broadcast %297 : vector<8x1xf32> to vector<8x32xf32>
    %299 = arith.subf %291, %298 : vector<8x32xf32>
    %300 = arith.mulf %299, %299 : vector<8x32xf32>
    %cst_106 = arith.constant dense<0.000000e+00> : vector<8xf32>
    %301 = vector.multi_reduction <add>, %300, %cst_106 [1] : vector<8x32xf32> to vector<8xf32>
    %302 = vector.shape_cast %301 : vector<8xf32> to vector<8x1xf32>
    %cst_107 = arith.constant 3.200000e+01 : f32
    %303 = vector.broadcast %cst_107 : f32 to vector<8x1xf32>
    %304 = arith.divf %302, %303 : vector<8x1xf32>
    %305 = vector.broadcast %297 : vector<8x1xf32> to vector<8x32xf32>
    %306 = arith.subf %291, %305 : vector<8x32xf32>
    %cst_108 = arith.constant 9.99999974E-6 : f32
    %307 = vector.broadcast %cst_108 : f32 to vector<8x1xf32>
    %308 = arith.addf %304, %307 : vector<8x1xf32>
    %309 = math.rsqrt %308 : vector<8x1xf32>
    %310 = vector.broadcast %309 : vector<8x1xf32> to vector<8x32xf32>
    %311 = arith.mulf %306, %310 : vector<8x32xf32>
    %312 = vector.broadcast %292 : vector<1x32xf32> to vector<8x32xf32>
    %313 = arith.mulf %311, %312 : vector<8x32xf32>
    %314 = vector.broadcast %293 : vector<1x32xf32> to vector<8x32xf32>
    %315 = arith.addf %313, %314 : vector<8x32xf32>
    %c0_109 = arith.constant 0 : index
    %c0_110 = arith.constant 0 : index
    %c0_111 = arith.constant 0 : index
    %316 = vector.load %arg25[%c0_109, %c0_110, %c0_111] : memref<1x8x32xf32, #tpu.memory_space<vmem>>, vector<1x8x32xf32>
    %317 = vector.shape_cast %316 : vector<1x8x32xf32> to vector<8x32xf32>
    %318 = vector.shape_cast %315 : vector<8x32xf32> to vector<1x8x32xf32>
    tpu.vector_store %arg25[%c0_109, %c0_110, %c0_111], %318 {strides = array<i32>} : memref<1x8x32xf32, #tpu.memory_space<vmem>>, vector<1x8x32xf32>,
    %319 = arith.truncf %315 : vector<8x32xf32> to vector<8x32xbf16>
    %c0_112 = arith.constant 0 : index
    %c0_113 = arith.constant 0 : index
    %320 = vector.load %arg23[%c0_112, %c0_113] : memref<32x32xbf16, #tpu.memory_space<vmem>>, vector<32x32xbf16>
    %cst_114 = arith.constant dense<0.000000e+00> : vector<8x32xf32>
    %321 = tpu.matmul %319, %320, %cst_114 {dimension_numbers = #tpu.dot_dimension_numbers<[1], [0], [0], [1], [0, 0, 1, 1], [], []>} : vector<8x32xbf16>, vector<32x32xbf16>, vector<8x32xf32> -> vector<8x32xf32>
    %c0_115 = arith.constant 0 : index
    %c0_116 = arith.constant 0 : index
    %322 = vector.load %arg24[%c0_115, %c0_116] : memref<1x32xf32, #tpu.memory_space<vmem>>, vector<1x32xf32>
    %323 = vector.broadcast %322 : vector<1x32xf32> to vector<8x32xf32>
    %324 = arith.addf %321, %323 : vector<8x32xf32>
    %c0_117 = arith.constant 0 : index
    %c0_118 = arith.constant 0 : index
    %c0_119 = arith.constant 0 : index
    %325 = vector.load %arg26[%c0_117, %c0_118, %c0_119] : memref<1x8x32xf32, #tpu.memory_space<vmem>>, vector<1x8x32xf32>
    %326 = vector.shape_cast %325 : vector<1x8x32xf32> to vector<8x32xf32>
    %327 = vector.shape_cast %324 : vector<8x32xf32> to vector<1x8x32xf32>
    tpu.vector_store %arg26[%c0_117, %c0_118, %c0_119], %327 {strides = array<i32>} : memref<1x8x32xf32, #tpu.memory_space<vmem>>, vector<1x8x32xf32>,
    return
  }
  func.func @transform_0(%arg0: i32) -> (i32, i32) {
    %c0_i32 = arith.constant 0 : i32
    %c0_i32_0 = arith.constant 0 : i32
    %c0_i32_1 = arith.constant 0 : i32
    return %c0_i32, %c0_i32_0 : i32, i32
  }
  func.func @transform_1(%arg0: i32) -> (i32, i32, i32) {
    %c0_i32 = arith.constant 0 : i32
    %c0_i32_0 = arith.constant 0 : i32
    %c0_i32_1 = arith.constant 0 : i32
    return %arg0, %c0_i32, %c0_i32_0 : i32, i32, i32
  }
  func.func @transform_2(%arg0: i32) -> (i32, i32) {
    %c0_i32 = arith.constant 0 : i32
    %c0_i32_0 = arith.constant 0 : i32
    %c0_i32_1 = arith.constant 0 : i32
    return %c0_i32, %c0_i32_0 : i32, i32
  }
  func.func @transform_3(%arg0: i32) -> (i32, i32) {
    %c0_i32 = arith.constant 0 : i32
    %c0_i32_0 = arith.constant 0 : i32
    %c0_i32_1 = arith.constant 0 : i32
    return %c0_i32, %c0_i32_0 : i32, i32
  }
  func.func @transform_4(%arg0: i32) -> (i32, i32) {
    %c0_i32 = arith.constant 0 : i32
    %c0_i32_0 = arith.constant 0 : i32
    %c0_i32_1 = arith.constant 0 : i32
    return %c0_i32, %c0_i32_0 : i32, i32
  }
  func.func @transform_5(%arg0: i32) -> (i32, i32) {
    %c0_i32 = arith.constant 0 : i32
    %c0_i32_0 = arith.constant 0 : i32
    %c0_i32_1 = arith.constant 0 : i32
    return %c0_i32, %c0_i32_0 : i32, i32
  }
  func.func @transform_6(%arg0: i32) -> (i32, i32) {
    %c0_i32 = arith.constant 0 : i32
    %c0_i32_0 = arith.constant 0 : i32
    %c0_i32_1 = arith.constant 0 : i32
    return %c0_i32, %c0_i32_0 : i32, i32
  }
  func.func @transform_7(%arg0: i32) -> (i32, i32) {
    %c0_i32 = arith.constant 0 : i32
    %c0_i32_0 = arith.constant 0 : i32
    %c0_i32_1 = arith.constant 0 : i32
    return %c0_i32, %c0_i32_0 : i32, i32
  }
  func.func @transform_8(%arg0: i32) -> (i32, i32) {
    %c0_i32 = arith.constant 0 : i32
    %c0_i32_0 = arith.constant 0 : i32
    %c0_i32_1 = arith.constant 0 : i32
    return %c0_i32, %c0_i32_0 : i32, i32
  }
  func.func @transform_9(%arg0: i32) -> (i32, i32) {
    %c0_i32 = arith.constant 0 : i32
    %c0_i32_0 = arith.constant 0 : i32
    %c0_i32_1 = arith.constant 0 : i32
    return %c0_i32, %c0_i32_0 : i32, i32
  }
  func.func @transform_10(%arg0: i32) -> (i32, i32) {
    %c0_i32 = arith.constant 0 : i32
    %c0_i32_0 = arith.constant 0 : i32
    %c0_i32_1 = arith.constant 0 : i32
    return %c0_i32, %c0_i32_0 : i32, i32
  }
  func.func @transform_11(%arg0: i32) -> (i32, i32) {
    %c0_i32 = arith.constant 0 : i32
    %c0_i32_0 = arith.constant 0 : i32
    %c0_i32_1 = arith.constant 0 : i32
    return %c0_i32, %c0_i32_0 : i32, i32
  }
  func.func @transform_12(%arg0: i32) -> (i32, i32) {
    %c0_i32 = arith.constant 0 : i32
    %c0_i32_0 = arith.constant 0 : i32
    %c0_i32_1 = arith.constant 0 : i32
    return %c0_i32, %c0_i32_0 : i32, i32
  }
  func.func @transform_13(%arg0: i32) -> (i32, i32) {
    %c0_i32 = arith.constant 0 : i32
    %c0_i32_0 = arith.constant 0 : i32
    %c0_i32_1 = arith.constant 0 : i32
    return %c0_i32, %c0_i32_0 : i32, i32
  }
  func.func @transform_14(%arg0: i32) -> (i32, i32) {
    %c0_i32 = arith.constant 0 : i32
    %c0_i32_0 = arith.constant 0 : i32
    %c0_i32_1 = arith.constant 0 : i32
    return %c0_i32, %c0_i32_0 : i32, i32
  }
  func.func @transform_15(%arg0: i32) -> (i32, i32) {
    %c0_i32 = arith.constant 0 : i32
    %c0_i32_0 = arith.constant 0 : i32
    %c0_i32_1 = arith.constant 0 : i32
    return %c0_i32, %c0_i32_0 : i32, i32
  }
  func.func @transform_16(%arg0: i32) -> (i32, i32) {
    %c0_i32 = arith.constant 0 : i32
    %c0_i32_0 = arith.constant 0 : i32
    %c0_i32_1 = arith.constant 0 : i32
    return %c0_i32, %c0_i32_0 : i32, i32
  }
  func.func @transform_17(%arg0: i32) -> (i32, i32) {
    %c0_i32 = arith.constant 0 : i32
    %c0_i32_0 = arith.constant 0 : i32
    %c0_i32_1 = arith.constant 0 : i32
    return %c0_i32, %c0_i32_0 : i32, i32
  }
  func.func @transform_18(%arg0: i32) -> (i32, i32) {
    %c0_i32 = arith.constant 0 : i32
    %c0_i32_0 = arith.constant 0 : i32
    %c0_i32_1 = arith.constant 0 : i32
    return %c0_i32, %c0_i32_0 : i32, i32
  }
  func.func @transform_19(%arg0: i32) -> (i32, i32) {
    %c0_i32 = arith.constant 0 : i32
    %c0_i32_0 = arith.constant 0 : i32
    %c0_i32_1 = arith.constant 0 : i32
    return %c0_i32, %c0_i32_0 : i32, i32
  }
  func.func @transform_20(%arg0: i32) -> (i32, i32) {
    %c0_i32 = arith.constant 0 : i32
    %c0_i32_0 = arith.constant 0 : i32
    %c0_i32_1 = arith.constant 0 : i32
    return %c0_i32, %c0_i32_0 : i32, i32
  }
  func.func @transform_21(%arg0: i32) -> (i32, i32) {
    %c0_i32 = arith.constant 0 : i32
    %c0_i32_0 = arith.constant 0 : i32
    %c0_i32_1 = arith.constant 0 : i32
    return %c0_i32, %c0_i32_0 : i32, i32
  }
  func.func @transform_22(%arg0: i32) -> (i32, i32) {
    %c0_i32 = arith.constant 0 : i32
    %c0_i32_0 = arith.constant 0 : i32
    %c0_i32_1 = arith.constant 0 : i32
    return %c0_i32, %c0_i32_0 : i32, i32
  }
  func.func @transform_23(%arg0: i32) -> (i32, i32) {
    %c0_i32 = arith.constant 0 : i32
    %c0_i32_0 = arith.constant 0 : i32
    %c0_i32_1 = arith.constant 0 : i32
    return %c0_i32, %c0_i32_0 : i32, i32
  }
  func.func @transform_24(%arg0: i32) -> (i32, i32, i32) {
    %c0_i32 = arith.constant 0 : i32
    %c0_i32_0 = arith.constant 0 : i32
    %c0_i32_1 = arith.constant 0 : i32
    return %arg0, %c0_i32, %c0_i32_0 : i32, i32, i32
  }
  func.func @transform_25(%arg0: i32) -> (i32, i32, i32) {
    %c0_i32 = arith.constant 0 : i32
    %c0_i32_0 = arith.constant 0 : i32
    %c0_i32_1 = arith.constant 0 : i32
    return %arg0, %c0_i32, %c0_i32_0 : i32, i32, i32
  }
}

module attributes {stable_mosaic.version = 11 : i64} {
  func.func @_ce_kernel(%arg0: i32, %arg1: memref<2x8xi32, #tpu.memory_space<smem>>, %arg2: memref<2x16x64xf32, #tpu.memory_space<vmem>>, %arg3: memref<1x1xf32, #tpu.memory_space<vmem>>) attributes {dimension_semantics = [#tpu.dimension_semantics<arbitrary>], iteration_bounds = array<i64: 1>, scalar_prefetch = 1 : i64, scratch_operands = 0 : i64, tpu.core_type = #tpu.core_type<tc>, window_params = [{pipeline_mode = #tpu.pipeline_mode<synchronous>, transform_indices = @transform_0, window_bounds = array<i64: 2, 16, 64>}, {pipeline_mode = #tpu.pipeline_mode<synchronous>, transform_indices = @transform_1, window_bounds = array<i64: 1, 1>}]} {
    %0 = tpu.iota {dimensions = array<i32: 1>} : vector<1x64xi32>
    %cst = arith.constant 0.000000e+00 : f32
    %1 = vector.broadcast %cst : f32 to vector<1x1xf32>
    %c0 = arith.constant 0 : index
    %c8 = arith.constant 8 : index
    %c0_0 = arith.constant 0 : index
    %2 = vector.load %arg2[%c0, %c8, %c0_0] : memref<2x16x64xf32, #tpu.memory_space<vmem>>, vector<1x7x64xf32>
    %3 = vector.shape_cast %2 : vector<1x7x64xf32> to vector<7x64xf32>
    %cst_1 = arith.constant dense<0xFF800000> : vector<7xf32>
    %4 = vector.multi_reduction <maximumf>, %3, %cst_1 [1] : vector<7x64xf32> to vector<7xf32>
    %5 = vector.shape_cast %4 : vector<7xf32> to vector<7x1xf32>
    %6 = vector.broadcast %5 : vector<7x1xf32> to vector<7x64xf32>
    %7 = arith.subf %3, %6 : vector<7x64xf32>
    %8 = math.exp %7 : vector<7x64xf32>
    %cst_2 = arith.constant dense<0.000000e+00> : vector<7xf32>
    %9 = vector.multi_reduction <add>, %8, %cst_2 [1] : vector<7x64xf32> to vector<7xf32>
    %10 = vector.shape_cast %9 : vector<7xf32> to vector<7x1xf32>
    %11 = math.log %10 : vector<7x1xf32>
    %12 = arith.addf %11, %5 : vector<7x1xf32>
    %c0_3 = arith.constant 0 : index
    %c1 = arith.constant 1 : index
    %13 = memref.load %arg1[%c0_3, %c1] : memref<2x8xi32, #tpu.memory_space<smem>>
    %14 = vector.broadcast %13 : i32 to vector<1x64xi32>
    %15 = arith.cmpi eq, %0, %14 : vector<1x64xi32>
    %16 = arith.extui %15 : vector<1x64xi1> to vector<1x64xi32>
    %17 = arith.sitofp %16 : vector<1x64xi32> to vector<1x64xf32>
    %c0_4 = arith.constant 0 : index
    %c2 = arith.constant 2 : index
    %18 = memref.load %arg1[%c0_4, %c2] : memref<2x8xi32, #tpu.memory_space<smem>>
    %19 = vector.broadcast %18 : i32 to vector<1x64xi32>
    %20 = arith.cmpi eq, %0, %19 : vector<1x64xi32>
    %21 = arith.extui %20 : vector<1x64xi1> to vector<1x64xi32>
    %22 = arith.sitofp %21 : vector<1x64xi32> to vector<1x64xf32>
    %c0_5 = arith.constant 0 : index
    %c3 = arith.constant 3 : index
    %23 = memref.load %arg1[%c0_5, %c3] : memref<2x8xi32, #tpu.memory_space<smem>>
    %24 = vector.broadcast %23 : i32 to vector<1x64xi32>
    %25 = arith.cmpi eq, %0, %24 : vector<1x64xi32>
    %26 = arith.extui %25 : vector<1x64xi1> to vector<1x64xi32>
    %27 = arith.sitofp %26 : vector<1x64xi32> to vector<1x64xf32>
    %c0_6 = arith.constant 0 : index
    %c4 = arith.constant 4 : index
    %28 = memref.load %arg1[%c0_6, %c4] : memref<2x8xi32, #tpu.memory_space<smem>>
    %29 = vector.broadcast %28 : i32 to vector<1x64xi32>
    %30 = arith.cmpi eq, %0, %29 : vector<1x64xi32>
    %31 = arith.extui %30 : vector<1x64xi1> to vector<1x64xi32>
    %32 = arith.sitofp %31 : vector<1x64xi32> to vector<1x64xf32>
    %c0_7 = arith.constant 0 : index
    %c5 = arith.constant 5 : index
    %33 = memref.load %arg1[%c0_7, %c5] : memref<2x8xi32, #tpu.memory_space<smem>>
    %34 = vector.broadcast %33 : i32 to vector<1x64xi32>
    %35 = arith.cmpi eq, %0, %34 : vector<1x64xi32>
    %36 = arith.extui %35 : vector<1x64xi1> to vector<1x64xi32>
    %37 = arith.sitofp %36 : vector<1x64xi32> to vector<1x64xf32>
    %c0_8 = arith.constant 0 : index
    %c6 = arith.constant 6 : index
    %38 = memref.load %arg1[%c0_8, %c6] : memref<2x8xi32, #tpu.memory_space<smem>>
    %39 = vector.broadcast %38 : i32 to vector<1x64xi32>
    %40 = arith.cmpi eq, %0, %39 : vector<1x64xi32>
    %41 = arith.extui %40 : vector<1x64xi1> to vector<1x64xi32>
    %42 = arith.sitofp %41 : vector<1x64xi32> to vector<1x64xf32>
    %c0_9 = arith.constant 0 : index
    %c7 = arith.constant 7 : index
    %43 = memref.load %arg1[%c0_9, %c7] : memref<2x8xi32, #tpu.memory_space<smem>>
    %44 = vector.broadcast %43 : i32 to vector<1x64xi32>
    %45 = arith.cmpi eq, %0, %44 : vector<1x64xi32>
    %46 = arith.extui %45 : vector<1x64xi1> to vector<1x64xi32>
    %47 = arith.sitofp %46 : vector<1x64xi32> to vector<1x64xf32>
    %48 = tpu.concatenate %17, %22, %27, %32, %37, %42, %47 in 0 : vector<1x64xf32>, vector<1x64xf32>, vector<1x64xf32>, vector<1x64xf32>, vector<1x64xf32>, vector<1x64xf32>, vector<1x64xf32> -> vector<7x64xf32>
    %49 = arith.mulf %48, %3 : vector<7x64xf32>
    %cst_10 = arith.constant dense<0.000000e+00> : vector<7xf32>
    %50 = vector.multi_reduction <add>, %49, %cst_10 [1] : vector<7x64xf32> to vector<7xf32>
    %51 = vector.shape_cast %50 : vector<7xf32> to vector<7x1xf32>
    %52 = arith.subf %12, %51 : vector<7x1xf32>
    %cst_11 = arith.constant dense<0.000000e+00> : vector<1xf32>
    %53 = vector.multi_reduction <add>, %52, %cst_11 [0] : vector<7x1xf32> to vector<1xf32>
    %54 = vector.shape_cast %53 : vector<1xf32> to vector<1x1xf32>
    %55 = arith.addf %1, %54 : vector<1x1xf32>
    %c1_12 = arith.constant 1 : index
    %c8_13 = arith.constant 8 : index
    %c0_14 = arith.constant 0 : index
    %56 = vector.load %arg2[%c1_12, %c8_13, %c0_14] : memref<2x16x64xf32, #tpu.memory_space<vmem>>, vector<1x7x64xf32>
    %57 = vector.shape_cast %56 : vector<1x7x64xf32> to vector<7x64xf32>
    %cst_15 = arith.constant dense<0xFF800000> : vector<7xf32>
    %58 = vector.multi_reduction <maximumf>, %57, %cst_15 [1] : vector<7x64xf32> to vector<7xf32>
    %59 = vector.shape_cast %58 : vector<7xf32> to vector<7x1xf32>
    %60 = vector.broadcast %59 : vector<7x1xf32> to vector<7x64xf32>
    %61 = arith.subf %57, %60 : vector<7x64xf32>
    %62 = math.exp %61 : vector<7x64xf32>
    %cst_16 = arith.constant dense<0.000000e+00> : vector<7xf32>
    %63 = vector.multi_reduction <add>, %62, %cst_16 [1] : vector<7x64xf32> to vector<7xf32>
    %64 = vector.shape_cast %63 : vector<7xf32> to vector<7x1xf32>
    %65 = math.log %64 : vector<7x1xf32>
    %66 = arith.addf %65, %59 : vector<7x1xf32>
    %c1_17 = arith.constant 1 : index
    %c1_18 = arith.constant 1 : index
    %67 = memref.load %arg1[%c1_17, %c1_18] : memref<2x8xi32, #tpu.memory_space<smem>>
    %68 = vector.broadcast %67 : i32 to vector<1x64xi32>
    %69 = arith.cmpi eq, %0, %68 : vector<1x64xi32>
    %70 = arith.extui %69 : vector<1x64xi1> to vector<1x64xi32>
    %71 = arith.sitofp %70 : vector<1x64xi32> to vector<1x64xf32>
    %c1_19 = arith.constant 1 : index
    %c2_20 = arith.constant 2 : index
    %72 = memref.load %arg1[%c1_19, %c2_20] : memref<2x8xi32, #tpu.memory_space<smem>>
    %73 = vector.broadcast %72 : i32 to vector<1x64xi32>
    %74 = arith.cmpi eq, %0, %73 : vector<1x64xi32>
    %75 = arith.extui %74 : vector<1x64xi1> to vector<1x64xi32>
    %76 = arith.sitofp %75 : vector<1x64xi32> to vector<1x64xf32>
    %c1_21 = arith.constant 1 : index
    %c3_22 = arith.constant 3 : index
    %77 = memref.load %arg1[%c1_21, %c3_22] : memref<2x8xi32, #tpu.memory_space<smem>>
    %78 = vector.broadcast %77 : i32 to vector<1x64xi32>
    %79 = arith.cmpi eq, %0, %78 : vector<1x64xi32>
    %80 = arith.extui %79 : vector<1x64xi1> to vector<1x64xi32>
    %81 = arith.sitofp %80 : vector<1x64xi32> to vector<1x64xf32>
    %c1_23 = arith.constant 1 : index
    %c4_24 = arith.constant 4 : index
    %82 = memref.load %arg1[%c1_23, %c4_24] : memref<2x8xi32, #tpu.memory_space<smem>>
    %83 = vector.broadcast %82 : i32 to vector<1x64xi32>
    %84 = arith.cmpi eq, %0, %83 : vector<1x64xi32>
    %85 = arith.extui %84 : vector<1x64xi1> to vector<1x64xi32>
    %86 = arith.sitofp %85 : vector<1x64xi32> to vector<1x64xf32>
    %c1_25 = arith.constant 1 : index
    %c5_26 = arith.constant 5 : index
    %87 = memref.load %arg1[%c1_25, %c5_26] : memref<2x8xi32, #tpu.memory_space<smem>>
    %88 = vector.broadcast %87 : i32 to vector<1x64xi32>
    %89 = arith.cmpi eq, %0, %88 : vector<1x64xi32>
    %90 = arith.extui %89 : vector<1x64xi1> to vector<1x64xi32>
    %91 = arith.sitofp %90 : vector<1x64xi32> to vector<1x64xf32>
    %c1_27 = arith.constant 1 : index
    %c6_28 = arith.constant 6 : index
    %92 = memref.load %arg1[%c1_27, %c6_28] : memref<2x8xi32, #tpu.memory_space<smem>>
    %93 = vector.broadcast %92 : i32 to vector<1x64xi32>
    %94 = arith.cmpi eq, %0, %93 : vector<1x64xi32>
    %95 = arith.extui %94 : vector<1x64xi1> to vector<1x64xi32>
    %96 = arith.sitofp %95 : vector<1x64xi32> to vector<1x64xf32>
    %c1_29 = arith.constant 1 : index
    %c7_30 = arith.constant 7 : index
    %97 = memref.load %arg1[%c1_29, %c7_30] : memref<2x8xi32, #tpu.memory_space<smem>>
    %98 = vector.broadcast %97 : i32 to vector<1x64xi32>
    %99 = arith.cmpi eq, %0, %98 : vector<1x64xi32>
    %100 = arith.extui %99 : vector<1x64xi1> to vector<1x64xi32>
    %101 = arith.sitofp %100 : vector<1x64xi32> to vector<1x64xf32>
    %102 = tpu.concatenate %71, %76, %81, %86, %91, %96, %101 in 0 : vector<1x64xf32>, vector<1x64xf32>, vector<1x64xf32>, vector<1x64xf32>, vector<1x64xf32>, vector<1x64xf32>, vector<1x64xf32> -> vector<7x64xf32>
    %103 = arith.mulf %102, %57 : vector<7x64xf32>
    %cst_31 = arith.constant dense<0.000000e+00> : vector<7xf32>
    %104 = vector.multi_reduction <add>, %103, %cst_31 [1] : vector<7x64xf32> to vector<7xf32>
    %105 = vector.shape_cast %104 : vector<7xf32> to vector<7x1xf32>
    %106 = arith.subf %66, %105 : vector<7x1xf32>
    %cst_32 = arith.constant dense<0.000000e+00> : vector<1xf32>
    %107 = vector.multi_reduction <add>, %106, %cst_32 [0] : vector<7x1xf32> to vector<1xf32>
    %108 = vector.shape_cast %107 : vector<1xf32> to vector<1x1xf32>
    %109 = arith.addf %55, %108 : vector<1x1xf32>
    %c0_33 = arith.constant 0 : index
    %c0_34 = arith.constant 0 : index
    %110 = vector.load %arg3[%c0_33, %c0_34] : memref<1x1xf32, #tpu.memory_space<vmem>>, vector<1x1xf32>
    tpu.vector_store %arg3[%c0_33, %c0_34], %109 {strides = array<i32>} : memref<1x1xf32, #tpu.memory_space<vmem>>, vector<1x1xf32>,
    return
  }
  func.func @transform_0(%arg0: i32, %arg1: memref<2x8xi32, #tpu.memory_space<smem>>) -> (i32, i32, i32) {
    %c0_i32 = arith.constant 0 : i32
    %c0_i32_0 = arith.constant 0 : i32
    %c0_i32_1 = arith.constant 0 : i32
    %c0_i32_2 = arith.constant 0 : i32
    return %c0_i32, %c0_i32_0, %c0_i32_1 : i32, i32, i32
  }
  func.func @transform_1(%arg0: i32, %arg1: memref<2x8xi32, #tpu.memory_space<smem>>) -> (i32, i32) {
    %c0_i32 = arith.constant 0 : i32
    %c0_i32_0 = arith.constant 0 : i32
    %c0_i32_1 = arith.constant 0 : i32
    return %c0_i32, %c0_i32_0 : i32, i32
  }
}

</mosaic_0001>

<llo_original>
// kernel: blip3d_forward.5
$region0: #{blip3d_forward.5}
  #allocation0 [shape = 'u32[]', space=smem, size = 0x4, offset = 0x4, fixed_abs, tag = 'smem constant byte address 0x4 - core index']
  #allocation1 [shape = 'u32[72,128]{1,0:T(1,128)}', space=vmem, size = 0x9000, scoped, tag = 'internal scratch']
  #allocation2 [shape = 's32[1]{0}', space=sflag, size = 0x4, scoped, tag = 'scoped memory for blip3d_forward.5']
  #allocation3 [shape = 'u8[1024]{0}', space=smem, size = 0x400, scoped, tag = 'prefetched SMEM operand 0']
  %s0 = inlined_call_operand.vmem [shape: s32[2,8], index: 0, kind: input, shape index: {}]
  %s1 = inlined_call_operand.vmem [shape: f32[2,16,64], index: 1, kind: input, shape index: {}]
  %s2 = inlined_call_operand.hbm [shape: f32[1,1], index: 2, kind: output, shape index: {}]
  %s3 = sld [smem:[#allocation0]]
  $region14: #{blip3d_forward.5} parent=0
    _
  %s5 = ssub.s32 1, %s3
  %s6 = scalar_select 0, %s5, %s3
  %s8 = sshll.u32 %s0, 4
  %s9 = int_to_ptr.vmem [resolvable:$true] %s8
  %11 = dma.vmem_to_smem %s9, 32, [#allocation3], [#allocation2]
  %13 = dma.done [#allocation2], 32
  %14 = sfence
  $region1: #{blip3d_forward.5} parent=0
    #allocation4 [shape = 'u8[512]{0}', space=vmem, size = 0x400, scoped, tag = 'output window, operand 0, single buffered']
    #allocation5 [shape = 's32[1]{0}', space=sflag, size = 0x4, scoped, tag = 'scoped memory for blip3d_forward.5']
    %15 = vsyncpa [#allocation5], 0
    // Predicated region
    $region2: #{blip3d_forward.5} parent=1 // pred_check
      _
    $region3: #{blip3d_forward.5} parent=1 // pred_check_branch
      %17 = sbr.rel (0) target = $region5
    $region4: #{blip3d_forward.5} parent=1 // pred_region
      _
    $region5: #{blip3d_forward.5} parent=1 // pred_fallthru
      _
    %v18 = vlaneseq
    %v19 = vand.u32 %v18, 127
    %v20 = vld [vmem:[%s1 + $0x8] sm:$0x7f]
    %vm21 = vcmask 522240
    %v22 = vsel %vm21, %v20, -inf
    %23 = vmax.xlane.f32.xlu0 %v22
    %v24 = vpop.xlane.xlu0 %23
    %v25 = vsub.f32 %v20, %v24
    %v26 = vmul.f32 %v25, 1.442695
    %v27 = vpow.pop %v26
    %v28 = vsel %vm21, %v27, 0.0
    %29 = vadd.xlane.f32.xlu0 %v28
    %v30 = vpop.xlane.xlu0 %29
    %v31 = vlog2.pop %v30
    %v32 = vmul.f32 %v31, 0.6931472
    %v33 = vadd.f32 %v32, %v24
    %s34 = sld [smem:[#allocation3 + $0x1]]
    %v35 = vstv %s34
    %vm36 = vcmp.eq.s32.totalorder %v19, %v35
    %v37 = vsel %vm36, 1, 0
    %v38 = vcvt.s32.f32 %v37
    %s39 = sld [smem:[#allocation3 + $0x2]]
    %v40 = vstv %s39
    %vm41 = vcmp.eq.s32.totalorder %v19, %v40
    %v42 = vsel %vm41, 1, 0
    %v43 = vcvt.s32.f32 %v42
    %s44 = sld [smem:[#allocation3 + $0x3]]
    %v45 = vstv %s44
    %vm46 = vcmp.eq.s32.totalorder %v19, %v45
    %v47 = vsel %vm46, 1, 0
    %v48 = vcvt.s32.f32 %v47
    %s49 = sld [smem:[#allocation3 + $0x4]]
    %v50 = vstv %s49
    %vm51 = vcmp.eq.s32.totalorder %v19, %v50
    %v52 = vsel %vm51, 1, 0
    %v53 = vcvt.s32.f32 %v52
    %s54 = sld [smem:[#allocation3 + $0x5]]
    %v55 = vstv %s54
    %vm56 = vcmp.eq.s32.totalorder %v19, %v55
    %v57 = vsel %vm56, 1, 0
    %v58 = vcvt.s32.f32 %v57
    %s59 = sld [smem:[#allocation3 + $0x6]]
    %v60 = vstv %s59
    %vm61 = vcmp.eq.s32.totalorder %v19, %v60
    %v62 = vsel %vm61, 1, 0
    %v63 = vcvt.s32.f32 %v62
    %s64 = sld [smem:[#allocation3 + $0x7]]
    %v65 = vstv %s64
    %vm66 = vcmp.eq.s32.totalorder %v19, %v65
    %v67 = vsel %vm66, 1, 0
    %v68 = vcvt.s32.f32 %v67
    %vm69 = vcmask 1040384
    %v70 = vsel %vm69, %v38, %v43
    %vm71 = vcmask 1041408
    %v72 = vsel %vm71, %v70, %v48
    %vm73 = vcmask 1042432
    %v74 = vsel %vm73, %v72, %v53
    %vm75 = vcmask 1043456
    %v76 = vsel %vm75, %v74, %v58
    %vm77 = vcmask 1044480
    %v78 = vsel %vm77, %v76, %v63
    %vm79 = vcmask 1045504
    %v80 = vsel %vm79, %v78, %v68
    %v81 = vmul.f32 %v80, %v20
    %v82 = vsel %vm21, %v81, 0.0
    %83 = vadd.xlane.f32.xlu0 %v82
    %v84 = vpop.xlane.xlu0 %83
    %v85 = vsub.f32 %v33, %v84
    %vm86 = vcmask 1046528
    %v87 = vsel %vm86, %v85, 0.0
    %v88 = vrot.slane %v87, 4
    %v89 = vadd.f32 %v87, %v88
    %v90 = vrot.slane %v89, 2
    %v91 = vadd.f32 %v89, %v90
    %v92 = vrot.slane %v91, 1
    %v93 = vadd.f32 %v91, %v92
    %v94 = vadd.f32 %v93, 0.0
    %s95 = scalar_lea.vmem %s1, 16
    %v96 = vld [vmem:[%s95 + $0x8] sm:$0x7f]
    %v97 = vsel %vm21, %v96, -inf
    %98 = vmax.xlane.f32.xlu0 %v97
    %v99 = vpop.xlane.xlu0 %98
    %v100 = vsub.f32 %v96, %v99
    %v101 = vmul.f32 %v100, 1.442695
    %v102 = vpow.pop %v101
    %v103 = vsel %vm21, %v102, 0.0
    %104 = vadd.xlane.f32.xlu0 %v103
    %v105 = vpop.xlane.xlu0 %104
    %v106 = vlog2.pop %v105
    %v107 = vmul.f32 %v106, 0.6931472
    %v108 = vadd.f32 %v107, %v99
    %s109 = sld [smem:[#allocation3 + $0x81]]
    %v110 = vstv %s109
    %vm111 = vcmp.eq.s32.totalorder %v19, %v110
    %v112 = vsel %vm111, 1, 0
    %v113 = vcvt.s32.f32 %v112
    %s114 = sld [smem:[#allocation3 + $0x82]]
    %v115 = vstv %s114
    %vm116 = vcmp.eq.s32.totalorder %v19, %v115
    %v117 = vsel %vm116, 1, 0
    %v118 = vcvt.s32.f32 %v117
    %s119 = sld [smem:[#allocation3 + $0x83]]
    %v120 = vstv %s119
    %vm121 = vcmp.eq.s32.totalorder %v19, %v120
    %v122 = vsel %vm121, 1, 0
    %v123 = vcvt.s32.f32 %v122
    %s124 = sld [smem:[#allocation3 + $0x84]]
    %v125 = vstv %s124
    %vm126 = vcmp.eq.s32.totalorder %v19, %v125
    %v127 = vsel %vm126, 1, 0
    %v128 = vcvt.s32.f32 %v127
    %s129 = sld [smem:[#allocation3 + $0x85]]
    %v130 = vstv %s129
    %vm131 = vcmp.eq.s32.totalorder %v19, %v130
    %v132 = vsel %vm131, 1, 0
    %v133 = vcvt.s32.f32 %v132
    %s134 = sld [smem:[#allocation3 + $0x86]]
    %v135 = vstv %s134
    %vm136 = vcmp.eq.s32.totalorder %v19, %v135
    %v137 = vsel %vm136, 1, 0
    %v138 = vcvt.s32.f32 %v137
    %s139 = sld [smem:[#allocation3 + $0x87]]
    %v140 = vstv %s139
    %vm141 = vcmp.eq.s32.totalorder %v19, %v140
    %v142 = vsel %vm141, 1, 0
    %v143 = vcvt.s32.f32 %v142
    %v144 = vsel %vm69, %v113, %v118
    %v145 = vsel %vm71, %v144, %v123
    %v146 = vsel %vm73, %v145, %v128
    %v147 = vsel %vm75, %v146, %v133
    %v148 = vsel %vm77, %v147, %v138
    %v149 = vsel %vm79, %v148, %v143
    %v150 = vmul.f32 %v149, %v96
    %v151 = vsel %vm21, %v150, 0.0
    %152 = vadd.xlane.f32.xlu0 %v151
    %v153 = vpop.xlane.xlu0 %152
    %v154 = vsub.f32 %v108, %v153
    %v155 = vsel %vm86, %v154, 0.0
    %v156 = vrot.slane %v155, 4
    %v157 = vadd.f32 %v155, %v156
    %v158 = vrot.slane %v157, 2
    %v159 = vadd.f32 %v157, %v158
    %v160 = vrot.slane %v159, 1
    %v161 = vadd.f32 %v159, %v160
    %v162 = vadd.f32 %v94, %v161
    %vm163 = vcmask 0
    %164 = vst.msk [vmem:[#allocation4] sm:$0x1] %vm163, %v162
    // Predicated region
    $region6: #{blip3d_forward.5} parent=1 // pred_check
      _
    $region7: #{blip3d_forward.5} parent=1 // pred_check_branch
      %166 = sbr.rel (0) target = $region9
    $region8: #{blip3d_forward.5} parent=1 // pred_region
      %168 = vsyncadd [#allocation5], 0
      %s170 = sshll.u32 [#allocation4], 4
      %s171 = int_to_ptr.vmem [resolvable:$true] %s170
      %s172 = sshll.u32 %s2, 4
      %s173 = int_to_ptr.hbm [resolvable:$true] %s172
      %175 = dma.vmem_to_hbm [thread:$0]  %s171, 16, %s173, [#allocation5]
    $region9: #{blip3d_forward.5} parent=1 // pred_fallthru
      _
    // Predicated region
    $region10: #{blip3d_forward.5} parent=1 // pred_check
      _
    $region11: #{blip3d_forward.5} parent=1 // pred_check_branch
      %177 = sbr.rel (0) target = $region13
    $region12: #{blip3d_forward.5} parent=1 // pred_region
      %179 = dma.done [#allocation5], 16
    $region13: #{blip3d_forward.5} parent=1 // pred_fallthru
      _
    %180 = vsyncpa [#allocation5], 1

// kernel: blip3d_forward.4
$region0: #{blip3d_forward.4}
  #allocation0 [shape = 'u32[]', space=smem, size = 0x4, offset = 0x4, fixed_abs, tag = 'smem constant byte address 0x4 - core index']
  #allocation1 [shape = 'u32[72,128]{1,0:T(1,128)}', space=vmem, size = 0x9000, scoped, tag = 'internal scratch']
  #allocation2 [shape = 's32[1]{0}', space=sflag, size = 0x4, scoped, tag = 'scoped memory for blip3d_forward.4']
  #allocation3 [shape = 'u8[1024]{0}', space=smem, size = 0x400, scoped, tag = 'prefetched SMEM operand 0']
  %s0 = inlined_call_operand.vmem [shape: s32[2,8], index: 0, kind: input, shape index: {}]
  %s1 = inlined_call_operand.vmem [shape: f32[2,8,32], index: 1, kind: input, shape index: {}]
  %s2 = inlined_call_operand.vmem [shape: f32[2,1,16], index: 2, kind: input, shape index: {}]
  %s3 = inlined_call_operand.vmem [shape: bf16[64,32], index: 3, kind: input, shape index: {}]
  %s4 = inlined_call_operand.vmem [shape: bf16[32,96], index: 4, kind: input, shape index: {}]
  %s5 = inlined_call_operand.vmem [shape: f32[1,96], index: 5, kind: input, shape index: {}]
  %s6 = inlined_call_operand.vmem [shape: bf16[32,32], index: 6, kind: input, shape index: {}]
  %s7 = inlined_call_operand.vmem [shape: f32[1,32], index: 7, kind: input, shape index: {}]
  %s8 = inlined_call_operand.vmem [shape: f32[1,32], index: 8, kind: input, shape index: {}]
  %s9 = inlined_call_operand.vmem [shape: f32[1,32], index: 9, kind: input, shape index: {}]
  %s10 = inlined_call_operand.vmem [shape: f32[1,32], index: 10, kind: input, shape index: {}]
  %s11 = inlined_call_operand.vmem [shape: f32[1,32], index: 11, kind: input, shape index: {}]
  %s12 = inlined_call_operand.vmem [shape: bf16[32,64], index: 12, kind: input, shape index: {}]
  %s13 = inlined_call_operand.vmem [shape: f32[1,64], index: 13, kind: input, shape index: {}]
  %s14 = inlined_call_operand.vmem [shape: bf16[64,32], index: 14, kind: input, shape index: {}]
  %s15 = inlined_call_operand.vmem [shape: f32[1,32], index: 15, kind: input, shape index: {}]
  %s16 = inlined_call_operand.vmem [shape: f32[1,32], index: 16, kind: input, shape index: {}]
  %s17 = inlined_call_operand.vmem [shape: f32[1,32], index: 17, kind: input, shape index: {}]
  %s18 = inlined_call_operand.vmem [shape: bf16[32,64], index: 18, kind: input, shape index: {}]
  %s19 = inlined_call_operand.vmem [shape: f32[1,64], index: 19, kind: input, shape index: {}]
  %s20 = inlined_call_operand.vmem [shape: f32[2,16,64], index: 20, kind: output, shape index: {}]
  %s21 = sld [smem:[#allocation0]]
  $region109: #{blip3d_forward.4} parent=0
    _
  %s23 = ssub.s32 1, %s21
  %s24 = scalar_select 0, %s23, %s21
  %s26 = sshll.u32 %s0, 4
  %s27 = int_to_ptr.vmem [resolvable:$true] %s26
  %29 = dma.vmem_to_smem %s27, 32, [#allocation3], [#allocation2]
  %31 = dma.done [#allocation2], 32
  %32 = sfence
  loop: start=0, step=1, limit=4
  $region2: #{blip3d_forward.4} parent=0 // loop_pre_header
    _
  $region3: #{blip3d_forward.4} parent=0 // loop_header
    %s34 = sphi 0, %s38
    %p35 = scmp.ge.s32.totalorder %s34, 4
    %s44 = sphi 0, %s46
    %s47 = sphi 0, %s44
    %s48 = sphi 0, %s47
    %s64 = sphi 0, %s48
    %s70 = sphi 0, %s72
    %s73 = sphi 0, %s70
    %s74 = sphi 0, %s73
    %s90 = sphi 0, %s74
    %s94 = sphi 0, %s94
    %s96 = sphi 0, %s94
    %s97 = sphi 0, %s96
    %s111 = sphi 0, %s97
    %s115 = sphi 0, %s115
    %s117 = sphi 0, %s115
    %s118 = sphi 0, %s117
    %s132 = sphi 0, %s118
    %s136 = sphi 0, %s136
    %s138 = sphi 0, %s136
    %s139 = sphi 0, %s138
    %s153 = sphi 0, %s139
    %s157 = sphi 0, %s157
    %s159 = sphi 0, %s157
    %s160 = sphi 0, %s159
    %s174 = sphi 0, %s160
    %s178 = sphi 0, %s178
    %s180 = sphi 0, %s178
    %s181 = sphi 0, %s180
    %s195 = sphi 0, %s181
    %s199 = sphi 0, %s199
    %s201 = sphi 0, %s199
    %s202 = sphi 0, %s201
    %s216 = sphi 0, %s202
    %s220 = sphi 0, %s220
    %s222 = sphi 0, %s220
    %s223 = sphi 0, %s222
    %s237 = sphi 0, %s223
    %s241 = sphi 0, %s241
    %s243 = sphi 0, %s241
    %s244 = sphi 0, %s243
    %s258 = sphi 0, %s244
    %s262 = sphi 0, %s262
    %s264 = sphi 0, %s262
    %s265 = sphi 0, %s264
    %s279 = sphi 0, %s265
    %s283 = sphi 0, %s283
    %s285 = sphi 0, %s283
    %s286 = sphi 0, %s285
    %s300 = sphi 0, %s286
    %s304 = sphi 0, %s304
    %s306 = sphi 0, %s304
    %s307 = sphi 0, %s306
    %s321 = sphi 0, %s307
    %s325 = sphi 0, %s325
    %s327 = sphi 0, %s325
    %s328 = sphi 0, %s327
    %s342 = sphi 0, %s328
    %s346 = sphi 0, %s346
    %s348 = sphi 0, %s346
    %s349 = sphi 0, %s348
    %s363 = sphi 0, %s349
    %s367 = sphi 0, %s367
    %s369 = sphi 0, %s367
    %s370 = sphi 0, %s369
    %s384 = sphi 0, %s370
    %s388 = sphi 0, %s388
    %s390 = sphi 0, %s388
    %s391 = sphi 0, %s390
    %s405 = sphi 0, %s391
    %s409 = sphi 0, %s409
    %s411 = sphi 0, %s409
    %s412 = sphi 0, %s411
    %s426 = sphi 0, %s412
    %s430 = sphi 0, %s430
    %s432 = sphi 0, %s430
    %s433 = sphi 0, %s432
    %s447 = sphi 0, %s433
    %s453 = sphi 0, %s455
    %s456 = sphi 0, %s453
    %s457 = sphi 0, %s456
    %s473 = sphi 0, %s457
  $region4: #{blip3d_forward.4} parent=0 // loop_header_branch
    %37 = sbr.rel (%p35) target = $region8
  $region5: #{blip3d_forward.4} parent=0 // loop_body
    %s39 = ssub.s32 %s34, 1
    %s40 = ssub.s32 %s34, 2
    %s41 = sadd.s32 %s34, 1
    %s42 = ssub.s32 %s34, %s41
    %p43 = scmp.eq.s32.totalorder %s42, 0
    %s45 = sadd.s32 %s44, 1
    %s46 = scalar_select %p43, %s44, %s45
    %p49 = pneg %p43
    %p50 = scmp.eq.s32.totalorder %s34, 1
    %p51 = por %p49, %p50
    %p52 = scmp.ne.s32.totalorder %s44, %s47
    %p53 = scmp.eq.s32.totalorder %s34, 0
    %p54 = por %p52, %p53
    %p55 = scmp.ne.s32.totalorder %s44, %s47
    %p56 = scmp.eq.s32.totalorder %s39, 1
    %p57 = por %p55, %p56
    %p58 = scmp.ne.s32.totalorder %s47, %s48
    %p59 = scmp.eq.s32.totalorder %s39, 0
    %p60 = por %p58, %p59
    %p61 = scmp.ne.s32.totalorder %s47, %s48
    %p62 = scmp.eq.s32.totalorder %s40, 1
    %p63 = por %p61, %p62
    %p65 = scmp.ne.s32.totalorder %s48, %s64
    %p66 = scmp.eq.s32.totalorder %s40, 0
    %p67 = por %p65, %p66
    %s68 = ssub.s32 %s34, %s41
    %p69 = scmp.eq.s32.totalorder %s68, 0
    %s71 = sadd.s32 %s70, 1
    %s72 = scalar_select %p69, %s70, %s71
    %p75 = pneg %p69
    %p76 = scmp.eq.s32.totalorder %s34, 1
    %p77 = por %p75, %p76
    %p78 = scmp.ne.s32.totalorder %s70, %s73
    %p79 = scmp.eq.s32.totalorder %s34, 0
    %p80 = por %p78, %p79
    %p81 = scmp.ne.s32.totalorder %s70, %s73
    %p82 = scmp.eq.s32.totalorder %s39, 1
    %p83 = por %p81, %p82
    %p84 = scmp.ne.s32.totalorder %s73, %s74
    %p85 = scmp.eq.s32.totalorder %s39, 0
    %p86 = por %p84, %p85
    %p87 = scmp.ne.s32.totalorder %s73, %s74
    %p88 = scmp.eq.s32.totalorder %s40, 1
    %p89 = por %p87, %p88
    %p91 = scmp.ne.s32.totalorder %s74, %s90
    %p92 = scmp.eq.s32.totalorder %s40, 0
    %p93 = por %p91, %p92
    %s95 = sadd.s32 %s94, 1
    %p98 = scmp.eq.s32.totalorder %s34, 1
    %p99 = scmp.ne.s32.totalorder %s94, %s96
    %p100 = scmp.eq.s32.totalorder %s34, 0
    %p101 = por %p99, %p100
    %p102 = scmp.ne.s32.totalorder %s94, %s96
    %p103 = scmp.eq.s32.totalorder %s39, 1
    %p104 = por %p102, %p103
    %p105 = scmp.ne.s32.totalorder %s96, %s97
    %p106 = scmp.eq.s32.totalorder %s39, 0
    %p107 = por %p105, %p106
    %p108 = scmp.ne.s32.totalorder %s96, %s97
    %p109 = scmp.eq.s32.totalorder %s40, 1
    %p110 = por %p108, %p109
    %p112 = scmp.ne.s32.totalorder %s97, %s111
    %p113 = scmp.eq.s32.totalorder %s40, 0
    %p114 = por %p112, %p113
    %s116 = sadd.s32 %s115, 1
    %p119 = scmp.eq.s32.totalorder %s34, 1
    %p120 = scmp.ne.s32.totalorder %s115, %s117
    %p121 = scmp.eq.s32.totalorder %s34, 0
    %p122 = por %p120, %p121
    %p123 = scmp.ne.s32.totalorder %s115, %s117
    %p124 = scmp.eq.s32.totalorder %s39, 1
    %p125 = por %p123, %p124
    %p126 = scmp.ne.s32.totalorder %s117, %s118
    %p127 = scmp.eq.s32.totalorder %s39, 0
    %p128 = por %p126, %p127
    %p129 = scmp.ne.s32.totalorder %s117, %s118
    %p130 = scmp.eq.s32.totalorder %s40, 1
    %p131 = por %p129, %p130
    %p133 = scmp.ne.s32.totalorder %s118, %s132
    %p134 = scmp.eq.s32.totalorder %s40, 0
    %p135 = por %p133, %p134
    %s137 = sadd.s32 %s136, 1
    %p140 = scmp.eq.s32.totalorder %s34, 1
    %p141 = scmp.ne.s32.totalorder %s136, %s138
    %p142 = scmp.eq.s32.totalorder %s34, 0
    %p143 = por %p141, %p142
    %p144 = scmp.ne.s32.totalorder %s136, %s138
    %p145 = scmp.eq.s32.totalorder %s39, 1
    %p146 = por %p144, %p145
    %p147 = scmp.ne.s32.totalorder %s138, %s139
    %p148 = scmp.eq.s32.totalorder %s39, 0
    %p149 = por %p147, %p148
    %p150 = scmp.ne.s32.totalorder %s138, %s139
    %p151 = scmp.eq.s32.totalorder %s40, 1
    %p152 = por %p150, %p151
    %p154 = scmp.ne.s32.totalorder %s139, %s153
    %p155 = scmp.eq.s32.totalorder %s40, 0
    %p156 = por %p154, %p155
    %s158 = sadd.s32 %s157, 1
    %p161 = scmp.eq.s32.totalorder %s34, 1
    %p162 = scmp.ne.s32.totalorder %s157, %s159
    %p163 = scmp.eq.s32.totalorder %s34, 0
    %p164 = por %p162, %p163
    %p165 = scmp.ne.s32.totalorder %s157, %s159
    %p166 = scmp.eq.s32.totalorder %s39, 1
    %p167 = por %p165, %p166
    %p168 = scmp.ne.s32.totalorder %s159, %s160
    %p169 = scmp.eq.s32.totalorder %s39, 0
    %p170 = por %p168, %p169
    %p171 = scmp.ne.s32.totalorder %s159, %s160
    %p172 = scmp.eq.s32.totalorder %s40, 1
    %p173 = por %p171, %p172
    %p175 = scmp.ne.s32.totalorder %s160, %s174
    %p176 = scmp.eq.s32.totalorder %s40, 0
    %p177 = por %p175, %p176
    %s179 = sadd.s32 %s178, 1
    %p182 = scmp.eq.s32.totalorder %s34, 1
    %p183 = scmp.ne.s32.totalorder %s178, %s180
    %p184 = scmp.eq.s32.totalorder %s34, 0
    %p185 = por %p183, %p184
    %p186 = scmp.ne.s32.totalorder %s178, %s180
    %p187 = scmp.eq.s32.totalorder %s39, 1
    %p188 = por %p186, %p187
    %p189 = scmp.ne.s32.totalorder %s180, %s181
    %p190 = scmp.eq.s32.totalorder %s39, 0
    %p191 = por %p189, %p190
    %p192 = scmp.ne.s32.totalorder %s180, %s181
    %p193 = scmp.eq.s32.totalorder %s40, 1
    %p194 = por %p192, %p193
    %p196 = scmp.ne.s32.totalorder %s181, %s195
    %p197 = scmp.eq.s32.totalorder %s40, 0
    %p198 = por %p196, %p197
    %s200 = sadd.s32 %s199, 1
    %p203 = scmp.eq.s32.totalorder %s34, 1
    %p204 = scmp.ne.s32.totalorder %s199, %s201
    %p205 = scmp.eq.s32.totalorder %s34, 0
    %p206 = por %p204, %p205
    %p207 = scmp.ne.s32.totalorder %s199, %s201
    %p208 = scmp.eq.s32.totalorder %s39, 1
    %p209 = por %p207, %p208
    %p210 = scmp.ne.s32.totalorder %s201, %s202
    %p211 = scmp.eq.s32.totalorder %s39, 0
    %p212 = por %p210, %p211
    %p213 = scmp.ne.s32.totalorder %s201, %s202
    %p214 = scmp.eq.s32.totalorder %s40, 1
    %p215 = por %p213, %p214
    %p217 = scmp.ne.s32.totalorder %s202, %s216
    %p218 = scmp.eq.s32.totalorder %s40, 0
    %p219 = por %p217, %p218
    %s221 = sadd.s32 %s220, 1
    %p224 = scmp.eq.s32.totalorder %s34, 1
    %p225 = scmp.ne.s32.totalorder %s220, %s222
    %p226 = scmp.eq.s32.totalorder %s34, 0
    %p227 = por %p225, %p226
    %p228 = scmp.ne.s32.totalorder %s220, %s222
    %p229 = scmp.eq.s32.totalorder %s39, 1
    %p230 = por %p228, %p229
    %p231 = scmp.ne.s32.totalorder %s222, %s223
    %p232 = scmp.eq.s32.totalorder %s39, 0
    %p233 = por %p231, %p232
    %p234 = scmp.ne.s32.totalorder %s222, %s223
    %p235 = scmp.eq.s32.totalorder %s40, 1
    %p236 = por %p234, %p235
    %p238 = scmp.ne.s32.totalorder %s223, %s237
    %p239 = scmp.eq.s32.totalorder %s40, 0
    %p240 = por %p238, %p239
    %s242 = sadd.s32 %s241, 1
    %p245 = scmp.eq.s32.totalorder %s34, 1
    %p246 = scmp.ne.s32.totalorder %s241, %s243
    %p247 = scmp.eq.s32.totalorder %s34, 0
    %p248 = por %p246, %p247
    %p249 = scmp.ne.s32.totalorder %s241, %s243
    %p250 = scmp.eq.s32.totalorder %s39, 1
    %p251 = por %p249, %p250
    %p252 = scmp.ne.s32.totalorder %s243, %s244
    %p253 = scmp.eq.s32.totalorder %s39, 0
    %p254 = por %p252, %p253
    %p255 = scmp.ne.s32.totalorder %s243, %s244
    %p256 = scmp.eq.s32.totalorder %s40, 1
    %p257 = por %p255, %p256
    %p259 = scmp.ne.s32.totalorder %s244, %s258
    %p260 = scmp.eq.s32.totalorder %s40, 0
    %p261 = por %p259, %p260
    %s263 = sadd.s32 %s262, 1
    %p266 = scmp.eq.s32.totalorder %s34, 1
    %p267 = scmp.ne.s32.totalorder %s262, %s264
    %p268 = scmp.eq.s32.totalorder %s34, 0
    %p269 = por %p267, %p268
    %p270 = scmp.ne.s32.totalorder %s262, %s264
    %p271 = scmp.eq.s32.totalorder %s39, 1
    %p272 = por %p270, %p271
    %p273 = scmp.ne.s32.totalorder %s264, %s265
    %p274 = scmp.eq.s32.totalorder %s39, 0
    %p275 = por %p273, %p274
    %p276 = scmp.ne.s32.totalorder %s264, %s265
    %p277 = scmp.eq.s32.totalorder %s40, 1
    %p278 = por %p276, %p277
    %p280 = scmp.ne.s32.totalorder %s265, %s279
    %p281 = scmp.eq.s32.totalorder %s40, 0
    %p282 = por %p280, %p281
    %s284 = sadd.s32 %s283, 1
    %p287 = scmp.eq.s32.totalorder %s34, 1
    %p288 = scmp.ne.s32.totalorder %s283, %s285
    %p289 = scmp.eq.s32.totalorder %s34, 0
    %p290 = por %p288, %p289
    %p291 = scmp.ne.s32.totalorder %s283, %s285
    %p292 = scmp.eq.s32.totalorder %s39, 1
    %p293 = por %p291, %p292
    %p294 = scmp.ne.s32.totalorder %s285, %s286
    %p295 = scmp.eq.s32.totalorder %s39, 0
    %p296 = por %p294, %p295
    %p297 = scmp.ne.s32.totalorder %s285, %s286
    %p298 = scmp.eq.s32.totalorder %s40, 1
    %p299 = por %p297, %p298
    %p301 = scmp.ne.s32.totalorder %s286, %s300
    %p302 = scmp.eq.s32.totalorder %s40, 0
    %p303 = por %p301, %p302
    %s305 = sadd.s32 %s304, 1
    %p308 = scmp.eq.s32.totalorder %s34, 1
    %p309 = scmp.ne.s32.totalorder %s304, %s306
    %p310 = scmp.eq.s32.totalorder %s34, 0
    %p311 = por %p309, %p310
    %p312 = scmp.ne.s32.totalorder %s304, %s306
    %p313 = scmp.eq.s32.totalorder %s39, 1
    %p314 = por %p312, %p313
    %p315 = scmp.ne.s32.totalorder %s306, %s307
    %p316 = scmp.eq.s32.totalorder %s39, 0
    %p317 = por %p315, %p316
    %p318 = scmp.ne.s32.totalorder %s306, %s307
    %p319 = scmp.eq.s32.totalorder %s40, 1
    %p320 = por %p318, %p319
    %p322 = scmp.ne.s32.totalorder %s307, %s321
    %p323 = scmp.eq.s32.totalorder %s40, 0
    %p324 = por %p322, %p323
    %s326 = sadd.s32 %s325, 1
    %p329 = scmp.eq.s32.totalorder %s34, 1
    %p330 = scmp.ne.s32.totalorder %s325, %s327
    %p331 = scmp.eq.s32.totalorder %s34, 0
    %p332 = por %p330, %p331
    %p333 = scmp.ne.s32.totalorder %s325, %s327
    %p334 = scmp.eq.s32.totalorder %s39, 1
    %p335 = por %p333, %p334
    %p336 = scmp.ne.s32.totalorder %s327, %s328
    %p337 = scmp.eq.s32.totalorder %s39, 0
    %p338 = por %p336, %p337
    %p339 = scmp.ne.s32.totalorder %s327, %s328
    %p340 = scmp.eq.s32.totalorder %s40, 1
    %p341 = por %p339, %p340
    %p343 = scmp.ne.s32.totalorder %s328, %s342
    %p344 = scmp.eq.s32.totalorder %s40, 0
    %p345 = por %p343, %p344
    %s347 = sadd.s32 %s346, 1
    %p350 = scmp.eq.s32.totalorder %s34, 1
    %p351 = scmp.ne.s32.totalorder %s346, %s348
    %p352 = scmp.eq.s32.totalorder %s34, 0
    %p353 = por %p351, %p352
    %p354 = scmp.ne.s32.totalorder %s346, %s348
    %p355 = scmp.eq.s32.totalorder %s39, 1
    %p356 = por %p354, %p355
    %p357 = scmp.ne.s32.totalorder %s348, %s349
    %p358 = scmp.eq.s32.totalorder %s39, 0
    %p359 = por %p357, %p358
    %p360 = scmp.ne.s32.totalorder %s348, %s349
    %p361 = scmp.eq.s32.totalorder %s40, 1
    %p362 = por %p360, %p361
    %p364 = scmp.ne.s32.totalorder %s349, %s363
    %p365 = scmp.eq.s32.totalorder %s40, 0
    %p366 = por %p364, %p365
    %s368 = sadd.s32 %s367, 1
    %p371 = scmp.eq.s32.totalorder %s34, 1
    %p372 = scmp.ne.s32.totalorder %s367, %s369
    %p373 = scmp.eq.s32.totalorder %s34, 0
    %p374 = por %p372, %p373
    %p375 = scmp.ne.s32.totalorder %s367, %s369
    %p376 = scmp.eq.s32.totalorder %s39, 1
    %p377 = por %p375, %p376
    %p378 = scmp.ne.s32.totalorder %s369, %s370
    %p379 = scmp.eq.s32.totalorder %s39, 0
    %p380 = por %p378, %p379
    %p381 = scmp.ne.s32.totalorder %s369, %s370
    %p382 = scmp.eq.s32.totalorder %s40, 1
    %p383 = por %p381, %p382
    %p385 = scmp.ne.s32.totalorder %s370, %s384
    %p386 = scmp.eq.s32.totalorder %s40, 0
    %p387 = por %p385, %p386
    %s389 = sadd.s32 %s388, 1
    %p392 = scmp.eq.s32.totalorder %s34, 1
    %p393 = scmp.ne.s32.totalorder %s388, %s390
    %p394 = scmp.eq.s32.totalorder %s34, 0
    %p395 = por %p393, %p394
    %p396 = scmp.ne.s32.totalorder %s388, %s390
    %p397 = scmp.eq.s32.totalorder %s39, 1
    %p398 = por %p396, %p397
    %p399 = scmp.ne.s32.totalorder %s390, %s391
    %p400 = scmp.eq.s32.totalorder %s39, 0
    %p401 = por %p399, %p400
    %p402 = scmp.ne.s32.totalorder %s390, %s391
    %p403 = scmp.eq.s32.totalorder %s40, 1
    %p404 = por %p402, %p403
    %p406 = scmp.ne.s32.totalorder %s391, %s405
    %p407 = scmp.eq.s32.totalorder %s40, 0
    %p408 = por %p406, %p407
    %s410 = sadd.s32 %s409, 1
    %p413 = scmp.eq.s32.totalorder %s34, 1
    %p414 = scmp.ne.s32.totalorder %s409, %s411
    %p415 = scmp.eq.s32.totalorder %s34, 0
    %p416 = por %p414, %p415
    %p417 = scmp.ne.s32.totalorder %s409, %s411
    %p418 = scmp.eq.s32.totalorder %s39, 1
    %p419 = por %p417, %p418
    %p420 = scmp.ne.s32.totalorder %s411, %s412
    %p421 = scmp.eq.s32.totalorder %s39, 0
    %p422 = por %p420, %p421
    %p423 = scmp.ne.s32.totalorder %s411, %s412
    %p424 = scmp.eq.s32.totalorder %s40, 1
    %p425 = por %p423, %p424
    %p427 = scmp.ne.s32.totalorder %s412, %s426
    %p428 = scmp.eq.s32.totalorder %s40, 0
    %p429 = por %p427, %p428
    %s431 = sadd.s32 %s430, 1
    %p434 = scmp.eq.s32.totalorder %s34, 1
    %p435 = scmp.ne.s32.totalorder %s430, %s432
    %p436 = scmp.eq.s32.totalorder %s34, 0
    %p437 = por %p435, %p436
    %p438 = scmp.ne.s32.totalorder %s430, %s432
    %p439 = scmp.eq.s32.totalorder %s39, 1
    %p440 = por %p438, %p439
    %p441 = scmp.ne.s32.totalorder %s432, %s433
    %p442 = scmp.eq.s32.totalorder %s39, 0
    %p443 = por %p441, %p442
    %p444 = scmp.ne.s32.totalorder %s432, %s433
    %p445 = scmp.eq.s32.totalorder %s40, 1
    %p446 = por %p444, %p445
    %p448 = scmp.ne.s32.totalorder %s433, %s447
    %p449 = scmp.eq.s32.totalorder %s40, 0
    %p450 = por %p448, %p449
    %s451 = ssub.s32 %s34, %s41
    %p452 = scmp.eq.s32.totalorder %s451, 0
    %s454 = sadd.s32 %s453, 1
    %s455 = scalar_select %p452, %s453, %s454
    %p458 = pneg %p452
    %p459 = scmp.eq.s32.totalorder %s34, 1
    %p460 = por %p458, %p459
    %p461 = scmp.ne.s32.totalorder %s453, %s456
    %p462 = scmp.eq.s32.totalorder %s34, 0
    %p463 = por %p461, %p462
    %p464 = scmp.ne.s32.totalorder %s453, %s456
    %p465 = scmp.eq.s32.totalorder %s39, 1
    %p466 = por %p464, %p465
    %p467 = scmp.ne.s32.totalorder %s456, %s457
    %p468 = scmp.eq.s32.totalorder %s39, 0
    %p469 = por %p467, %p468
    %p470 = scmp.ne.s32.totalorder %s456, %s457
    %p471 = scmp.eq.s32.totalorder %s40, 1
    %p472 = por %p470, %p471
    %p474 = scmp.ne.s32.totalorder %s457, %s473
    %p475 = scmp.eq.s32.totalorder %s40, 0
    %p476 = por %p474, %p475
    %p477 = scmp.le.s32.totalorder 1, %s34
    %p478 = scmp.lt.s32.totalorder %s34, 3
    %p479 = pnand %p477, %p478
    %p480 = pneg %p479
    // Predicated region
    $region9: #{blip3d_forward.4} parent=5 // pred_check
      _
    $region10: #{blip3d_forward.4} parent=5 // pred_check_branch
      %482 = sbr.rel (%p479) target = $region12
    $region11: #{blip3d_forward.4} parent=5 // pred_region
      %s483 = ssub.s32 %s34, 1
      // Predicated region
      $region13: #{blip3d_forward.4} parent=11 // pred_check
        %p484 = pneg %p107
      $region14: #{blip3d_forward.4} parent=11 // pred_check_branch
        %486 = sbr.rel (%p484) target = $region16
      $region15: #{blip3d_forward.4} parent=11 // pred_region
        _
      $region16: #{blip3d_forward.4} parent=11 // pred_fallthru
        _
      // Predicated region
      $region17: #{blip3d_forward.4} parent=11 // pred_check
        %p487 = pneg %p128
      $region18: #{blip3d_forward.4} parent=11 // pred_check_branch
        %489 = sbr.rel (%p487) target = $region20
      $region19: #{blip3d_forward.4} parent=11 // pred_region
        _
      $region20: #{blip3d_forward.4} parent=11 // pred_fallthru
        _
      // Predicated region
      $region21: #{blip3d_forward.4} parent=11 // pred_check
        %p490 = pneg %p149
      $region22: #{blip3d_forward.4} parent=11 // pred_check_branch
        %492 = sbr.rel (%p490) target = $region24
      $region23: #{blip3d_forward.4} parent=11 // pred_region
        _
      $region24: #{blip3d_forward.4} parent=11 // pred_fallthru
        _
      // Predicated region
      $region25: #{blip3d_forward.4} parent=11 // pred_check
        %p493 = pneg %p170
      $region26: #{blip3d_forward.4} parent=11 // pred_check_branch
        %495 = sbr.rel (%p493) target = $region28
      $region27: #{blip3d_forward.4} parent=11 // pred_region
        _
      $region28: #{blip3d_forward.4} parent=11 // pred_fallthru
        _
      // Predicated region
      $region29: #{blip3d_forward.4} parent=11 // pred_check
        %p496 = pneg %p191
      $region30: #{blip3d_forward.4} parent=11 // pred_check_branch
        %498 = sbr.rel (%p496) target = $region32
      $region31: #{blip3d_forward.4} parent=11 // pred_region
        _
      $region32: #{blip3d_forward.4} parent=11 // pred_fallthru
        _
      // Predicated region
      $region33: #{blip3d_forward.4} parent=11 // pred_check
        %p499 = pneg %p212
      $region34: #{blip3d_forward.4} parent=11 // pred_check_branch
        %501 = sbr.rel (%p499) target = $region36
      $region35: #{blip3d_forward.4} parent=11 // pred_region
        _
      $region36: #{blip3d_forward.4} parent=11 // pred_fallthru
        _
      // Predicated region
      $region37: #{blip3d_forward.4} parent=11 // pred_check
        %p502 = pneg %p233
      $region38: #{blip3d_forward.4} parent=11 // pred_check_branch
        %504 = sbr.rel (%p502) target = $region40
      $region39: #{blip3d_forward.4} parent=11 // pred_region
        _
      $region40: #{blip3d_forward.4} parent=11 // pred_fallthru
        _
      // Predicated region
      $region41: #{blip3d_forward.4} parent=11 // pred_check
        %p505 = pneg %p254
      $region42: #{blip3d_forward.4} parent=11 // pred_check_branch
        %507 = sbr.rel (%p505) target = $region44
      $region43: #{blip3d_forward.4} parent=11 // pred_region
        _
      $region44: #{blip3d_forward.4} parent=11 // pred_fallthru
        _
      // Predicated region
      $region45: #{blip3d_forward.4} parent=11 // pred_check
        %p508 = pneg %p275
      $region46: #{blip3d_forward.4} parent=11 // pred_check_branch
        %510 = sbr.rel (%p508) target = $region48
      $region47: #{blip3d_forward.4} parent=11 // pred_region
        _
      $region48: #{blip3d_forward.4} parent=11 // pred_fallthru
        _
      // Predicated region
      $region49: #{blip3d_forward.4} parent=11 // pred_check
        %p511 = pneg %p296
      $region50: #{blip3d_forward.4} parent=11 // pred_check_branch
        %513 = sbr.rel (%p511) target = $region52
      $region51: #{blip3d_forward.4} parent=11 // pred_region
        _
      $region52: #{blip3d_forward.4} parent=11 // pred_fallthru
        _
      // Predicated region
      $region53: #{blip3d_forward.4} parent=11 // pred_check
        %p514 = pneg %p317
      $region54: #{blip3d_forward.4} parent=11 // pred_check_branch
        %516 = sbr.rel (%p514) target = $region56
      $region55: #{blip3d_forward.4} parent=11 // pred_region
        _
      $region56: #{blip3d_forward.4} parent=11 // pred_fallthru
        _
      // Predicated region
      $region57: #{blip3d_forward.4} parent=11 // pred_check
        %p517 = pneg %p338
      $region58: #{blip3d_forward.4} parent=11 // pred_check_branch
        %519 = sbr.rel (%p517) target = $region60
      $region59: #{blip3d_forward.4} parent=11 // pred_region
        _
      $region60: #{blip3d_forward.4} parent=11 // pred_fallthru
        _
      // Predicated region
      $region61: #{blip3d_forward.4} parent=11 // pred_check
        %p520 = pneg %p359
      $region62: #{blip3d_forward.4} parent=11 // pred_check_branch
        %522 = sbr.rel (%p520) target = $region64
      $region63: #{blip3d_forward.4} parent=11 // pred_region
        _
      $region64: #{blip3d_forward.4} parent=11 // pred_fallthru
        _
      // Predicated region
      $region65: #{blip3d_forward.4} parent=11 // pred_check
        %p523 = pneg %p380
      $region66: #{blip3d_forward.4} parent=11 // pred_check_branch
        %525 = sbr.rel (%p523) target = $region68
      $region67: #{blip3d_forward.4} parent=11 // pred_region
        _
      $region68: #{blip3d_forward.4} parent=11 // pred_fallthru
        _
      // Predicated region
      $region69: #{blip3d_forward.4} parent=11 // pred_check
        %p526 = pneg %p401
      $region70: #{blip3d_forward.4} parent=11 // pred_check_branch
        %528 = sbr.rel (%p526) target = $region72
      $region71: #{blip3d_forward.4} parent=11 // pred_region
        _
      $region72: #{blip3d_forward.4} parent=11 // pred_fallthru
        _
      // Predicated region
      $region73: #{blip3d_forward.4} parent=11 // pred_check
        %p529 = pneg %p422
      $region74: #{blip3d_forward.4} parent=11 // pred_check_branch
        %531 = sbr.rel (%p529) target = $region76
      $region75: #{blip3d_forward.4} parent=11 // pred_region
        _
      $region76: #{blip3d_forward.4} parent=11 // pred_fallthru
        _
      // Predicated region
      $region77: #{blip3d_forward.4} parent=11 // pred_check
        %p532 = pneg %p443
      $region78: #{blip3d_forward.4} parent=11 // pred_check_branch
        %534 = sbr.rel (%p532) target = $region80
      $region79: #{blip3d_forward.4} parent=11 // pred_region
        _
      $region80: #{blip3d_forward.4} parent=11 // pred_fallthru
        _
    $region12: #{blip3d_forward.4} parent=5 // pred_fallthru
      _
    %p535 = scmp.lt.s32.totalorder %s34, 2
    // Predicated region
    $region81: #{blip3d_forward.4} parent=5 // pred_check
      %p536 = pneg %p535
    $region82: #{blip3d_forward.4} parent=5 // pred_check_branch
      %538 = sbr.rel (%p536) target = $region84
    $region83: #{blip3d_forward.4} parent=5 // pred_region
      // Predicated region
      $region85: #{blip3d_forward.4} parent=83 // pred_check
        %p539 = pneg %p54
      $region86: #{blip3d_forward.4} parent=83 // pred_check_branch
        %541 = sbr.rel (%p539) target = $region88
      $region87: #{blip3d_forward.4} parent=83 // pred_region
        %p542 = scmp.lt.s32.totalorder %s34, 1
        %s543 = scalar_select %p542, %s34, 1
        %s544 = smul.addr %s543, 8
        %s545 = scalar_lea.vmem %s1, %s544
      $region88: #{blip3d_forward.4} parent=83 // pred_fallthru
        _
      // Predicated region
      $region89: #{blip3d_forward.4} parent=83 // pred_check
        %p546 = pneg %p80
      $region90: #{blip3d_forward.4} parent=83 // pred_check_branch
        %548 = sbr.rel (%p546) target = $region92
      $region91: #{blip3d_forward.4} parent=83 // pred_region
        %p549 = scmp.lt.s32.totalorder %s34, 1
        %s550 = scalar_select %p549, %s34, 1
        %s551 = scalar_lea.vmem %s2, %s550
      $region92: #{blip3d_forward.4} parent=83 // pred_fallthru
        _
    $region84: #{blip3d_forward.4} parent=5 // pred_fallthru
      _
    %p552 = scmp.le.s32.totalorder 1, %s34
    %p553 = scmp.lt.s32.totalorder %s34, 3
    %p554 = pnand %p552, %p553
    %p555 = pneg %p554
    // Predicated region
    $region93: #{blip3d_forward.4} parent=5 // pred_check
      _
    $region94: #{blip3d_forward.4} parent=5 // pred_check_branch
      %557 = sbr.rel (%p554) target = $region96
    $region95: #{blip3d_forward.4} parent=5 // pred_region
      %s558 = ssub.s32 %s34, 1
      %p559 = scmp.lt.s32.totalorder %s39, 1
      %s560 = scalar_select %p559, %s39, 1
      %s561 = smul.addr %s560, 8
      %s562 = scalar_lea.vmem %s1, %s561
      %p563 = pneg %p60
      %p564 = pneg %p57
      %p565 = scmp.lt.s32.totalorder %s39, 1
      %s566 = scalar_select %p565, %s39, 1
      %s567 = scalar_lea.vmem %s2, %s566
      %p568 = pneg %p86
      %p569 = pneg %p83
      %p570 = pneg %p107
      %p571 = pneg %p104
      %p572 = pneg %p128
      %p573 = pneg %p125
      %p574 = pneg %p149
      %p575 = pneg %p146
      %p576 = pneg %p170
      %p577 = pneg %p167
      %p578 = pneg %p191
      %p579 = pneg %p188
      %p580 = pneg %p212
      %p581 = pneg %p209
      %p582 = pneg %p233
      %p583 = pneg %p230
      %p584 = pneg %p254
      %p585 = pneg %p251
      %p586 = pneg %p275
      %p587 = pneg %p272
      %p588 = pneg %p296
      %p589 = pneg %p293
      %p590 = pneg %p317
      %p591 = pneg %p314
      %p592 = pneg %p338
      %p593 = pneg %p335
      %p594 = pneg %p359
      %p595 = pneg %p356
      %p596 = pneg %p380
      %p597 = pneg %p377
      %p598 = pneg %p401
      %p599 = pneg %p398
      %p600 = pneg %p422
      %p601 = pneg %p419
      %p602 = pneg %p443
      %p603 = pneg %p440
      %p604 = pneg %p469
      %p605 = pneg %p466
      %p606 = scmp.lt.s32.totalorder %s39, 1
      %s607 = scalar_select %p606, %s39, 1
      %s608 = smul.addr %s607, 2
      %s609 = smul.addr %s608, 8
      %s610 = scalar_lea.vmem %s20, %s609
      %p611 = scmp.lt.s32.totalorder %s39, 1
      %s612 = scalar_select %p611, %s39, 1
      %s613 = smul.addr %s612, 8
      %s614 = scalar_lea.vmem %s1, %s613
      %p615 = scmp.lt.s32.totalorder %s39, 1
      %s616 = scalar_select %p615, %s39, 1
      %s617 = scalar_lea.vmem %s2, %s616
      %p618 = scmp.lt.s32.totalorder %s39, 1
      %s619 = scalar_select %p618, %s39, 1
      %s620 = smul.addr %s619, 2
      %s621 = smul.addr %s620, 8
      %s622 = scalar_lea.vmem %s20, %s621
      %v624 = vlaneseq
      %v625 = vand.u32 %v624, 127
      %s626 = smul.u32 %s39, 128
      %s627 = sld [smem:[#allocation3 + %s626]]
      %v628 = vstv %s627
      %vm629 = vcmp.eq.s32.totalorder %v625, %v628
      %v630 = vsel %vm629, 1, 0
      %v631 = vcvt.s32.f32 %v630
      %s632 = sadd.s32 %s626, 1
      %s633 = sld [smem:[#allocation3 + %s632]]
      %v634 = vstv %s633
      %vm635 = vcmp.eq.s32.totalorder %v625, %v634
      %v636 = vsel %vm635, 1, 0
      %v637 = vcvt.s32.f32 %v636
      %s638 = sadd.s32 %s626, 2
      %s639 = sld [smem:[#allocation3 + %s638]]
      %v640 = vstv %s639
      %vm641 = vcmp.eq.s32.totalorder %v625, %v640
      %v642 = vsel %vm641, 1, 0
      %v643 = vcvt.s32.f32 %v642
      %s644 = sadd.s32 %s626, 3
      %s645 = sld [smem:[#allocation3 + %s644]]
      %v646 = vstv %s645
      %vm647 = vcmp.eq.s32.totalorder %v625, %v646
      %v648 = vsel %vm647, 1, 0
      %v649 = vcvt.s32.f32 %v648
      %s650 = sadd.s32 %s626, 4
      %s651 = sld [smem:[#allocation3 + %s650]]
      %v652 = vstv %s651
      %vm653 = vcmp.eq.s32.totalorder %v625, %v652
      %v654 = vsel %vm653, 1, 0
      %v655 = vcvt.s32.f32 %v654
      %s656 = sadd.s32 %s626, 5
      %s657 = sld [smem:[#allocation3 + %s656]]
      %v658 = vstv %s657
      %vm659 = vcmp.eq.s32.totalorder %v625, %v658
      %v660 = vsel %vm659, 1, 0
      %v661 = vcvt.s32.f32 %v660
      %s662 = sadd.s32 %s626, 6
      %s663 = sld [smem:[#allocation3 + %s662]]
      %v664 = vstv %s663
      %vm665 = vcmp.eq.s32.totalorder %v625, %v664
      %v666 = vsel %vm665, 1, 0
      %v667 = vcvt.s32.f32 %v666
      %s668 = sadd.s32 %s626, 7
      %s669 = sld [smem:[#allocation3 + %s668]]
      %v670 = vstv %s669
      %vm671 = vcmp.eq.s32.totalorder %v625, %v670
      %v672 = vsel %vm671, 1, 0
      %v673 = vcvt.s32.f32 %v672
      %vm674 = vcmask 1040384
      %v675 = vsel %vm674, %v631, %v637
      %vm676 = vcmask 1041408
      %v677 = vsel %vm676, %v675, %v643
      %vm678 = vcmask 1042432
      %v679 = vsel %vm678, %v677, %v649
      %vm680 = vcmask 1043456
      %v681 = vsel %vm680, %v679, %v655
      %vm682 = vcmask 1044480
      %v683 = vsel %vm682, %v681, %v661
      %vm684 = vcmask 1045504
      %v685 = vsel %vm684, %v683, %v667
      %vm686 = vcmask 1046528
      %v687 = vsel %vm686, %v685, %v673
      %v688 = vpack.c.bf16 %v687, %v687
      %v689 = vld [vmem:[%s3] sm:$0xf]
      %v690 = vld [vmem:[%s3 + $0x4] sm:$0xf]
      %v691 = vld [vmem:[%s3 + $0x8] sm:$0xf]
      %v692 = vld [vmem:[%s3 + $0xc] sm:$0xf]
      %v693 = vld [vmem:[%s3 + $0x10] sm:$0xf]
      %v694 = vld [vmem:[%s3 + $0x14] sm:$0xf]
      %v695 = vld [vmem:[%s3 + $0x18] sm:$0xf]
      %v696 = vld [vmem:[%s3 + $0x1c] sm:$0xf]
      %v705 = vunpack.c.l.b16 %v689
      %v706 = vunpack.c.l.b16 %v690
      %v707 = vunpack.c.l.b16 %v691
      %v708 = vunpack.c.l.b16 %v692
      %v709 = vunpack.c.l.b16 %v693
      %v710 = vunpack.c.l.b16 %v694
      %v711 = vunpack.c.l.b16 %v695
      %v712 = vunpack.c.l.b16 %v696
      %v713 = vpack.c.b16 %v706, %v705
      %v714 = vpack.c.b16 %v708, %v707
      %v715 = vpack.c.b16 %v710, %v709
      %v716 = vpack.c.b16 %v712, %v711
      %vm721 = vcmask 523264
      %v723 = vsel %vm721, %v688, 0
      %725 = vmatpush.bf16.msra.mxu0 0
      %726 = vmatpush.bf16.msra.mxu0 0
      %727 = vmatpush.bf16.msra.mxu0 0
      %728 = vmatpush.bf16.msra.mxu0 0
      %729 = vmatpush.bf16.msra.mxu0 %v716
      %730 = vmatpush.bf16.msra.mxu0 %v715
      %731 = vmatpush.bf16.msra.mxu0 %v714
      %732 = vmatpush.bf16.msra.mxu0 %v713
      %733 = vmatmul.bf16.gmra.mxu0 %v723
      %v734 = vpop.f32.mrf.mxu0
      %v735 = vadd.f32 0.0, %v734
      %v736 = vpop.f32.mrf.mxu0
      %737 = vdwg.mxu0
      %v738 = vld [vmem:[%s614] sm:$0xff]
      %v739 = vld [vmem:[%s8] sm:$0x1]
      %v740 = vld [vmem:[%s9] sm:$0x1]
      %vm741 = vcmask 261120
      %v742 = vsel %vm741, %v738, 0.0
      %743 = vadd.xlane.f32.xlu0 %v742
      %v744 = vpop.xlane.xlu0 %743
      %v745 = vsel %vm741, %v735, 0.0
      %746 = vadd.xlane.f32.xlu0 %v745
      %v747 = vpop.xlane.xlu0 %746
      %v748 = vrcp.pop 32.0
      %v749 = vmul.f32 32.0, %v748
      %v750 = vsub.f32 1.0, %v749
      %v751 = vmul.f32 %v748, %v750
      %v752 = vadd.f32 %v748, %v751
      %vm753 = vweird.f32 %v748
      %v754 = vsel %vm753, %v748, %v752
      %v755 = vmul.f32 %v744, %v754
      %v756 = vmul.f32 %v747, %v754
      %v757 = vsub.f32 %v738, %v755
      %v758 = vsub.f32 %v735, %v756
      %v759 = vmul.f32 %v757, %v757
      %v760 = vmul.f32 %v758, %v758
      %v761 = vsel %vm741, %v759, 0.0
      %762 = vadd.xlane.f32.xlu0 %v761
      %v763 = vpop.xlane.xlu0 %762
      %v764 = vsel %vm741, %v760, 0.0
      %765 = vadd.xlane.f32.xlu0 %v764
      %v766 = vpop.xlane.xlu0 %765
      %v767 = vmul.f32 %v763, %v754
      %v768 = vmul.f32 %v766, %v754
      %v769 = vadd.f32 %v767, 1e-05
      %v770 = vadd.f32 %v768, 1e-05
      %v771 = vrsqrt.pop %v769
      %v772 = vmul.f32 %v771, %v769
      %v773 = vmul.f32 %v772, %v771
      %v774 = vmul.f32 0.5, %v773
      %v775 = vsub.f32 1.5, %v774
      %v776 = vmul.f32 %v771, %v775
      %vm777 = vweird.f32 %v769
      %vm778 = vweird.f32 %v771
      %vm779 = vmor %vm777, %vm778
      %v780 = vsel %vm779, %v771, %v776
      %v781 = vrsqrt.pop %v770
      %v782 = vmul.f32 %v781, %v770
      %v783 = vmul.f32 %v782, %v781
      %v784 = vmul.f32 0.5, %v783
      %v785 = vsub.f32 1.5, %v784
      %v786 = vmul.f32 %v781, %v785
      %vm787 = vweird.f32 %v770
      %vm788 = vweird.f32 %v781
      %vm789 = vmor %vm787, %vm788
      %v790 = vsel %vm789, %v781, %v786
      %v791 = vmul.f32 %v757, %v780
      %v792 = vmul.f32 %v758, %v790
      %v794 = vperm.slane %v739, 0
      %v796 = vmul.f32 %v791, %v794
      %v797 = vmul.f32 %v792, %v794
      %v799 = vperm.slane %v740, 0
      %v801 = vadd.f32 %v796, %v799
      %v802 = vadd.f32 %v797, %v799
      %v803 = vpack.c.bf16 %v802, %v801
      %v804 = vld [vmem:[%s4] sm:$0xf]
      %v805 = vld [vmem:[%s4 + $0x4] sm:$0xf]
      %v806 = vld [vmem:[%s4 + $0x8] sm:$0xf]
      %v807 = vld [vmem:[%s4 + $0xc] sm:$0xf]
      %v808 = vld [vmem:[%s5] sm:$0x1]
      %v810 = vperm.slane %v808, 0
      %v816 = vunpack.c.l.b16 %v804
      %v817 = vunpack.c.l.b16 %v805
      %v818 = vunpack.c.l.b16 %v806
      %v819 = vunpack.c.l.b16 %v807
      %v820 = vpack.c.b16 %v817, %v816
      %v821 = vpack.c.b16 %v819, %v818
      %v825 = vsel %vm741, %v803, 0
      %827 = vmatpush.bf16.msra.mxu0 0
      %828 = vmatpush.bf16.msra.mxu0 0
      %829 = vmatpush.bf16.msra.mxu0 0
      %830 = vmatpush.bf16.msra.mxu0 0
      %831 = vmatpush.bf16.msra.mxu0 0
      %832 = vmatpush.bf16.msra.mxu0 0
      %833 = vmatpush.bf16.msra.mxu0 %v821
      %834 = vmatpush.bf16.msra.mxu0 %v820
      %835 = vmatmul.bf16.gmra.mxu0 %v825
      %v836 = vpop.f32.mrf.mxu0
      %v837 = vadd.f32 %v810, %v836
      %v838 = vpop.f32.mrf.mxu0
      %v839 = vadd.f32 %v810, %v838
      %840 = vdwg.mxu0
      %v841 = vlaneseq
      %v842 = vshrl.u32 %v841, 7
      %v843 = vadd.s32 %v842, 8
      %vm844 = vcmp.le.s32.totalorder %v625, %v842
      %vm845 = vcmp.le.s32.totalorder %v625, %v843
      %v846 = vsel %vm844, 0.0, -1e+09
      %v847 = vsel %vm845, 0.0, -1e+09
      %v848 = vld [vmem:[%s617] sm:$0x1]
      %v850 = vperm.slane %v848, 0
      %v852 = vadd.f32 %v846, %v850
      %v853 = vadd.f32 %v847, %v850
      %v854 = vpack.c.bf16 %v839, %v837
      %857 = vrot.lane.b32.xlu0 %v837, 96
      %v858 = vpop.permute.xlu0 %857
      %859 = vrot.lane.b32.xlu0 %v839, 96
      %v860 = vpop.permute.xlu0 %859
      %863 = vxpose.xlu0.b32.start [1/16] %v858, 128
      %864 = vxpose.xlu0.b32.cont [2/16] %v860, 128
      %865 = vxpose.xlu0.b32.cont [3/16] 0.0, 128
      %866 = vxpose.xlu0.b32.cont [4/16] 0.0, 128
      %867 = vxpose.xlu0.b32.cont [5/16] 0.0, 128
      %868 = vxpose.xlu0.b32.cont [6/16] 0.0, 128
      %869 = vxpose.xlu0.b32.cont [7/16] 0.0, 128
      %870 = vxpose.xlu0.b32.cont [8/16] 0.0, 128
      %871 = vxpose.xlu0.b32.cont [9/16] 0.0, 128
      %872 = vxpose.xlu0.b32.cont [10/16] 0.0, 128
      %873 = vxpose.xlu0.b32.cont [11/16] 0.0, 128
      %874 = vxpose.xlu0.b32.cont [12/16] 0.0, 128
      %875 = vxpose.xlu0.b32.cont [13/16] 0.0, 128
      %876 = vxpose.xlu0.b32.cont [14/16] 0.0, 128
      %877 = vxpose.xlu0.b32.cont [15/16] 0.0, 128
      %878 = vxpose.xlu0.b32.end [16/16] 0.0, 128
      %v879 = vpop.trf.xlu0
      %v880 = vpop.trf.xlu0
      %v881 = vpop.trf.xlu0
      %v882 = vpop.trf.xlu0
      %v883 = vpop.trf.xlu0
      %v884 = vpop.trf.xlu0
      %v885 = vpop.trf.xlu0
      %v886 = vpop.trf.xlu0
      %v887 = vpop.trf.xlu0
      %v888 = vpop.trf.xlu0
      %v889 = vpop.trf.xlu0
      %v890 = vpop.trf.xlu0
      %v891 = vpop.trf.xlu0
      %v892 = vpop.trf.xlu0
      %v893 = vpop.trf.xlu0
      %v894 = vpop.trf.xlu0
      %v895 = vpack.c.bf16 %v879, %v879
      %vm896 = vcmask 64512
      %v898 = vsel %vm896, %v854, 0
      %v901 = vsel %vm680, %v895, 0
      %903 = vmatpush.bf16.msra.mxu0 0
      %904 = vmatpush.bf16.msra.mxu0 0
      %905 = vmatpush.bf16.msra.mxu0 0
      %906 = vmatpush.bf16.msra.mxu0 0
      %907 = vmatpush.bf16.msra.mxu0 0
      %908 = vmatpush.bf16.msra.mxu0 0
      %909 = vmatpush.bf16.msra.mxu0 0
      %910 = vmatpush.bf16.msra.mxu0 %v901
      %911 = vmatmul.bf16.gmra.mxu0 %v898
      %v912 = vpop.f32.mrf.mxu0
      %v913 = vadd.f32 0.0, %v912
      %v914 = vpop.f32.mrf.mxu0
      %v915 = vadd.f32 0.0, %v914
      %916 = vdwg.mxu0
      %v917 = vmul.f32 %v913, 0.35355338
      %v918 = vmul.f32 %v915, 0.35355338
      %v919 = vadd.f32 %v917, %v852
      %v920 = vadd.f32 %v918, %v853
      %vm921 = vcmask 130048
      %v922 = vsel %vm921, %v919, -inf
      %923 = vmax.xlane.f32.xlu0 %v922
      %v924 = vpop.xlane.xlu0 %923
      %v925 = vsel %vm921, %v920, -inf
      %926 = vmax.xlane.f32.xlu0 %v925
      %v927 = vpop.xlane.xlu0 %926
      %v928 = vsub.f32 %v919, %v924
      %v929 = vsub.f32 %v920, %v927
      %v930 = vmul.f32 %v928, 1.442695
      %v931 = vpow.pop %v930
      %v932 = vmul.f32 %v929, 1.442695
      %v933 = vpow.pop %v932
      %v934 = vsel %vm921, %v931, 0.0
      %935 = vadd.xlane.f32.xlu0 %v934
      %v936 = vpop.xlane.xlu0 %935
      %v937 = vsel %vm921, %v933, 0.0
      %938 = vadd.xlane.f32.xlu0 %v937
      %v939 = vpop.xlane.xlu0 %938
      %v940 = vrcp.pop %v936
      %v941 = vrcp.pop %v939
      %v942 = vmul.f32 %v931, %v940
      %v943 = vmul.f32 %v933, %v941
      %v944 = vpack.c.bf16 %v943, %v942
      %946 = vrot.lane.b32.xlu0 %v854, 64
      %v947 = vpop.permute.xlu0 %946
      %v950 = vsel %vm921, %v944, 0
      %952 = vmatpush.bf16.msra.mxu0 0
      %953 = vmatpush.bf16.msra.mxu0 0
      %954 = vmatpush.bf16.msra.mxu0 0
      %955 = vmatpush.bf16.msra.mxu0 0
      %956 = vmatpush.bf16.msra.mxu0 0
      %957 = vmatpush.bf16.msra.mxu0 0
      %958 = vmatpush.bf16.msra.mxu0 0
      %959 = vmatpush.bf16.msra.mxu0 %v947
      %960 = vmatmul.bf16.gmra.mxu0 %v950
      %v961 = vpop.f32.mrf.mxu0
      %v962 = vadd.f32 0.0, %v961
      %v963 = vpop.f32.mrf.mxu0
      %v964 = vadd.f32 0.0, %v963
      %965 = vdwg.mxu0
      %966 = vrot.lane.b32.xlu0 %v837, 88
      %v967 = vpop.permute.xlu0 %966
      %968 = vrot.lane.b32.xlu0 %v839, 88
      %v969 = vpop.permute.xlu0 %968
      %972 = vxpose.xlu0.b32.start [1/16] %v967, 128
      %973 = vxpose.xlu0.b32.cont [2/16] %v969, 128
      %974 = vxpose.xlu0.b32.cont [3/16] 0.0, 128
      %975 = vxpose.xlu0.b32.cont [4/16] 0.0, 128
      %976 = vxpose.xlu0.b32.cont [5/16] 0.0, 128
      %977 = vxpose.xlu0.b32.cont [6/16] 0.0, 128
      %978 = vxpose.xlu0.b32.cont [7/16] 0.0, 128
      %979 = vxpose.xlu0.b32.cont [8/16] 0.0, 128
      %980 = vxpose.xlu0.b32.cont [9/16] 0.0, 128
      %981 = vxpose.xlu0.b32.cont [10/16] 0.0, 128
      %982 = vxpose.xlu0.b32.cont [11/16] 0.0, 128
      %983 = vxpose.xlu0.b32.cont [12/16] 0.0, 128
      %984 = vxpose.xlu0.b32.cont [13/16] 0.0, 128
      %985 = vxpose.xlu0.b32.cont [14/16] 0.0, 128
      %986 = vxpose.xlu0.b32.cont [15/16] 0.0, 128
      %987 = vxpose.xlu0.b32.end [16/16] 0.0, 128
      %v988 = vpop.trf.xlu0
      %v989 = vpop.trf.xlu0
      %v990 = vpop.trf.xlu0
      %v991 = vpop.trf.xlu0
      %v992 = vpop.trf.xlu0
      %v993 = vpop.trf.xlu0
      %v994 = vpop.trf.xlu0
      %v995 = vpop.trf.xlu0
      %v996 = vpop.trf.xlu0
      %v997 = vpop.trf.xlu0
      %v998 = vpop.trf.xlu0
      %v999 = vpop.trf.xlu0
      %v1000 = vpop.trf.xlu0
      %v1001 = vpop.trf.xlu0
      %v1002 = vpop.trf.xlu0
      %v1003 = vpop.trf.xlu0
      %v1004 = vpack.c.bf16 %v988, %v988
      %1005 = vrot.lane.b32.xlu0 %v854, 120
      %v1006 = vpop.permute.xlu0 %1005
      %v1008 = vsel %vm896, %v1006, 0
      %v1011 = vsel %vm680, %v1004, 0
      %1013 = vmatpush.bf16.msra.mxu0 0
      %1014 = vmatpush.bf16.msra.mxu0 0
      %1015 = vmatpush.bf16.msra.mxu0 0
      %1016 = vmatpush.bf16.msra.mxu0 0
      %1017 = vmatpush.bf16.msra.mxu0 0
      %1018 = vmatpush.bf16.msra.mxu0 0
      %1019 = vmatpush.bf16.msra.mxu0 0
      %1020 = vmatpush.bf16.msra.mxu0 %v1011
      %1021 = vmatmul.bf16.gmra.mxu0 %v1008
      %v1022 = vpop.f32.mrf.mxu0
      %v1023 = vadd.f32 0.0, %v1022
      %v1024 = vpop.f32.mrf.mxu0
      %v1025 = vadd.f32 0.0, %v1024
      %1026 = vdwg.mxu0
      %v1027 = vmul.f32 %v1023, 0.35355338
      %v1028 = vmul.f32 %v1025, 0.35355338
      %v1029 = vadd.f32 %v1027, %v852
      %v1030 = vadd.f32 %v1028, %v853
      %v1031 = vsel %vm921, %v1029, -inf
      %1032 = vmax.xlane.f32.xlu0 %v1031
      %v1033 = vpop.xlane.xlu0 %1032
      %v1034 = vsel %vm921, %v1030, -inf
      %1035 = vmax.xlane.f32.xlu0 %v1034
      %v1036 = vpop.xlane.xlu0 %1035
      %v1037 = vsub.f32 %v1029, %v1033
      %v1038 = vsub.f32 %v1030, %v1036
      %v1039 = vmul.f32 %v1037, 1.442695
      %v1040 = vpow.pop %v1039
      %v1041 = vmul.f32 %v1038, 1.442695
      %v1042 = vpow.pop %v1041
      %v1043 = vsel %vm921, %v1040, 0.0
      %1044 = vadd.xlane.f32.xlu0 %v1043
      %v1045 = vpop.xlane.xlu0 %1044
      %v1046 = vsel %vm921, %v1042, 0.0
      %1047 = vadd.xlane.f32.xlu0 %v1046
      %v1048 = vpop.xlane.xlu0 %1047
      %v1049 = vrcp.pop %v1045
      %v1050 = vrcp.pop %v1048
      %v1051 = vmul.f32 %v1040, %v1049
      %v1052 = vmul.f32 %v1042, %v1050
      %v1053 = vpack.c.bf16 %v1052, %v1051
      %1054 = vrot.lane.b32.xlu0 %v854, 56
      %v1055 = vpop.permute.xlu0 %1054
      %v1058 = vsel %vm921, %v1053, 0
      %1060 = vmatpush.bf16.msra.mxu0 0
      %1061 = vmatpush.bf16.msra.mxu0 0
      %1062 = vmatpush.bf16.msra.mxu0 0
      %1063 = vmatpush.bf16.msra.mxu0 0
      %1064 = vmatpush.bf16.msra.mxu0 0
      %1065 = vmatpush.bf16.msra.mxu0 0
      %1066 = vmatpush.bf16.msra.mxu0 0
      %1067 = vmatpush.bf16.msra.mxu0 %v1055
      %1068 = vmatmul.bf16.gmra.mxu0 %v1058
      %v1069 = vpop.f32.mrf.mxu0
      %v1070 = vadd.f32 0.0, %v1069
      %v1071 = vpop.f32.mrf.mxu0
      %v1072 = vadd.f32 0.0, %v1071
      %1073 = vdwg.mxu0
      %1074 = vrot.lane.b32.xlu0 %v837, 80
      %v1075 = vpop.permute.xlu0 %1074
      %1076 = vrot.lane.b32.xlu0 %v839, 80
      %v1077 = vpop.permute.xlu0 %1076
      %1080 = vxpose.xlu0.b32.start [1/16] %v1075, 128
      %1081 = vxpose.xlu0.b32.cont [2/16] %v1077, 128
      %1082 = vxpose.xlu0.b32.cont [3/16] 0.0, 128
      %1083 = vxpose.xlu0.b32.cont [4/16] 0.0, 128
      %1084 = vxpose.xlu0.b32.cont [5/16] 0.0, 128
      %1085 = vxpose.xlu0.b32.cont [6/16] 0.0, 128
      %1086 = vxpose.xlu0.b32.cont [7/16] 0.0, 128
      %1087 = vxpose.xlu0.b32.cont [8/16] 0.0, 128
      %1088 = vxpose.xlu0.b32.cont [9/16] 0.0, 128
      %1089 = vxpose.xlu0.b32.cont [10/16] 0.0, 128
      %1090 = vxpose.xlu0.b32.cont [11/16] 0.0, 128
      %1091 = vxpose.xlu0.b32.cont [12/16] 0.0, 128
      %1092 = vxpose.xlu0.b32.cont [13/16] 0.0, 128
      %1093 = vxpose.xlu0.b32.cont [14/16] 0.0, 128
      %1094 = vxpose.xlu0.b32.cont [15/16] 0.0, 128
      %1095 = vxpose.xlu0.b32.end [16/16] 0.0, 128
      %v1096 = vpop.trf.xlu0
      %v1097 = vpop.trf.xlu0
      %v1098 = vpop.trf.xlu0
      %v1099 = vpop.trf.xlu0
      %v1100 = vpop.trf.xlu0
      %v1101 = vpop.trf.xlu0
      %v1102 = vpop.trf.xlu0
      %v1103 = vpop.trf.xlu0
      %v1104 = vpop.trf.xlu0
      %v1105 = vpop.trf.xlu0
      %v1106 = vpop.trf.xlu0
      %v1107 = vpop.trf.xlu0
      %v1108 = vpop.trf.xlu0
      %v1109 = vpop.trf.xlu0
      %v1110 = vpop.trf.xlu0
      %v1111 = vpop.trf.xlu0
      %v1112 = vpack.c.bf16 %v1096, %v1096
      %1113 = vrot.lane.b32.xlu0 %v854, 112
      %v1114 = vpop.permute.xlu0 %1113
      %v1116 = vsel %vm896, %v1114, 0
      %v1119 = vsel %vm680, %v1112, 0
      %1121 = vmatpush.bf16.msra.mxu0 0
      %1122 = vmatpush.bf16.msra.mxu0 0
      %1123 = vmatpush.bf16.msra.mxu0 0
      %1124 = vmatpush.bf16.msra.mxu0 0
      %1125 = vmatpush.bf16.msra.mxu0 0
      %1126 = vmatpush.bf16.msra.mxu0 0
      %1127 = vmatpush.bf16.msra.mxu0 0
      %1128 = vmatpush.bf16.msra.mxu0 %v1119
      %1129 = vmatmul.bf16.gmra.mxu0 %v1116
      %v1130 = vpop.f32.mrf.mxu0
      %v1131 = vadd.f32 0.0, %v1130
      %v1132 = vpop.f32.mrf.mxu0
      %v1133 = vadd.f32 0.0, %v1132
      %1134 = vdwg.mxu0
      %v1135 = vmul.f32 %v1131, 0.35355338
      %v1136 = vmul.f32 %v1133, 0.35355338
      %v1137 = vadd.f32 %v1135, %v852
      %v1138 = vadd.f32 %v1136, %v853
      %v1139 = vsel %vm921, %v1137, -inf
      %1140 = vmax.xlane.f32.xlu0 %v1139
      %v1141 = vpop.xlane.xlu0 %1140
      %v1142 = vsel %vm921, %v1138, -inf
      %1143 = vmax.xlane.f32.xlu0 %v1142
      %v1144 = vpop.xlane.xlu0 %1143
      %v1145 = vsub.f32 %v1137, %v1141
      %v1146 = vsub.f32 %v1138, %v1144
      %v1147 = vmul.f32 %v1145, 1.442695
      %v1148 = vpow.pop %v1147
      %v1149 = vmul.f32 %v1146, 1.442695
      %v1150 = vpow.pop %v1149
      %v1151 = vsel %vm921, %v1148, 0.0
      %1152 = vadd.xlane.f32.xlu0 %v1151
      %v1153 = vpop.xlane.xlu0 %1152
      %v1154 = vsel %vm921, %v1150, 0.0
      %1155 = vadd.xlane.f32.xlu0 %v1154
      %v1156 = vpop.xlane.xlu0 %1155
      %v1157 = vrcp.pop %v1153
      %v1158 = vrcp.pop %v1156
      %v1159 = vmul.f32 %v1148, %v1157
      %v1160 = vmul.f32 %v1150, %v1158
      %v1161 = vpack.c.bf16 %v1160, %v1159
      %1162 = vrot.lane.b32.xlu0 %v854, 48
      %v1163 = vpop.permute.xlu0 %1162
      %v1166 = vsel %vm921, %v1161, 0
      %1168 = vmatpush.bf16.msra.mxu0 0
      %1169 = vmatpush.bf16.msra.mxu0 0
      %1170 = vmatpush.bf16.msra.mxu0 0
      %1171 = vmatpush.bf16.msra.mxu0 0
      %1172 = vmatpush.bf16.msra.mxu0 0
      %1173 = vmatpush.bf16.msra.mxu0 0
      %1174 = vmatpush.bf16.msra.mxu0 0
      %1175 = vmatpush.bf16.msra.mxu0 %v1163
      %1176 = vmatmul.bf16.gmra.mxu0 %v1166
      %v1177 = vpop.f32.mrf.mxu0
      %v1178 = vadd.f32 0.0, %v1177
      %v1179 = vpop.f32.mrf.mxu0
      %v1180 = vadd.f32 0.0, %v1179
      %1181 = vdwg.mxu0
      %1182 = vrot.lane.b32.xlu0 %v837, 72
      %v1183 = vpop.permute.xlu0 %1182
      %1184 = vrot.lane.b32.xlu0 %v839, 72
      %v1185 = vpop.permute.xlu0 %1184
      %1188 = vxpose.xlu0.b32.start [1/16] %v1183, 128
      %1189 = vxpose.xlu0.b32.cont [2/16] %v1185, 128
      %1190 = vxpose.xlu0.b32.cont [3/16] 0.0, 128
      %1191 = vxpose.xlu0.b32.cont [4/16] 0.0, 128
      %1192 = vxpose.xlu0.b32.cont [5/16] 0.0, 128
      %1193 = vxpose.xlu0.b32.cont [6/16] 0.0, 128
      %1194 = vxpose.xlu0.b32.cont [7/16] 0.0, 128
      %1195 = vxpose.xlu0.b32.cont [8/16] 0.0, 128
      %1196 = vxpose.xlu0.b32.cont [9/16] 0.0, 128
      %1197 = vxpose.xlu0.b32.cont [10/16] 0.0, 128
      %1198 = vxpose.xlu0.b32.cont [11/16] 0.0, 128
      %1199 = vxpose.xlu0.b32.cont [12/16] 0.0, 128
      %1200 = vxpose.xlu0.b32.cont [13/16] 0.0, 128
      %1201 = vxpose.xlu0.b32.cont [14/16] 0.0, 128
      %1202 = vxpose.xlu0.b32.cont [15/16] 0.0, 128
      %1203 = vxpose.xlu0.b32.end [16/16] 0.0, 128
      %v1204 = vpop.trf.xlu0
      %v1205 = vpop.trf.xlu0
      %v1206 = vpop.trf.xlu0
      %v1207 = vpop.trf.xlu0
      %v1208 = vpop.trf.xlu0
      %v1209 = vpop.trf.xlu0
      %v1210 = vpop.trf.xlu0
      %v1211 = vpop.trf.xlu0
      %v1212 = vpop.trf.xlu0
      %v1213 = vpop.trf.xlu0
      %v1214 = vpop.trf.xlu0
      %v1215 = vpop.trf.xlu0
      %v1216 = vpop.trf.xlu0
      %v1217 = vpop.trf.xlu0
      %v1218 = vpop.trf.xlu0
      %v1219 = vpop.trf.xlu0
      %v1220 = vpack.c.bf16 %v1204, %v1204
      %1221 = vrot.lane.b32.xlu0 %v854, 104
      %v1222 = vpop.permute.xlu0 %1221
      %v1224 = vsel %vm896, %v1222, 0
      %v1227 = vsel %vm680, %v1220, 0
      %1229 = vmatpush.bf16.msra.mxu0 0
      %1230 = vmatpush.bf16.msra.mxu0 0
      %1231 = vmatpush.bf16.msra.mxu0 0
      %1232 = vmatpush.bf16.msra.mxu0 0
      %1233 = vmatpush.bf16.msra.mxu0 0
      %1234 = vmatpush.bf16.msra.mxu0 0
      %1235 = vmatpush.bf16.msra.mxu0 0
      %1236 = vmatpush.bf16.msra.mxu0 %v1227
      %1237 = vmatmul.bf16.gmra.mxu0 %v1224
      %v1238 = vpop.f32.mrf.mxu0
      %v1239 = vadd.f32 0.0, %v1238
      %v1240 = vpop.f32.mrf.mxu0
      %v1241 = vadd.f32 0.0, %v1240
      %1242 = vdwg.mxu0
      %v1243 = vmul.f32 %v1239, 0.35355338
      %v1244 = vmul.f32 %v1241, 0.35355338
      %v1245 = vadd.f32 %v1243, %v852
      %v1246 = vadd.f32 %v1244, %v853
      %v1247 = vsel %vm921, %v1245, -inf
      %1248 = vmax.xlane.f32.xlu0 %v1247
      %v1249 = vpop.xlane.xlu0 %1248
      %v1250 = vsel %vm921, %v1246, -inf
      %1251 = vmax.xlane.f32.xlu0 %v1250
      %v1252 = vpop.xlane.xlu0 %1251
      %v1253 = vsub.f32 %v1245, %v1249
      %v1254 = vsub.f32 %v1246, %v1252
      %v1255 = vmul.f32 %v1253, 1.442695
      %v1256 = vpow.pop %v1255
      %v1257 = vmul.f32 %v1254, 1.442695
      %v1258 = vpow.pop %v1257
      %v1259 = vsel %vm921, %v1256, 0.0
      %1260 = vadd.xlane.f32.xlu0 %v1259
      %v1261 = vpop.xlane.xlu0 %1260
      %v1262 = vsel %vm921, %v1258, 0.0
      %1263 = vadd.xlane.f32.xlu0 %v1262
      %v1264 = vpop.xlane.xlu0 %1263
      %v1265 = vrcp.pop %v1261
      %v1266 = vrcp.pop %v1264
      %v1267 = vmul.f32 %v1256, %v1265
      %v1268 = vmul.f32 %v1258, %v1266
      %v1269 = vpack.c.bf16 %v1268, %v1267
      %1270 = vrot.lane.b32.xlu0 %v854, 40
      %v1271 = vpop.permute.xlu0 %1270
      %v1274 = vsel %vm921, %v1269, 0
      %1276 = vmatpush.bf16.msra.mxu0 0
      %1277 = vmatpush.bf16.msra.mxu0 0
      %1278 = vmatpush.bf16.msra.mxu0 0
      %1279 = vmatpush.bf16.msra.mxu0 0
      %1280 = vmatpush.bf16.msra.mxu0 0
      %1281 = vmatpush.bf16.msra.mxu0 0
      %1282 = vmatpush.bf16.msra.mxu0 0
      %1283 = vmatpush.bf16.msra.mxu0 %v1271
      %1284 = vmatmul.bf16.gmra.mxu0 %v1274
      %v1285 = vpop.f32.mrf.mxu0
      %v1286 = vadd.f32 0.0, %v1285
      %v1287 = vpop.f32.mrf.mxu0
      %v1288 = vadd.f32 0.0, %v1287
      %1289 = vdwg.mxu0
      %1292 = vrot.lane.b32.xlu0 %v1070, 8
      %v1293 = vpop.permute.xlu0 %1292
      %1294 = vrot.lane.b32.xlu0 %v1072, 8
      %v1295 = vpop.permute.xlu0 %1294
      %1300 = vrot.lane.b32.xlu0 %v1178, 16
      %v1301 = vpop.permute.xlu0 %1300
      %1302 = vrot.lane.b32.xlu0 %v1180, 16
      %v1303 = vpop.permute.xlu0 %1302
      %1308 = vrot.lane.b32.xlu0 %v1286, 24
      %v1309 = vpop.permute.xlu0 %1308
      %1310 = vrot.lane.b32.xlu0 %v1288, 24
      %v1311 = vpop.permute.xlu0 %1310
      %v1314 = vsel %vm896, %v962, %v1293
      %v1315 = vsel %vm896, %v964, %v1295
      %v1316 = vsel %vm921, %v1314, %v1301
      %v1317 = vsel %vm921, %v1315, %v1303
      %vm1318 = vcmask 195584
      %v1319 = vsel %vm1318, %v1316, %v1309
      %v1320 = vsel %vm1318, %v1317, %v1311
      %v1321 = vpack.c.bf16 %v1320, %v1319
      %v1322 = vld [vmem:[%s6] sm:$0xf]
      %v1323 = vld [vmem:[%s6 + $0x4] sm:$0xf]
      %v1324 = vld [vmem:[%s6 + $0x8] sm:$0xf]
      %v1325 = vld [vmem:[%s6 + $0xc] sm:$0xf]
      %v1326 = vld [vmem:[%s7] sm:$0x1]
      %v1328 = vperm.slane %v1326, 0
      %v1334 = vunpack.c.l.b16 %v1322
      %v1335 = vunpack.c.l.b16 %v1323
      %v1336 = vunpack.c.l.b16 %v1324
      %v1337 = vunpack.c.l.b16 %v1325
      %v1338 = vpack.c.b16 %v1335, %v1334
      %v1339 = vpack.c.b16 %v1337, %v1336
      %v1343 = vsel %vm741, %v1321, 0
      %1345 = vmatpush.bf16.msra.mxu0 0
      %1346 = vmatpush.bf16.msra.mxu0 0
      %1347 = vmatpush.bf16.msra.mxu0 0
      %1348 = vmatpush.bf16.msra.mxu0 0
      %1349 = vmatpush.bf16.msra.mxu0 0
      %1350 = vmatpush.bf16.msra.mxu0 0
      %1351 = vmatpush.bf16.msra.mxu0 %v1339
      %1352 = vmatpush.bf16.msra.mxu0 %v1338
      %1353 = vmatmul.bf16.gmra.mxu0 %v1343
      %v1354 = vpop.f32.mrf.mxu0
      %v1355 = vadd.f32 %v1328, %v1354
      %v1356 = vpop.f32.mrf.mxu0
      %v1357 = vadd.f32 %v1328, %v1356
      %1358 = vdwg.mxu0
      %v1359 = vadd.f32 %v738, %v1355
      %v1360 = vadd.f32 %v735, %v1357
      %v1361 = vld [vmem:[%s10] sm:$0x1]
      %v1362 = vld [vmem:[%s11] sm:$0x1]
      %v1363 = vsel %vm741, %v1359, 0.0
      %1364 = vadd.xlane.f32.xlu0 %v1363
      %v1365 = vpop.xlane.xlu0 %1364
      %v1366 = vsel %vm741, %v1360, 0.0
      %1367 = vadd.xlane.f32.xlu0 %v1366
      %v1368 = vpop.xlane.xlu0 %1367
      %v1369 = vmul.f32 %v1365, %v754
      %v1370 = vmul.f32 %v1368, %v754
      %v1371 = vsub.f32 %v1359, %v1369
      %v1372 = vsub.f32 %v1360, %v1370
      %v1373 = vmul.f32 %v1371, %v1371
      %v1374 = vmul.f32 %v1372, %v1372
      %v1375 = vsel %vm741, %v1373, 0.0
      %1376 = vadd.xlane.f32.xlu0 %v1375
      %v1377 = vpop.xlane.xlu0 %1376
      %v1378 = vsel %vm741, %v1374, 0.0
      %1379 = vadd.xlane.f32.xlu0 %v1378
      %v1380 = vpop.xlane.xlu0 %1379
      %v1381 = vmul.f32 %v1377, %v754
      %v1382 = vmul.f32 %v1380, %v754
      %v1383 = vadd.f32 %v1381, 1e-05
      %v1384 = vadd.f32 %v1382, 1e-05
      %v1385 = vrsqrt.pop %v1383
      %v1386 = vmul.f32 %v1385, %v1383
      %v1387 = vmul.f32 %v1386, %v1385
      %v1388 = vmul.f32 0.5, %v1387
      %v1389 = vsub.f32 1.5, %v1388
      %v1390 = vmul.f32 %v1385, %v1389
      %vm1391 = vweird.f32 %v1383
      %vm1392 = vweird.f32 %v1385
      %vm1393 = vmor %vm1391, %vm1392
      %v1394 = vsel %vm1393, %v1385, %v1390
      %v1395 = vrsqrt.pop %v1384
      %v1396 = vmul.f32 %v1395, %v1384
      %v1397 = vmul.f32 %v1396, %v1395
      %v1398 = vmul.f32 0.5, %v1397
      %v1399 = vsub.f32 1.5, %v1398
      %v1400 = vmul.f32 %v1395, %v1399
      %vm1401 = vweird.f32 %v1384
      %vm1402 = vweird.f32 %v1395
      %vm1403 = vmor %vm1401, %vm1402
      %v1404 = vsel %vm1403, %v1395, %v1400
      %v1405 = vmul.f32 %v1371, %v1394
      %v1406 = vmul.f32 %v1372, %v1404
      %v1408 = vperm.slane %v1361, 0
      %v1410 = vmul.f32 %v1405, %v1408
      %v1411 = vmul.f32 %v1406, %v1408
      %v1413 = vperm.slane %v1362, 0
      %v1415 = vadd.f32 %v1410, %v1413
      %v1416 = vadd.f32 %v1411, %v1413
      %v1417 = vpack.c.bf16 %v1416, %v1415
      %v1418 = vld [vmem:[%s12] sm:$0xf]
      %v1419 = vld [vmem:[%s12 + $0x4] sm:$0xf]
      %v1420 = vld [vmem:[%s12 + $0x8] sm:$0xf]
      %v1421 = vld [vmem:[%s12 + $0xc] sm:$0xf]
      %v1422 = vld [vmem:[%s13] sm:$0x1]
      %v1424 = vperm.slane %v1422, 0
      %v1430 = vunpack.c.l.b16 %v1418
      %v1431 = vunpack.c.l.b16 %v1419
      %v1432 = vunpack.c.l.b16 %v1420
      %v1433 = vunpack.c.l.b16 %v1421
      %v1434 = vpack.c.b16 %v1431, %v1430
      %v1435 = vpack.c.b16 %v1433, %v1432
      %v1439 = vsel %vm741, %v1417, 0
      %1441 = vmatpush.bf16.msra.mxu0 0
      %1442 = vmatpush.bf16.msra.mxu0 0
      %1443 = vmatpush.bf16.msra.mxu0 0
      %1444 = vmatpush.bf16.msra.mxu0 0
      %1445 = vmatpush.bf16.msra.mxu0 0
      %1446 = vmatpush.bf16.msra.mxu0 0
      %1447 = vmatpush.bf16.msra.mxu0 %v1435
      %1448 = vmatpush.bf16.msra.mxu0 %v1434
      %1449 = vmatmul.bf16.gmra.mxu0 %v1439
      %v1450 = vpop.f32.mrf.mxu0
      %v1451 = vadd.f32 %v1424, %v1450
      %v1452 = vpop.f32.mrf.mxu0
      %v1453 = vadd.f32 %v1424, %v1452
      %1454 = vdwg.mxu0
      %v1455 = vmul.f32 %v1451, %v1451
      %v1456 = vmul.f32 %v1453, %v1453
      %v1457 = vmul.f32 %v1451, %v1455
      %v1458 = vmul.f32 %v1453, %v1456
      %v1459 = vmul.f32 %v1457, 0.044715
      %v1460 = vmul.f32 %v1458, 0.044715
      %v1461 = vadd.f32 %v1451, %v1459
      %v1462 = vadd.f32 %v1453, %v1460
      %v1463 = vmul.f32 %v1461, 0.7978846
      %v1464 = vmul.f32 %v1462, 0.7978846
      %v1465 = vtanh.pop %v1463
      %v1466 = vtanh.pop %v1464
      %v1467 = vadd.f32 %v1465, 1.0
      %v1468 = vadd.f32 %v1466, 1.0
      %v1469 = vmul.f32 %v1467, 0.5
      %v1470 = vmul.f32 %v1468, 0.5
      %v1471 = vmul.f32 %v1451, %v1469
      %v1472 = vmul.f32 %v1453, %v1470
      %v1473 = vpack.c.bf16 %v1472, %v1471
      %v1474 = vld [vmem:[%s14] sm:$0xf]
      %v1475 = vld [vmem:[%s14 + $0x4] sm:$0xf]
      %v1476 = vld [vmem:[%s14 + $0x8] sm:$0xf]
      %v1477 = vld [vmem:[%s14 + $0xc] sm:$0xf]
      %v1478 = vld [vmem:[%s14 + $0x10] sm:$0xf]
      %v1479 = vld [vmem:[%s14 + $0x14] sm:$0xf]
      %v1480 = vld [vmem:[%s14 + $0x18] sm:$0xf]
      %v1481 = vld [vmem:[%s14 + $0x1c] sm:$0xf]
      %v1482 = vld [vmem:[%s15] sm:$0x1]
      %v1484 = vperm.slane %v1482, 0
      %v1494 = vunpack.c.l.b16 %v1474
      %v1495 = vunpack.c.l.b16 %v1475
      %v1496 = vunpack.c.l.b16 %v1476
      %v1497 = vunpack.c.l.b16 %v1477
      %v1498 = vunpack.c.l.b16 %v1478
      %v1499 = vunpack.c.l.b16 %v1479
      %v1500 = vunpack.c.l.b16 %v1480
      %v1501 = vunpack.c.l.b16 %v1481
      %v1502 = vpack.c.b16 %v1495, %v1494
      %v1503 = vpack.c.b16 %v1497, %v1496
      %v1504 = vpack.c.b16 %v1499, %v1498
      %v1505 = vpack.c.b16 %v1501, %v1500
      %v1511 = vsel %vm721, %v1473, 0
      %1513 = vmatpush.bf16.msra.mxu0 0
      %1514 = vmatpush.bf16.msra.mxu0 0
      %1515 = vmatpush.bf16.msra.mxu0 0
      %1516 = vmatpush.bf16.msra.mxu0 0
      %1517 = vmatpush.bf16.msra.mxu0 %v1505
      %1518 = vmatpush.bf16.msra.mxu0 %v1504
      %1519 = vmatpush.bf16.msra.mxu0 %v1503
      %1520 = vmatpush.bf16.msra.mxu0 %v1502
      %1521 = vmatmul.bf16.gmra.mxu0 %v1511
      %v1522 = vpop.f32.mrf.mxu0
      %v1523 = vadd.f32 %v1484, %v1522
      %v1524 = vpop.f32.mrf.mxu0
      %v1525 = vadd.f32 %v1484, %v1524
      %1526 = vdwg.mxu0
      %v1527 = vadd.f32 %v1359, %v1523
      %v1528 = vadd.f32 %v1360, %v1525
      %v1529 = vld [vmem:[%s16] sm:$0x1]
      %v1530 = vld [vmem:[%s17] sm:$0x1]
      %v1531 = vsel %vm741, %v1527, 0.0
      %1532 = vadd.xlane.f32.xlu0 %v1531
      %v1533 = vpop.xlane.xlu0 %1532
      %v1534 = vsel %vm741, %v1528, 0.0
      %1535 = vadd.xlane.f32.xlu0 %v1534
      %v1536 = vpop.xlane.xlu0 %1535
      %v1537 = vmul.f32 %v1533, %v754
      %v1538 = vmul.f32 %v1536, %v754
      %v1539 = vsub.f32 %v1527, %v1537
      %v1540 = vsub.f32 %v1528, %v1538
      %v1541 = vmul.f32 %v1539, %v1539
      %v1542 = vmul.f32 %v1540, %v1540
      %v1543 = vsel %vm741, %v1541, 0.0
      %1544 = vadd.xlane.f32.xlu0 %v1543
      %v1545 = vpop.xlane.xlu0 %1544
      %v1546 = vsel %vm741, %v1542, 0.0
      %1547 = vadd.xlane.f32.xlu0 %v1546
      %v1548 = vpop.xlane.xlu0 %1547
      %v1549 = vmul.f32 %v1545, %v754
      %v1550 = vmul.f32 %v1548, %v754
      %v1551 = vadd.f32 %v1549, 1e-05
      %v1552 = vadd.f32 %v1550, 1e-05
      %v1553 = vrsqrt.pop %v1551
      %v1554 = vmul.f32 %v1553, %v1551
      %v1555 = vmul.f32 %v1554, %v1553
      %v1556 = vmul.f32 0.5, %v1555
      %v1557 = vsub.f32 1.5, %v1556
      %v1558 = vmul.f32 %v1553, %v1557
      %vm1559 = vweird.f32 %v1551
      %vm1560 = vweird.f32 %v1553
      %vm1561 = vmor %vm1559, %vm1560
      %v1562 = vsel %vm1561, %v1553, %v1558
      %v1563 = vrsqrt.pop %v1552
      %v1564 = vmul.f32 %v1563, %v1552
      %v1565 = vmul.f32 %v1564, %v1563
      %v1566 = vmul.f32 0.5, %v1565
      %v1567 = vsub.f32 1.5, %v1566
      %v1568 = vmul.f32 %v1563, %v1567
      %vm1569 = vweird.f32 %v1552
      %vm1570 = vweird.f32 %v1563
      %vm1571 = vmor %vm1569, %vm1570
      %v1572 = vsel %vm1571, %v1563, %v1568
      %v1573 = vmul.f32 %v1539, %v1562
      %v1574 = vmul.f32 %v1540, %v1572
      %v1576 = vperm.slane %v1529, 0
      %v1578 = vmul.f32 %v1573, %v1576
      %v1579 = vmul.f32 %v1574, %v1576
      %v1581 = vperm.slane %v1530, 0
      %v1583 = vadd.f32 %v1578, %v1581
      %v1584 = vadd.f32 %v1579, %v1581
      %v1585 = vpack.c.bf16 %v1584, %v1583
      %v1586 = vld [vmem:[%s18] sm:$0xf]
      %v1587 = vld [vmem:[%s18 + $0x4] sm:$0xf]
      %v1588 = vld [vmem:[%s18 + $0x8] sm:$0xf]
      %v1589 = vld [vmem:[%s18 + $0xc] sm:$0xf]
      %v1590 = vld [vmem:[%s19] sm:$0x1]
      %v1592 = vperm.slane %v1590, 0
      %v1598 = vunpack.c.l.b16 %v1586
      %v1599 = vunpack.c.l.b16 %v1587
      %v1600 = vunpack.c.l.b16 %v1588
      %v1601 = vunpack.c.l.b16 %v1589
      %v1602 = vpack.c.b16 %v1599, %v1598
      %v1603 = vpack.c.b16 %v1601, %v1600
      %v1607 = vsel %vm741, %v1585, 0
      %1609 = vmatpush.bf16.msra.mxu0 0
      %1610 = vmatpush.bf16.msra.mxu0 0
      %1611 = vmatpush.bf16.msra.mxu0 0
      %1612 = vmatpush.bf16.msra.mxu0 0
      %1613 = vmatpush.bf16.msra.mxu0 0
      %1614 = vmatpush.bf16.msra.mxu0 0
      %1615 = vmatpush.bf16.msra.mxu0 %v1603
      %1616 = vmatpush.bf16.msra.mxu0 %v1602
      %1617 = vmatmul.bf16.gmra.mxu0 %v1607
      %v1618 = vpop.f32.mrf.mxu0
      %v1619 = vadd.f32 %v1592, %v1618
      %v1620 = vpop.f32.mrf.mxu0
      %v1621 = vadd.f32 %v1592, %v1620
      %1622 = vdwg.mxu0
      %1623 = vst.msk [vmem:[%s622] sm:$0xff] %vm721, %v1619
      %1624 = vst.msk [vmem:[%s622 + $0x8] sm:$0xff] %vm721, %v1621
      %p1625 = scmp.lt.s32.totalorder %s39, 1
      %s1626 = scalar_select %p1625, %s39, 1
      %s1627 = smul.addr %s1626, 2
      %s1628 = smul.addr %s1627, 8
      %s1629 = scalar_lea.vmem %s20, %s1628
      // Predicated region
      $region97: #{blip3d_forward.4} parent=95 // pred_check
        %p1630 = pneg %p466
      $region98: #{blip3d_forward.4} parent=95 // pred_check_branch
        %1632 = sbr.rel (%p1630) target = $region100
      $region99: #{blip3d_forward.4} parent=95 // pred_region
        _
      $region100: #{blip3d_forward.4} parent=95 // pred_fallthru
        _
    $region96: #{blip3d_forward.4} parent=5 // pred_fallthru
      _
    %p1633 = scmp.le.s32.totalorder 2, %s34
    // Predicated region
    $region101: #{blip3d_forward.4} parent=5 // pred_check
      %p1634 = pneg %p1633
    $region102: #{blip3d_forward.4} parent=5 // pred_check_branch
      %1636 = sbr.rel (%p1634) target = $region104
    $region103: #{blip3d_forward.4} parent=5 // pred_region
      %s1637 = ssub.s32 %s34, 2
      // Predicated region
      $region105: #{blip3d_forward.4} parent=103 // pred_check
        %p1638 = pneg %p472
      $region106: #{blip3d_forward.4} parent=103 // pred_check_branch
        %1640 = sbr.rel (%p1638) target = $region108
      $region107: #{blip3d_forward.4} parent=103 // pred_region
        %p1641 = scmp.lt.s32.totalorder %s40, 1
        %s1642 = scalar_select %p1641, %s40, 1
        %s1643 = smul.addr %s1642, 2
        %s1644 = smul.addr %s1643, 8
        %s1645 = scalar_lea.vmem %s20, %s1644
      $region108: #{blip3d_forward.4} parent=103 // pred_fallthru
        _
    $region104: #{blip3d_forward.4} parent=5 // pred_fallthru
      _
  $region6: #{blip3d_forward.4} parent=0 // loop_footer
    %s38 = sadd.s32 1, %s34
  $region7: #{blip3d_forward.4} parent=0 // loop_footer_branch
    %33 = sbr.rel target = $region3
  $region8: #{blip3d_forward.4} parent=0 // loop_exit
    _

// kernel: blip3d_forward.3
$region0: #{blip3d_forward.3}
  #allocation0 [shape = 'u32[]', space=smem, size = 0x4, offset = 0x4, fixed_abs, tag = 'smem constant byte address 0x4 - core index']
  #allocation1 [shape = 'u32[72,128]{1,0:T(1,128)}', space=vmem, size = 0x9000, scoped, tag = 'internal scratch']
  %s0 = inlined_call_operand.vmem [shape: f32[8,32], index: 0, kind: input, shape index: {}]
  %s1 = inlined_call_operand.vmem [shape: f32[2,8,32], index: 1, kind: input, shape index: {}]
  %s2 = inlined_call_operand.vmem [shape: bf16[32,96], index: 2, kind: input, shape index: {}]
  %s3 = inlined_call_operand.vmem [shape: f32[1,96], index: 3, kind: input, shape index: {}]
  %s4 = inlined_call_operand.vmem [shape: bf16[32,32], index: 4, kind: input, shape index: {}]
  %s5 = inlined_call_operand.vmem [shape: f32[1,32], index: 5, kind: input, shape index: {}]
  %s6 = inlined_call_operand.vmem [shape: f32[1,32], index: 6, kind: input, shape index: {}]
  %s7 = inlined_call_operand.vmem [shape: f32[1,32], index: 7, kind: input, shape index: {}]
  %s8 = inlined_call_operand.hbm [shape: bf16[32,32], index: 8, kind: input, shape index: {}]
  %s9 = inlined_call_operand.vmem [shape: f32[1,32], index: 9, kind: input, shape index: {}]
  %s10 = inlined_call_operand.hbm [shape: bf16[32,64], index: 10, kind: input, shape index: {}]
  %s11 = inlined_call_operand.hbm [shape: f32[1,64], index: 11, kind: input, shape index: {}]
  %s12 = inlined_call_operand.hbm [shape: bf16[32,32], index: 12, kind: input, shape index: {}]
  %s13 = inlined_call_operand.hbm [shape: f32[1,32], index: 13, kind: input, shape index: {}]
  %s14 = inlined_call_operand.hbm [shape: f32[1,32], index: 14, kind: input, shape index: {}]
  %s15 = inlined_call_operand.hbm [shape: f32[1,32], index: 15, kind: input, shape index: {}]
  %s16 = inlined_call_operand.hbm [shape: bf16[32,64], index: 16, kind: input, shape index: {}]
  %s17 = inlined_call_operand.hbm [shape: f32[1,64], index: 17, kind: input, shape index: {}]
  %s18 = inlined_call_operand.vmem [shape: bf16[64,32], index: 18, kind: input, shape index: {}]
  %s19 = inlined_call_operand.vmem [shape: f32[1,32], index: 19, kind: input, shape index: {}]
  %s20 = inlined_call_operand.vmem [shape: f32[1,32], index: 20, kind: input, shape index: {}]
  %s21 = inlined_call_operand.vmem [shape: f32[1,32], index: 21, kind: input, shape index: {}]
  %s22 = inlined_call_operand.hbm [shape: bf16[32,32], index: 22, kind: input, shape index: {}]
  %s23 = inlined_call_operand.hbm [shape: f32[1,32], index: 23, kind: input, shape index: {}]
  %s24 = inlined_call_operand.hbm [shape: f32[2,8,32], index: 24, kind: output, shape index: {0}]
  %s25 = inlined_call_operand.vmem [shape: f32[2,8,32], index: 25, kind: output, shape index: {1}]
  %26 = xla_tuple %s24, %s25
  %s27 = sld [smem:[#allocation0]]
  $region181: #{blip3d_forward.3} parent=0
    _
  %s29 = ssub.s32 1, %s27
  %s30 = scalar_select 0, %s29, %s27
  $region1: #{blip3d_forward.3} parent=0
    #allocation2 [shape = 'u8[8192]{0}', space=vmem, size = 0x2000, scoped, tag = 'input window, operand 8, single buffered']
    #allocation3 [shape = 's32[2]{0}', space=sflag, size = 0x8, scoped, tag = 'scoped memory for blip3d_forward.3']
    #allocation4 [shape = 's32[2]{0}', space=sflag, size = 0x8, scoped, tag = 'scoped memory for blip3d_forward.3']
    #allocation5 [shape = 'u8[8192]{0}', space=vmem, size = 0x2000, scoped, tag = 'input window, operand 10, single buffered']
    #allocation6 [shape = 's32[1]{0}', space=sflag, size = 0x4, scoped, tag = 'scoped memory for blip3d_forward.3']
    #allocation7 [shape = 'u8[512]{0}', space=vmem, size = 0x400, scoped, tag = 'input window, operand 11, single buffered']
    #allocation8 [shape = 'u8[8192]{0}', space=vmem, size = 0x2000, scoped, tag = 'input window, operand 12, single buffered']
    #allocation9 [shape = 's32[1]{0}', space=sflag, size = 0x4, scoped, tag = 'scoped memory for blip3d_forward.3']
    #allocation10 [shape = 'u8[512]{0}', space=vmem, size = 0x400, scoped, tag = 'input window, operand 13, single buffered']
    #allocation11 [shape = 'u8[512]{0}', space=vmem, size = 0x400, scoped, tag = 'input window, operand 14, single buffered']
    #allocation12 [shape = 's32[1]{0}', space=sflag, size = 0x4, scoped, tag = 'scoped memory for blip3d_forward.3']
    #allocation13 [shape = 'u8[512]{0}', space=vmem, size = 0x400, scoped, tag = 'input window, operand 15, single buffered']
    #allocation14 [shape = 'u8[8192]{0}', space=vmem, size = 0x2000, scoped, tag = 'input window, operand 16, single buffered']
    #allocation15 [shape = 's32[1]{0}', space=sflag, size = 0x4, scoped, tag = 'scoped memory for blip3d_forward.3']
    #allocation16 [shape = 'u8[512]{0}', space=vmem, size = 0x400, scoped, tag = 'input window, operand 17, single buffered']
    #allocation17 [shape = 'u8[8192]{0}', space=vmem, size = 0x2000, scoped, tag = 'input window, operand 22, single buffered']
    #allocation18 [shape = 's32[1]{0}', space=sflag, size = 0x4, scoped, tag = 'scoped memory for blip3d_forward.3']
    #allocation19 [shape = 'u8[512]{0}', space=vmem, size = 0x400, scoped, tag = 'input window, operand 23, single buffered']
    #allocation20 [shape = 'u8[8192]{0}', space=vmem, size = 0x2000, scoped, tag = 'output window, operand 0']
    %31 = vsyncpa [#allocation3], 0
    %32 = vsyncpa [#allocation6], 0
    %33 = vsyncpa [#allocation9], 0
    %34 = vsyncpa [#allocation12], 0
    %35 = vsyncpa [#allocation15], 0
    %36 = vsyncpa [#allocation18], 0
    %37 = vsyncpa [#allocation4], 0
    %s38 = scalar_lea.sflag [#allocation4], 1
    %39 = vsyncpa %s38, 0
    loop: start=0, step=1, limit=4
    $region2: #{blip3d_forward.3} parent=1 // loop_pre_header
      _
    $region3: #{blip3d_forward.3} parent=1 // loop_header
      %s41 = sphi 0, %s45
      %p42 = scmp.ge.s32.totalorder %s41, 4
      %s49 = sphi 0, %s49
      %s51 = sphi 0, %s49
      %s52 = sphi 0, %s51
      %s66 = sphi 0, %s52
      %s72 = sphi 0, %s74
      %s75 = sphi 0, %s72
      %s76 = sphi 0, %s75
      %s92 = sphi 0, %s76
      %s96 = sphi 0, %s96
      %s98 = sphi 0, %s96
      %s99 = sphi 0, %s98
      %s113 = sphi 0, %s99
      %s117 = sphi 0, %s117
      %s119 = sphi 0, %s117
      %s120 = sphi 0, %s119
      %s134 = sphi 0, %s120
      %s138 = sphi 0, %s138
      %s140 = sphi 0, %s138
      %s141 = sphi 0, %s140
      %s155 = sphi 0, %s141
      %s159 = sphi 0, %s159
      %s161 = sphi 0, %s159
      %s162 = sphi 0, %s161
      %s176 = sphi 0, %s162
      %s180 = sphi 0, %s180
      %s182 = sphi 0, %s180
      %s183 = sphi 0, %s182
      %s197 = sphi 0, %s183
      %s201 = sphi 0, %s201
      %s203 = sphi 0, %s201
      %s204 = sphi 0, %s203
      %s218 = sphi 0, %s204
      %s222 = sphi 0, %s222
      %s224 = sphi 0, %s222
      %s225 = sphi 0, %s224
      %s239 = sphi 0, %s225
      %s243 = sphi 0, %s243
      %s245 = sphi 0, %s243
      %s246 = sphi 0, %s245
      %s260 = sphi 0, %s246
      %s264 = sphi 0, %s264
      %s266 = sphi 0, %s264
      %s267 = sphi 0, %s266
      %s281 = sphi 0, %s267
      %s285 = sphi 0, %s285
      %s287 = sphi 0, %s285
      %s288 = sphi 0, %s287
      %s302 = sphi 0, %s288
      %s306 = sphi 0, %s306
      %s308 = sphi 0, %s306
      %s309 = sphi 0, %s308
      %s323 = sphi 0, %s309
      %s327 = sphi 0, %s327
      %s329 = sphi 0, %s327
      %s330 = sphi 0, %s329
      %s344 = sphi 0, %s330
      %s348 = sphi 0, %s348
      %s350 = sphi 0, %s348
      %s351 = sphi 0, %s350
      %s365 = sphi 0, %s351
      %s369 = sphi 0, %s369
      %s371 = sphi 0, %s369
      %s372 = sphi 0, %s371
      %s386 = sphi 0, %s372
      %s390 = sphi 0, %s390
      %s392 = sphi 0, %s390
      %s393 = sphi 0, %s392
      %s407 = sphi 0, %s393
      %s411 = sphi 0, %s411
      %s413 = sphi 0, %s411
      %s414 = sphi 0, %s413
      %s428 = sphi 0, %s414
      %s432 = sphi 0, %s432
      %s434 = sphi 0, %s432
      %s435 = sphi 0, %s434
      %s449 = sphi 0, %s435
      %s453 = sphi 0, %s453
      %s455 = sphi 0, %s453
      %s456 = sphi 0, %s455
      %s470 = sphi 0, %s456
      %s474 = sphi 0, %s474
      %s476 = sphi 0, %s474
      %s477 = sphi 0, %s476
      %s491 = sphi 0, %s477
      %s495 = sphi 0, %s495
      %s497 = sphi 0, %s495
      %s498 = sphi 0, %s497
      %s512 = sphi 0, %s498
      %s516 = sphi 0, %s516
      %s518 = sphi 0, %s516
      %s519 = sphi 0, %s518
      %s533 = sphi 0, %s519
      %s537 = sphi 0, %s537
      %s539 = sphi 0, %s537
      %s540 = sphi 0, %s539
      %s554 = sphi 0, %s540
      %s560 = sphi 0, %s562
      %s563 = sphi 0, %s560
      %s564 = sphi 0, %s563
      %s580 = sphi 0, %s564
      %s586 = sphi 0, %s588
      %s589 = sphi 0, %s586
      %s590 = sphi 0, %s589
      %s606 = sphi 0, %s590
    $region4: #{blip3d_forward.3} parent=1 // loop_header_branch
      %44 = sbr.rel (%p42) target = $region8
    $region5: #{blip3d_forward.3} parent=1 // loop_body
      %s46 = ssub.s32 %s41, 1
      %s47 = ssub.s32 %s41, 2
      %s48 = sadd.s32 %s41, 1
      %s50 = sadd.s32 %s49, 1
      %p53 = scmp.eq.s32.totalorder %s41, 1
      %p54 = scmp.ne.s32.totalorder %s49, %s51
      %p55 = scmp.eq.s32.totalorder %s41, 0
      %p56 = por %p54, %p55
      %p57 = scmp.ne.s32.totalorder %s49, %s51
      %p58 = scmp.eq.s32.totalorder %s46, 1
      %p59 = por %p57, %p58
      %p60 = scmp.ne.s32.totalorder %s51, %s52
      %p61 = scmp.eq.s32.totalorder %s46, 0
      %p62 = por %p60, %p61
      %p63 = scmp.ne.s32.totalorder %s51, %s52
      %p64 = scmp.eq.s32.totalorder %s47, 1
      %p65 = por %p63, %p64
      %p67 = scmp.ne.s32.totalorder %s52, %s66
      %p68 = scmp.eq.s32.totalorder %s47, 0
      %p69 = por %p67, %p68
      %s70 = ssub.s32 %s41, %s48
      %p71 = scmp.eq.s32.totalorder %s70, 0
      %s73 = sadd.s32 %s72, 1
      %s74 = scalar_select %p71, %s72, %s73
      %p77 = pneg %p71
      %p78 = scmp.eq.s32.totalorder %s41, 1
      %p79 = por %p77, %p78
      %p80 = scmp.ne.s32.totalorder %s72, %s75
      %p81 = scmp.eq.s32.totalorder %s41, 0
      %p82 = por %p80, %p81
      %p83 = scmp.ne.s32.totalorder %s72, %s75
      %p84 = scmp.eq.s32.totalorder %s46, 1
      %p85 = por %p83, %p84
      %p86 = scmp.ne.s32.totalorder %s75, %s76
      %p87 = scmp.eq.s32.totalorder %s46, 0
      %p88 = por %p86, %p87
      %p89 = scmp.ne.s32.totalorder %s75, %s76
      %p90 = scmp.eq.s32.totalorder %s47, 1
      %p91 = por %p89, %p90
      %p93 = scmp.ne.s32.totalorder %s76, %s92
      %p94 = scmp.eq.s32.totalorder %s47, 0
      %p95 = por %p93, %p94
      %s97 = sadd.s32 %s96, 1
      %p100 = scmp.eq.s32.totalorder %s41, 1
      %p101 = scmp.ne.s32.totalorder %s96, %s98
      %p102 = scmp.eq.s32.totalorder %s41, 0
      %p103 = por %p101, %p102
      %p104 = scmp.ne.s32.totalorder %s96, %s98
      %p105 = scmp.eq.s32.totalorder %s46, 1
      %p106 = por %p104, %p105
      %p107 = scmp.ne.s32.totalorder %s98, %s99
      %p108 = scmp.eq.s32.totalorder %s46, 0
      %p109 = por %p107, %p108
      %p110 = scmp.ne.s32.totalorder %s98, %s99
      %p111 = scmp.eq.s32.totalorder %s47, 1
      %p112 = por %p110, %p111
      %p114 = scmp.ne.s32.totalorder %s99, %s113
      %p115 = scmp.eq.s32.totalorder %s47, 0
      %p116 = por %p114, %p115
      %s118 = sadd.s32 %s117, 1
      %p121 = scmp.eq.s32.totalorder %s41, 1
      %p122 = scmp.ne.s32.totalorder %s117, %s119
      %p123 = scmp.eq.s32.totalorder %s41, 0
      %p124 = por %p122, %p123
      %p125 = scmp.ne.s32.totalorder %s117, %s119
      %p126 = scmp.eq.s32.totalorder %s46, 1
      %p127 = por %p125, %p126
      %p128 = scmp.ne.s32.totalorder %s119, %s120
      %p129 = scmp.eq.s32.totalorder %s46, 0
      %p130 = por %p128, %p129
      %p131 = scmp.ne.s32.totalorder %s119, %s120
      %p132 = scmp.eq.s32.totalorder %s47, 1
      %p133 = por %p131, %p132
      %p135 = scmp.ne.s32.totalorder %s120, %s134
      %p136 = scmp.eq.s32.totalorder %s47, 0
      %p137 = por %p135, %p136
      %s139 = sadd.s32 %s138, 1
      %p142 = scmp.eq.s32.totalorder %s41, 1
      %p143 = scmp.ne.s32.totalorder %s138, %s140
      %p144 = scmp.eq.s32.totalorder %s41, 0
      %p145 = por %p143, %p144
      %p146 = scmp.ne.s32.totalorder %s138, %s140
      %p147 = scmp.eq.s32.totalorder %s46, 1
      %p148 = por %p146, %p147
      %p149 = scmp.ne.s32.totalorder %s140, %s141
      %p150 = scmp.eq.s32.totalorder %s46, 0
      %p151 = por %p149, %p150
      %p152 = scmp.ne.s32.totalorder %s140, %s141
      %p153 = scmp.eq.s32.totalorder %s47, 1
      %p154 = por %p152, %p153
      %p156 = scmp.ne.s32.totalorder %s141, %s155
      %p157 = scmp.eq.s32.totalorder %s47, 0
      %p158 = por %p156, %p157
      %s160 = sadd.s32 %s159, 1
      %p163 = scmp.eq.s32.totalorder %s41, 1
      %p164 = scmp.ne.s32.totalorder %s159, %s161
      %p165 = scmp.eq.s32.totalorder %s41, 0
      %p166 = por %p164, %p165
      %p167 = scmp.ne.s32.totalorder %s159, %s161
      %p168 = scmp.eq.s32.totalorder %s46, 1
      %p169 = por %p167, %p168
      %p170 = scmp.ne.s32.totalorder %s161, %s162
      %p171 = scmp.eq.s32.totalorder %s46, 0
      %p172 = por %p170, %p171
      %p173 = scmp.ne.s32.totalorder %s161, %s162
      %p174 = scmp.eq.s32.totalorder %s47, 1
      %p175 = por %p173, %p174
      %p177 = scmp.ne.s32.totalorder %s162, %s176
      %p178 = scmp.eq.s32.totalorder %s47, 0
      %p179 = por %p177, %p178
      %s181 = sadd.s32 %s180, 1
      %p184 = scmp.eq.s32.totalorder %s41, 1
      %p185 = scmp.ne.s32.totalorder %s180, %s182
      %p186 = scmp.eq.s32.totalorder %s41, 0
      %p187 = por %p185, %p186
      %p188 = scmp.ne.s32.totalorder %s180, %s182
      %p189 = scmp.eq.s32.totalorder %s46, 1
      %p190 = por %p188, %p189
      %p191 = scmp.ne.s32.totalorder %s182, %s183
      %p192 = scmp.eq.s32.totalorder %s46, 0
      %p193 = por %p191, %p192
      %p194 = scmp.ne.s32.totalorder %s182, %s183
      %p195 = scmp.eq.s32.totalorder %s47, 1
      %p196 = por %p194, %p195
      %p198 = scmp.ne.s32.totalorder %s183, %s197
      %p199 = scmp.eq.s32.totalorder %s47, 0
      %p200 = por %p198, %p199
      %s202 = sadd.s32 %s201, 1
      %p205 = scmp.eq.s32.totalorder %s41, 1
      %p206 = scmp.ne.s32.totalorder %s201, %s203
      %p207 = scmp.eq.s32.totalorder %s41, 0
      %p208 = por %p206, %p207
      %p209 = scmp.ne.s32.totalorder %s201, %s203
      %p210 = scmp.eq.s32.totalorder %s46, 1
      %p211 = por %p209, %p210
      %p212 = scmp.ne.s32.totalorder %s203, %s204
      %p213 = scmp.eq.s32.totalorder %s46, 0
      %p214 = por %p212, %p213
      %p215 = scmp.ne.s32.totalorder %s203, %s204
      %p216 = scmp.eq.s32.totalorder %s47, 1
      %p217 = por %p215, %p216
      %p219 = scmp.ne.s32.totalorder %s204, %s218
      %p220 = scmp.eq.s32.totalorder %s47, 0
      %p221 = por %p219, %p220
      %s223 = sadd.s32 %s222, 1
      %p226 = scmp.eq.s32.totalorder %s41, 1
      %p227 = scmp.ne.s32.totalorder %s222, %s224
      %p228 = scmp.eq.s32.totalorder %s41, 0
      %p229 = por %p227, %p228
      %p230 = scmp.ne.s32.totalorder %s222, %s224
      %p231 = scmp.eq.s32.totalorder %s46, 1
      %p232 = por %p230, %p231
      %p233 = scmp.ne.s32.totalorder %s224, %s225
      %p234 = scmp.eq.s32.totalorder %s46, 0
      %p235 = por %p233, %p234
      %p236 = scmp.ne.s32.totalorder %s224, %s225
      %p237 = scmp.eq.s32.totalorder %s47, 1
      %p238 = por %p236, %p237
      %p240 = scmp.ne.s32.totalorder %s225, %s239
      %p241 = scmp.eq.s32.totalorder %s47, 0
      %p242 = por %p240, %p241
      %s244 = sadd.s32 %s243, 1
      %p247 = scmp.eq.s32.totalorder %s41, 1
      %p248 = scmp.ne.s32.totalorder %s243, %s245
      %p249 = scmp.eq.s32.totalorder %s41, 0
      %p250 = por %p248, %p249
      %p251 = scmp.ne.s32.totalorder %s243, %s245
      %p252 = scmp.eq.s32.totalorder %s46, 1
      %p253 = por %p251, %p252
      %p254 = scmp.ne.s32.totalorder %s245, %s246
      %p255 = scmp.eq.s32.totalorder %s46, 0
      %p256 = por %p254, %p255
      %p257 = scmp.ne.s32.totalorder %s245, %s246
      %p258 = scmp.eq.s32.totalorder %s47, 1
      %p259 = por %p257, %p258
      %p261 = scmp.ne.s32.totalorder %s246, %s260
      %p262 = scmp.eq.s32.totalorder %s47, 0
      %p263 = por %p261, %p262
      %s265 = sadd.s32 %s264, 1
      %p268 = scmp.eq.s32.totalorder %s41, 1
      %p269 = scmp.ne.s32.totalorder %s264, %s266
      %p270 = scmp.eq.s32.totalorder %s41, 0
      %p271 = por %p269, %p270
      %p272 = scmp.ne.s32.totalorder %s264, %s266
      %p273 = scmp.eq.s32.totalorder %s46, 1
      %p274 = por %p272, %p273
      %p275 = scmp.ne.s32.totalorder %s266, %s267
      %p276 = scmp.eq.s32.totalorder %s46, 0
      %p277 = por %p275, %p276
      %p278 = scmp.ne.s32.totalorder %s266, %s267
      %p279 = scmp.eq.s32.totalorder %s47, 1
      %p280 = por %p278, %p279
      %p282 = scmp.ne.s32.totalorder %s267, %s281
      %p283 = scmp.eq.s32.totalorder %s47, 0
      %p284 = por %p282, %p283
      %s286 = sadd.s32 %s285, 1
      %p289 = scmp.eq.s32.totalorder %s41, 1
      %p290 = scmp.ne.s32.totalorder %s285, %s287
      %p291 = scmp.eq.s32.totalorder %s41, 0
      %p292 = por %p290, %p291
      %p293 = scmp.ne.s32.totalorder %s285, %s287
      %p294 = scmp.eq.s32.totalorder %s46, 1
      %p295 = por %p293, %p294
      %p296 = scmp.ne.s32.totalorder %s287, %s288
      %p297 = scmp.eq.s32.totalorder %s46, 0
      %p298 = por %p296, %p297
      %p299 = scmp.ne.s32.totalorder %s287, %s288
      %p300 = scmp.eq.s32.totalorder %s47, 1
      %p301 = por %p299, %p300
      %p303 = scmp.ne.s32.totalorder %s288, %s302
      %p304 = scmp.eq.s32.totalorder %s47, 0
      %p305 = por %p303, %p304
      %s307 = sadd.s32 %s306, 1
      %p310 = scmp.eq.s32.totalorder %s41, 1
      %p311 = scmp.ne.s32.totalorder %s306, %s308
      %p312 = scmp.eq.s32.totalorder %s41, 0
      %p313 = por %p311, %p312
      %p314 = scmp.ne.s32.totalorder %s306, %s308
      %p315 = scmp.eq.s32.totalorder %s46, 1
      %p316 = por %p314, %p315
      %p317 = scmp.ne.s32.totalorder %s308, %s309
      %p318 = scmp.eq.s32.totalorder %s46, 0
      %p319 = por %p317, %p318
      %p320 = scmp.ne.s32.totalorder %s308, %s309
      %p321 = scmp.eq.s32.totalorder %s47, 1
      %p322 = por %p320, %p321
      %p324 = scmp.ne.s32.totalorder %s309, %s323
      %p325 = scmp.eq.s32.totalorder %s47, 0
      %p326 = por %p324, %p325
      %s328 = sadd.s32 %s327, 1
      %p331 = scmp.eq.s32.totalorder %s41, 1
      %p332 = scmp.ne.s32.totalorder %s327, %s329
      %p333 = scmp.eq.s32.totalorder %s41, 0
      %p334 = por %p332, %p333
      %p335 = scmp.ne.s32.totalorder %s327, %s329
      %p336 = scmp.eq.s32.totalorder %s46, 1
      %p337 = por %p335, %p336
      %p338 = scmp.ne.s32.totalorder %s329, %s330
      %p339 = scmp.eq.s32.totalorder %s46, 0
      %p340 = por %p338, %p339
      %p341 = scmp.ne.s32.totalorder %s329, %s330
      %p342 = scmp.eq.s32.totalorder %s47, 1
      %p343 = por %p341, %p342
      %p345 = scmp.ne.s32.totalorder %s330, %s344
      %p346 = scmp.eq.s32.totalorder %s47, 0
      %p347 = por %p345, %p346
      %s349 = sadd.s32 %s348, 1
      %p352 = scmp.eq.s32.totalorder %s41, 1
      %p353 = scmp.ne.s32.totalorder %s348, %s350
      %p354 = scmp.eq.s32.totalorder %s41, 0
      %p355 = por %p353, %p354
      %p356 = scmp.ne.s32.totalorder %s348, %s350
      %p357 = scmp.eq.s32.totalorder %s46, 1
      %p358 = por %p356, %p357
      %p359 = scmp.ne.s32.totalorder %s350, %s351
      %p360 = scmp.eq.s32.totalorder %s46, 0
      %p361 = por %p359, %p360
      %p362 = scmp.ne.s32.totalorder %s350, %s351
      %p363 = scmp.eq.s32.totalorder %s47, 1
      %p364 = por %p362, %p363
      %p366 = scmp.ne.s32.totalorder %s351, %s365
      %p367 = scmp.eq.s32.totalorder %s47, 0
      %p368 = por %p366, %p367
      %s370 = sadd.s32 %s369, 1
      %p373 = scmp.eq.s32.totalorder %s41, 1
      %p374 = scmp.ne.s32.totalorder %s369, %s371
      %p375 = scmp.eq.s32.totalorder %s41, 0
      %p376 = por %p374, %p375
      %p377 = scmp.ne.s32.totalorder %s369, %s371
      %p378 = scmp.eq.s32.totalorder %s46, 1
      %p379 = por %p377, %p378
      %p380 = scmp.ne.s32.totalorder %s371, %s372
      %p381 = scmp.eq.s32.totalorder %s46, 0
      %p382 = por %p380, %p381
      %p383 = scmp.ne.s32.totalorder %s371, %s372
      %p384 = scmp.eq.s32.totalorder %s47, 1
      %p385 = por %p383, %p384
      %p387 = scmp.ne.s32.totalorder %s372, %s386
      %p388 = scmp.eq.s32.totalorder %s47, 0
      %p389 = por %p387, %p388
      %s391 = sadd.s32 %s390, 1
      %p394 = scmp.eq.s32.totalorder %s41, 1
      %p395 = scmp.ne.s32.totalorder %s390, %s392
      %p396 = scmp.eq.s32.totalorder %s41, 0
      %p397 = por %p395, %p396
      %p398 = scmp.ne.s32.totalorder %s390, %s392
      %p399 = scmp.eq.s32.totalorder %s46, 1
      %p400 = por %p398, %p399
      %p401 = scmp.ne.s32.totalorder %s392, %s393
      %p402 = scmp.eq.s32.totalorder %s46, 0
      %p403 = por %p401, %p402
      %p404 = scmp.ne.s32.totalorder %s392, %s393
      %p405 = scmp.eq.s32.totalorder %s47, 1
      %p406 = por %p404, %p405
      %p408 = scmp.ne.s32.totalorder %s393, %s407
      %p409 = scmp.eq.s32.totalorder %s47, 0
      %p410 = por %p408, %p409
      %s412 = sadd.s32 %s411, 1
      %p415 = scmp.eq.s32.totalorder %s41, 1
      %p416 = scmp.ne.s32.totalorder %s411, %s413
      %p417 = scmp.eq.s32.totalorder %s41, 0
      %p418 = por %p416, %p417
      %p419 = scmp.ne.s32.totalorder %s411, %s413
      %p420 = scmp.eq.s32.totalorder %s46, 1
      %p421 = por %p419, %p420
      %p422 = scmp.ne.s32.totalorder %s413, %s414
      %p423 = scmp.eq.s32.totalorder %s46, 0
      %p424 = por %p422, %p423
      %p425 = scmp.ne.s32.totalorder %s413, %s414
      %p426 = scmp.eq.s32.totalorder %s47, 1
      %p427 = por %p425, %p426
      %p429 = scmp.ne.s32.totalorder %s414, %s428
      %p430 = scmp.eq.s32.totalorder %s47, 0
      %p431 = por %p429, %p430
      %s433 = sadd.s32 %s432, 1
      %p436 = scmp.eq.s32.totalorder %s41, 1
      %p437 = scmp.ne.s32.totalorder %s432, %s434
      %p438 = scmp.eq.s32.totalorder %s41, 0
      %p439 = por %p437, %p438
      %p440 = scmp.ne.s32.totalorder %s432, %s434
      %p441 = scmp.eq.s32.totalorder %s46, 1
      %p442 = por %p440, %p441
      %p443 = scmp.ne.s32.totalorder %s434, %s435
      %p444 = scmp.eq.s32.totalorder %s46, 0
      %p445 = por %p443, %p444
      %p446 = scmp.ne.s32.totalorder %s434, %s435
      %p447 = scmp.eq.s32.totalorder %s47, 1
      %p448 = por %p446, %p447
      %p450 = scmp.ne.s32.totalorder %s435, %s449
      %p451 = scmp.eq.s32.totalorder %s47, 0
      %p452 = por %p450, %p451
      %s454 = sadd.s32 %s453, 1
      %p457 = scmp.eq.s32.totalorder %s41, 1
      %p458 = scmp.ne.s32.totalorder %s453, %s455
      %p459 = scmp.eq.s32.totalorder %s41, 0
      %p460 = por %p458, %p459
      %p461 = scmp.ne.s32.totalorder %s453, %s455
      %p462 = scmp.eq.s32.totalorder %s46, 1
      %p463 = por %p461, %p462
      %p464 = scmp.ne.s32.totalorder %s455, %s456
      %p465 = scmp.eq.s32.totalorder %s46, 0
      %p466 = por %p464, %p465
      %p467 = scmp.ne.s32.totalorder %s455, %s456
      %p468 = scmp.eq.s32.totalorder %s47, 1
      %p469 = por %p467, %p468
      %p471 = scmp.ne.s32.totalorder %s456, %s470
      %p472 = scmp.eq.s32.totalorder %s47, 0
      %p473 = por %p471, %p472
      %s475 = sadd.s32 %s474, 1
      %p478 = scmp.eq.s32.totalorder %s41, 1
      %p479 = scmp.ne.s32.totalorder %s474, %s476
      %p480 = scmp.eq.s32.totalorder %s41, 0
      %p481 = por %p479, %p480
      %p482 = scmp.ne.s32.totalorder %s474, %s476
      %p483 = scmp.eq.s32.totalorder %s46, 1
      %p484 = por %p482, %p483
      %p485 = scmp.ne.s32.totalorder %s476, %s477
      %p486 = scmp.eq.s32.totalorder %s46, 0
      %p487 = por %p485, %p486
      %p488 = scmp.ne.s32.totalorder %s476, %s477
      %p489 = scmp.eq.s32.totalorder %s47, 1
      %p490 = por %p488, %p489
      %p492 = scmp.ne.s32.totalorder %s477, %s491
      %p493 = scmp.eq.s32.totalorder %s47, 0
      %p494 = por %p492, %p493
      %s496 = sadd.s32 %s495, 1
      %p499 = scmp.eq.s32.totalorder %s41, 1
      %p500 = scmp.ne.s32.totalorder %s495, %s497
      %p501 = scmp.eq.s32.totalorder %s41, 0
      %p502 = por %p500, %p501
      %p503 = scmp.ne.s32.totalorder %s495, %s497
      %p504 = scmp.eq.s32.totalorder %s46, 1
      %p505 = por %p503, %p504
      %p506 = scmp.ne.s32.totalorder %s497, %s498
      %p507 = scmp.eq.s32.totalorder %s46, 0
      %p508 = por %p506, %p507
      %p509 = scmp.ne.s32.totalorder %s497, %s498
      %p510 = scmp.eq.s32.totalorder %s47, 1
      %p511 = por %p509, %p510
      %p513 = scmp.ne.s32.totalorder %s498, %s512
      %p514 = scmp.eq.s32.totalorder %s47, 0
      %p515 = por %p513, %p514
      %s517 = sadd.s32 %s516, 1
      %p520 = scmp.eq.s32.totalorder %s41, 1
      %p521 = scmp.ne.s32.totalorder %s516, %s518
      %p522 = scmp.eq.s32.totalorder %s41, 0
      %p523 = por %p521, %p522
      %p524 = scmp.ne.s32.totalorder %s516, %s518
      %p525 = scmp.eq.s32.totalorder %s46, 1
      %p526 = por %p524, %p525
      %p527 = scmp.ne.s32.totalorder %s518, %s519
      %p528 = scmp.eq.s32.totalorder %s46, 0
      %p529 = por %p527, %p528
      %p530 = scmp.ne.s32.totalorder %s518, %s519
      %p531 = scmp.eq.s32.totalorder %s47, 1
      %p532 = por %p530, %p531
      %p534 = scmp.ne.s32.totalorder %s519, %s533
      %p535 = scmp.eq.s32.totalorder %s47, 0
      %p536 = por %p534, %p535
      %s538 = sadd.s32 %s537, 1
      %p541 = scmp.eq.s32.totalorder %s41, 1
      %p542 = scmp.ne.s32.totalorder %s537, %s539
      %p543 = scmp.eq.s32.totalorder %s41, 0
      %p544 = por %p542, %p543
      %p545 = scmp.ne.s32.totalorder %s537, %s539
      %p546 = scmp.eq.s32.totalorder %s46, 1
      %p547 = por %p545, %p546
      %p548 = scmp.ne.s32.totalorder %s539, %s540
      %p549 = scmp.eq.s32.totalorder %s46, 0
      %p550 = por %p548, %p549
      %p551 = scmp.ne.s32.totalorder %s539, %s540
      %p552 = scmp.eq.s32.totalorder %s47, 1
      %p553 = por %p551, %p552
      %p555 = scmp.ne.s32.totalorder %s540, %s554
      %p556 = scmp.eq.s32.totalorder %s47, 0
      %p557 = por %p555, %p556
      %s558 = ssub.s32 %s41, %s48
      %p559 = scmp.eq.s32.totalorder %s558, 0
      %s561 = sadd.s32 %s560, 1
      %s562 = scalar_select %p559, %s560, %s561
      %p565 = pneg %p559
      %p566 = scmp.eq.s32.totalorder %s41, 1
      %p567 = por %p565, %p566
      %p568 = scmp.ne.s32.totalorder %s560, %s563
      %p569 = scmp.eq.s32.totalorder %s41, 0
      %p570 = por %p568, %p569
      %p571 = scmp.ne.s32.totalorder %s560, %s563
      %p572 = scmp.eq.s32.totalorder %s46, 1
      %p573 = por %p571, %p572
      %p574 = scmp.ne.s32.totalorder %s563, %s564
      %p575 = scmp.eq.s32.totalorder %s46, 0
      %p576 = por %p574, %p575
      %p577 = scmp.ne.s32.totalorder %s563, %s564
      %p578 = scmp.eq.s32.totalorder %s47, 1
      %p579 = por %p577, %p578
      %p581 = scmp.ne.s32.totalorder %s564, %s580
      %p582 = scmp.eq.s32.totalorder %s47, 0
      %p583 = por %p581, %p582
      %s584 = ssub.s32 %s41, %s48
      %p585 = scmp.eq.s32.totalorder %s584, 0
      %s587 = sadd.s32 %s586, 1
      %s588 = scalar_select %p585, %s586, %s587
      %p591 = pneg %p585
      %p592 = scmp.eq.s32.totalorder %s41, 1
      %p593 = por %p591, %p592
      %p594 = scmp.ne.s32.totalorder %s586, %s589
      %p595 = scmp.eq.s32.totalorder %s41, 0
      %p596 = por %p594, %p595
      %p597 = scmp.ne.s32.totalorder %s586, %s589
      %p598 = scmp.eq.s32.totalorder %s46, 1
      %p599 = por %p597, %p598
      %p600 = scmp.ne.s32.totalorder %s589, %s590
      %p601 = scmp.eq.s32.totalorder %s46, 0
      %p602 = por %p600, %p601
      %p603 = scmp.ne.s32.totalorder %s589, %s590
      %p604 = scmp.eq.s32.totalorder %s47, 1
      %p605 = por %p603, %p604
      %p607 = scmp.ne.s32.totalorder %s590, %s606
      %p608 = scmp.eq.s32.totalorder %s47, 0
      %p609 = por %p607, %p608
      %p610 = scmp.le.s32.totalorder 1, %s41
      %p611 = scmp.lt.s32.totalorder %s41, 3
      %p612 = pnand %p610, %p611
      %p613 = pneg %p612
      // Predicated region
      $region9: #{blip3d_forward.3} parent=5 // pred_check
        _
      $region10: #{blip3d_forward.3} parent=5 // pred_check_branch
        %615 = sbr.rel (%p612) target = $region12
      $region11: #{blip3d_forward.3} parent=5 // pred_region
        %s616 = ssub.s32 %s41, 1
        // Predicated region
        $region13: #{blip3d_forward.3} parent=11 // pred_check
          %p617 = pneg %p62
        $region14: #{blip3d_forward.3} parent=11 // pred_check_branch
          %619 = sbr.rel (%p617) target = $region16
        $region15: #{blip3d_forward.3} parent=11 // pred_region
          _
        $region16: #{blip3d_forward.3} parent=11 // pred_fallthru
          _
        // Predicated region
        $region17: #{blip3d_forward.3} parent=11 // pred_check
          %p620 = pneg %p109
        $region18: #{blip3d_forward.3} parent=11 // pred_check_branch
          %622 = sbr.rel (%p620) target = $region20
        $region19: #{blip3d_forward.3} parent=11 // pred_region
          _
        $region20: #{blip3d_forward.3} parent=11 // pred_fallthru
          _
        // Predicated region
        $region21: #{blip3d_forward.3} parent=11 // pred_check
          %p623 = pneg %p130
        $region22: #{blip3d_forward.3} parent=11 // pred_check_branch
          %625 = sbr.rel (%p623) target = $region24
        $region23: #{blip3d_forward.3} parent=11 // pred_region
          _
        $region24: #{blip3d_forward.3} parent=11 // pred_fallthru
          _
        // Predicated region
        $region25: #{blip3d_forward.3} parent=11 // pred_check
          %p626 = pneg %p151
        $region26: #{blip3d_forward.3} parent=11 // pred_check_branch
          %628 = sbr.rel (%p626) target = $region28
        $region27: #{blip3d_forward.3} parent=11 // pred_region
          _
        $region28: #{blip3d_forward.3} parent=11 // pred_fallthru
          _
        // Predicated region
        $region29: #{blip3d_forward.3} parent=11 // pred_check
          %p629 = pneg %p172
        $region30: #{blip3d_forward.3} parent=11 // pred_check_branch
          %631 = sbr.rel (%p629) target = $region32
        $region31: #{blip3d_forward.3} parent=11 // pred_region
          _
        $region32: #{blip3d_forward.3} parent=11 // pred_fallthru
          _
        // Predicated region
        $region33: #{blip3d_forward.3} parent=11 // pred_check
          %p632 = pneg %p193
        $region34: #{blip3d_forward.3} parent=11 // pred_check_branch
          %634 = sbr.rel (%p632) target = $region36
        $region35: #{blip3d_forward.3} parent=11 // pred_region
          _
        $region36: #{blip3d_forward.3} parent=11 // pred_fallthru
          _
        // Predicated region
        $region37: #{blip3d_forward.3} parent=11 // pred_check
          %p635 = pneg %p214
        $region38: #{blip3d_forward.3} parent=11 // pred_check_branch
          %637 = sbr.rel (%p635) target = $region40
        $region39: #{blip3d_forward.3} parent=11 // pred_region
          _
        $region40: #{blip3d_forward.3} parent=11 // pred_fallthru
          _
        // Predicated region
        $region41: #{blip3d_forward.3} parent=11 // pred_check
          %p638 = pneg %p235
        $region42: #{blip3d_forward.3} parent=11 // pred_check_branch
          %640 = sbr.rel (%p638) target = $region44
        $region43: #{blip3d_forward.3} parent=11 // pred_region
          %642 = vsyncadd [#allocation3], 0
          %s643 = sshll.u32 %s8, 4
          %s644 = int_to_ptr.hbm [resolvable:$true] %s643
          %s645 = sshll.u32 [#allocation2], 4
          %s646 = int_to_ptr.vmem [resolvable:$true] %s645
          %651 = dma.hbm_to_vmem [thread:$0]  %s644, 256, %s646, [#allocation3], 64, 64, 4
        $region44: #{blip3d_forward.3} parent=11 // pred_fallthru
          _
        // Predicated region
        $region45: #{blip3d_forward.3} parent=11 // pred_check
          %p652 = pneg %p256
        $region46: #{blip3d_forward.3} parent=11 // pred_check_branch
          %654 = sbr.rel (%p652) target = $region48
        $region47: #{blip3d_forward.3} parent=11 // pred_region
          _
        $region48: #{blip3d_forward.3} parent=11 // pred_fallthru
          _
        // Predicated region
        $region49: #{blip3d_forward.3} parent=11 // pred_check
          %p655 = pneg %p277
        $region50: #{blip3d_forward.3} parent=11 // pred_check_branch
          %657 = sbr.rel (%p655) target = $region52
        $region51: #{blip3d_forward.3} parent=11 // pred_region
          %659 = vsyncadd [#allocation6], 0
          %s660 = sshll.u32 %s10, 4
          %s661 = int_to_ptr.hbm [resolvable:$true] %s660
          %s662 = sshll.u32 [#allocation5], 4
          %s663 = int_to_ptr.vmem [resolvable:$true] %s662
          %668 = dma.hbm_to_vmem [thread:$0]  %s661, 256, %s663, [#allocation6], 64, 64, 4
        $region52: #{blip3d_forward.3} parent=11 // pred_fallthru
          _
        // Predicated region
        $region53: #{blip3d_forward.3} parent=11 // pred_check
          %p669 = pneg %p298
        $region54: #{blip3d_forward.3} parent=11 // pred_check_branch
          %671 = sbr.rel (%p669) target = $region56
        $region55: #{blip3d_forward.3} parent=11 // pred_region
          %673 = vsyncadd [#allocation6], 0
          %s675 = sshll.u32 %s11, 4
          %s676 = int_to_ptr.hbm [resolvable:$true] %s675
          %s677 = sshll.u32 [#allocation7], 4
          %s678 = int_to_ptr.vmem [resolvable:$true] %s677
          %680 = dma.hbm_to_vmem [thread:$0]  %s676, 16, %s678, [#allocation6]
        $region56: #{blip3d_forward.3} parent=11 // pred_fallthru
          _
        // Predicated region
        $region57: #{blip3d_forward.3} parent=11 // pred_check
          %p681 = pneg %p319
        $region58: #{blip3d_forward.3} parent=11 // pred_check_branch
          %683 = sbr.rel (%p681) target = $region60
        $region59: #{blip3d_forward.3} parent=11 // pred_region
          %685 = vsyncadd [#allocation9], 0
          %s686 = sshll.u32 %s12, 4
          %s687 = int_to_ptr.hbm [resolvable:$true] %s686
          %s688 = sshll.u32 [#allocation8], 4
          %s689 = int_to_ptr.vmem [resolvable:$true] %s688
          %694 = dma.hbm_to_vmem [thread:$0]  %s687, 256, %s689, [#allocation9], 64, 64, 4
        $region60: #{blip3d_forward.3} parent=11 // pred_fallthru
          _
        // Predicated region
        $region61: #{blip3d_forward.3} parent=11 // pred_check
          %p695 = pneg %p340
        $region62: #{blip3d_forward.3} parent=11 // pred_check_branch
          %697 = sbr.rel (%p695) target = $region64
        $region63: #{blip3d_forward.3} parent=11 // pred_region
          %699 = vsyncadd [#allocation9], 0
          %s701 = sshll.u32 %s13, 4
          %s702 = int_to_ptr.hbm [resolvable:$true] %s701
          %s703 = sshll.u32 [#allocation10], 4
          %s704 = int_to_ptr.vmem [resolvable:$true] %s703
          %706 = dma.hbm_to_vmem [thread:$0]  %s702, 16, %s704, [#allocation9]
        $region64: #{blip3d_forward.3} parent=11 // pred_fallthru
          _
        // Predicated region
        $region65: #{blip3d_forward.3} parent=11 // pred_check
          %p707 = pneg %p361
        $region66: #{blip3d_forward.3} parent=11 // pred_check_branch
          %709 = sbr.rel (%p707) target = $region68
        $region67: #{blip3d_forward.3} parent=11 // pred_region
          %711 = vsyncadd [#allocation12], 0
          %s713 = sshll.u32 %s14, 4
          %s714 = int_to_ptr.hbm [resolvable:$true] %s713
          %s715 = sshll.u32 [#allocation11], 4
          %s716 = int_to_ptr.vmem [resolvable:$true] %s715
          %718 = dma.hbm_to_vmem [thread:$0]  %s714, 16, %s716, [#allocation12]
        $region68: #{blip3d_forward.3} parent=11 // pred_fallthru
          _
        // Predicated region
        $region69: #{blip3d_forward.3} parent=11 // pred_check
          %p719 = pneg %p382
        $region70: #{blip3d_forward.3} parent=11 // pred_check_branch
          %721 = sbr.rel (%p719) target = $region72
        $region71: #{blip3d_forward.3} parent=11 // pred_region
          %723 = vsyncadd [#allocation12], 0
          %s725 = sshll.u32 %s15, 4
          %s726 = int_to_ptr.hbm [resolvable:$true] %s725
          %s727 = sshll.u32 [#allocation13], 4
          %s728 = int_to_ptr.vmem [resolvable:$true] %s727
          %730 = dma.hbm_to_vmem [thread:$0]  %s726, 16, %s728, [#allocation12]
        $region72: #{blip3d_forward.3} parent=11 // pred_fallthru
          _
        // Predicated region
        $region73: #{blip3d_forward.3} parent=11 // pred_check
          %p731 = pneg %p403
        $region74: #{blip3d_forward.3} parent=11 // pred_check_branch
          %733 = sbr.rel (%p731) target = $region76
        $region75: #{blip3d_forward.3} parent=11 // pred_region
          %735 = vsyncadd [#allocation15], 0
          %s736 = sshll.u32 %s16, 4
          %s737 = int_to_ptr.hbm [resolvable:$true] %s736
          %s738 = sshll.u32 [#allocation14], 4
          %s739 = int_to_ptr.vmem [resolvable:$true] %s738
          %744 = dma.hbm_to_vmem [thread:$0]  %s737, 256, %s739, [#allocation15], 64, 64, 4
        $region76: #{blip3d_forward.3} parent=11 // pred_fallthru
          _
        // Predicated region
        $region77: #{blip3d_forward.3} parent=11 // pred_check
          %p745 = pneg %p424
        $region78: #{blip3d_forward.3} parent=11 // pred_check_branch
          %747 = sbr.rel (%p745) target = $region80
        $region79: #{blip3d_forward.3} parent=11 // pred_region
          %749 = vsyncadd [#allocation15], 0
          %s751 = sshll.u32 %s17, 4
          %s752 = int_to_ptr.hbm [resolvable:$true] %s751
          %s753 = sshll.u32 [#allocation16], 4
          %s754 = int_to_ptr.vmem [resolvable:$true] %s753
          %756 = dma.hbm_to_vmem [thread:$0]  %s752, 16, %s754, [#allocation15]
        $region80: #{blip3d_forward.3} parent=11 // pred_fallthru
          _
        // Predicated region
        $region81: #{blip3d_forward.3} parent=11 // pred_check
          %p757 = pneg %p445
        $region82: #{blip3d_forward.3} parent=11 // pred_check_branch
          %759 = sbr.rel (%p757) target = $region84
        $region83: #{blip3d_forward.3} parent=11 // pred_region
          _
        $region84: #{blip3d_forward.3} parent=11 // pred_fallthru
          _
        // Predicated region
        $region85: #{blip3d_forward.3} parent=11 // pred_check
          %p760 = pneg %p466
        $region86: #{blip3d_forward.3} parent=11 // pred_check_branch
          %762 = sbr.rel (%p760) target = $region88
        $region87: #{blip3d_forward.3} parent=11 // pred_region
          _
        $region88: #{blip3d_forward.3} parent=11 // pred_fallthru
          _
        // Predicated region
        $region89: #{blip3d_forward.3} parent=11 // pred_check
          %p763 = pneg %p487
        $region90: #{blip3d_forward.3} parent=11 // pred_check_branch
          %765 = sbr.rel (%p763) target = $region92
        $region91: #{blip3d_forward.3} parent=11 // pred_region
          _
        $region92: #{blip3d_forward.3} parent=11 // pred_fallthru
          _
        // Predicated region
        $region93: #{blip3d_forward.3} parent=11 // pred_check
          %p766 = pneg %p508
        $region94: #{blip3d_forward.3} parent=11 // pred_check_branch
          %768 = sbr.rel (%p766) target = $region96
        $region95: #{blip3d_forward.3} parent=11 // pred_region
          _
        $region96: #{blip3d_forward.3} parent=11 // pred_fallthru
          _
        // Predicated region
        $region97: #{blip3d_forward.3} parent=11 // pred_check
          %p769 = pneg %p529
        $region98: #{blip3d_forward.3} parent=11 // pred_check_branch
          %771 = sbr.rel (%p769) target = $region100
        $region99: #{blip3d_forward.3} parent=11 // pred_region
          %773 = vsyncadd [#allocation18], 0
          %s774 = sshll.u32 %s22, 4
          %s775 = int_to_ptr.hbm [resolvable:$true] %s774
          %s776 = sshll.u32 [#allocation17], 4
          %s777 = int_to_ptr.vmem [resolvable:$true] %s776
          %782 = dma.hbm_to_vmem [thread:$0]  %s775, 256, %s777, [#allocation18], 64, 64, 4
        $region100: #{blip3d_forward.3} parent=11 // pred_fallthru
          _
        // Predicated region
        $region101: #{blip3d_forward.3} parent=11 // pred_check
          %p783 = pneg %p550
        $region102: #{blip3d_forward.3} parent=11 // pred_check_branch
          %785 = sbr.rel (%p783) target = $region104
        $region103: #{blip3d_forward.3} parent=11 // pred_region
          %787 = vsyncadd [#allocation18], 0
          %s789 = sshll.u32 %s23, 4
          %s790 = int_to_ptr.hbm [resolvable:$true] %s789
          %s791 = sshll.u32 [#allocation19], 4
          %s792 = int_to_ptr.vmem [resolvable:$true] %s791
          %794 = dma.hbm_to_vmem [thread:$0]  %s790, 16, %s792, [#allocation18]
        $region104: #{blip3d_forward.3} parent=11 // pred_fallthru
          _
      $region12: #{blip3d_forward.3} parent=5 // pred_fallthru
        _
      %p795 = scmp.lt.s32.totalorder %s41, 2
      // Predicated region
      $region105: #{blip3d_forward.3} parent=5 // pred_check
        %p796 = pneg %p795
      $region106: #{blip3d_forward.3} parent=5 // pred_check_branch
        %798 = sbr.rel (%p796) target = $region108
      $region107: #{blip3d_forward.3} parent=5 // pred_region
        // Predicated region
        $region109: #{blip3d_forward.3} parent=107 // pred_check
          %p799 = pneg %p82
        $region110: #{blip3d_forward.3} parent=107 // pred_check_branch
          %801 = sbr.rel (%p799) target = $region112
        $region111: #{blip3d_forward.3} parent=107 // pred_region
          %p802 = scmp.lt.s32.totalorder %s41, 1
          %s803 = scalar_select %p802, %s41, 1
          %s804 = smul.addr %s803, 8
          %s805 = scalar_lea.vmem %s1, %s804
        $region112: #{blip3d_forward.3} parent=107 // pred_fallthru
          _
      $region108: #{blip3d_forward.3} parent=5 // pred_fallthru
        _
      %p806 = scmp.le.s32.totalorder 1, %s41
      %p807 = scmp.lt.s32.totalorder %s41, 3
      %p808 = pnand %p806, %p807
      %p809 = pneg %p808
      // Predicated region
      $region113: #{blip3d_forward.3} parent=5 // pred_check
        _
      $region114: #{blip3d_forward.3} parent=5 // pred_check_branch
        %811 = sbr.rel (%p808) target = $region116
      $region115: #{blip3d_forward.3} parent=5 // pred_region
        %s812 = ssub.s32 %s41, 1
        // Predicated region
        $region117: #{blip3d_forward.3} parent=115 // pred_check
          %p813 = pneg %p235
        $region118: #{blip3d_forward.3} parent=115 // pred_check_branch
          %815 = sbr.rel (%p813) target = $region120
        $region119: #{blip3d_forward.3} parent=115 // pred_region
          %817 = dma.done [#allocation3], 256
        $region120: #{blip3d_forward.3} parent=115 // pred_fallthru
          _
        // Predicated region
        $region121: #{blip3d_forward.3} parent=115 // pred_check
          %p818 = pneg %p277
        $region122: #{blip3d_forward.3} parent=115 // pred_check_branch
          %820 = sbr.rel (%p818) target = $region124
        $region123: #{blip3d_forward.3} parent=115 // pred_region
          %822 = dma.done [#allocation6], 256
        $region124: #{blip3d_forward.3} parent=115 // pred_fallthru
          _
        // Predicated region
        $region125: #{blip3d_forward.3} parent=115 // pred_check
          %p823 = pneg %p298
        $region126: #{blip3d_forward.3} parent=115 // pred_check_branch
          %825 = sbr.rel (%p823) target = $region128
        $region127: #{blip3d_forward.3} parent=115 // pred_region
          %827 = dma.done [#allocation6], 16
        $region128: #{blip3d_forward.3} parent=115 // pred_fallthru
          _
        // Predicated region
        $region129: #{blip3d_forward.3} parent=115 // pred_check
          %p828 = pneg %p319
        $region130: #{blip3d_forward.3} parent=115 // pred_check_branch
          %830 = sbr.rel (%p828) target = $region132
        $region131: #{blip3d_forward.3} parent=115 // pred_region
          %832 = dma.done [#allocation9], 256
        $region132: #{blip3d_forward.3} parent=115 // pred_fallthru
          _
        // Predicated region
        $region133: #{blip3d_forward.3} parent=115 // pred_check
          %p833 = pneg %p340
        $region134: #{blip3d_forward.3} parent=115 // pred_check_branch
          %835 = sbr.rel (%p833) target = $region136
        $region135: #{blip3d_forward.3} parent=115 // pred_region
          %837 = dma.done [#allocation9], 16
        $region136: #{blip3d_forward.3} parent=115 // pred_fallthru
          _
        // Predicated region
        $region137: #{blip3d_forward.3} parent=115 // pred_check
          %p838 = pneg %p361
        $region138: #{blip3d_forward.3} parent=115 // pred_check_branch
          %840 = sbr.rel (%p838) target = $region140
        $region139: #{blip3d_forward.3} parent=115 // pred_region
          %842 = dma.done [#allocation12], 16
        $region140: #{blip3d_forward.3} parent=115 // pred_fallthru
          _
        // Predicated region
        $region141: #{blip3d_forward.3} parent=115 // pred_check
          %p843 = pneg %p382
        $region142: #{blip3d_forward.3} parent=115 // pred_check_branch
          %845 = sbr.rel (%p843) target = $region144
        $region143: #{blip3d_forward.3} parent=115 // pred_region
          %847 = dma.done [#allocation12], 16
        $region144: #{blip3d_forward.3} parent=115 // pred_fallthru
          _
        // Predicated region
        $region145: #{blip3d_forward.3} parent=115 // pred_check
          %p848 = pneg %p403
        $region146: #{blip3d_forward.3} parent=115 // pred_check_branch
          %850 = sbr.rel (%p848) target = $region148
        $region147: #{blip3d_forward.3} parent=115 // pred_region
          %852 = dma.done [#allocation15], 256
        $region148: #{blip3d_forward.3} parent=115 // pred_fallthru
          _
        // Predicated region
        $region149: #{blip3d_forward.3} parent=115 // pred_check
          %p853 = pneg %p424
        $region150: #{blip3d_forward.3} parent=115 // pred_check_branch
          %855 = sbr.rel (%p853) target = $region152
        $region151: #{blip3d_forward.3} parent=115 // pred_region
          %857 = dma.done [#allocation15], 16
        $region152: #{blip3d_forward.3} parent=115 // pred_fallthru
          _
        // Predicated region
        $region153: #{blip3d_forward.3} parent=115 // pred_check
          %p858 = pneg %p529
        $region154: #{blip3d_forward.3} parent=115 // pred_check_branch
          %860 = sbr.rel (%p858) target = $region156
        $region155: #{blip3d_forward.3} parent=115 // pred_region
          %862 = dma.done [#allocation18], 256
        $region156: #{blip3d_forward.3} parent=115 // pred_fallthru
          _
        // Predicated region
        $region157: #{blip3d_forward.3} parent=115 // pred_check
          %p863 = pneg %p550
        $region158: #{blip3d_forward.3} parent=115 // pred_check_branch
          %865 = sbr.rel (%p863) target = $region160
        $region159: #{blip3d_forward.3} parent=115 // pred_region
          %867 = dma.done [#allocation18], 16
        $region160: #{blip3d_forward.3} parent=115 // pred_fallthru
          _
        %p868 = pneg %p62
        %p869 = pneg %p59
        %p870 = scmp.lt.s32.totalorder %s46, 1
        %s871 = scalar_select %p870, %s46, 1
        %s872 = smul.addr %s871, 8
        %s873 = scalar_lea.vmem %s1, %s872
        %p874 = pneg %p88
        %p875 = pneg %p85
        %p876 = pneg %p109
        %p877 = pneg %p106
        %p878 = pneg %p130
        %p879 = pneg %p127
        %p880 = pneg %p151
        %p881 = pneg %p148
        %p882 = pneg %p172
        %p883 = pneg %p169
        %p884 = pneg %p193
        %p885 = pneg %p190
        %p886 = pneg %p214
        %p887 = pneg %p211
        %p888 = pneg %p235
        %p889 = pneg %p232
        %p890 = pneg %p256
        %p891 = pneg %p253
        %p892 = pneg %p277
        %p893 = pneg %p274
        %p894 = pneg %p298
        %p895 = pneg %p295
        %p896 = pneg %p319
        %p897 = pneg %p316
        %p898 = pneg %p340
        %p899 = pneg %p337
        %p900 = pneg %p361
        %p901 = pneg %p358
        %p902 = pneg %p382
        %p903 = pneg %p379
        %p904 = pneg %p403
        %p905 = pneg %p400
        %p906 = pneg %p424
        %p907 = pneg %p421
        %p908 = pneg %p445
        %p909 = pneg %p442
        %p910 = pneg %p466
        %p911 = pneg %p463
        %p912 = pneg %p487
        %p913 = pneg %p484
        %p914 = pneg %p508
        %p915 = pneg %p505
        %p916 = pneg %p529
        %p917 = pneg %p526
        %p918 = pneg %p550
        %p919 = pneg %p547
        %p920 = pneg %p576
        %p921 = pneg %p573
        %s922 = sand.u32 %s563, 1
        %s923 = scalar_lea.sflag [#allocation4], %s922
        %s924 = sand.u32 %s563, 1
        %s925 = smul.addr %s924, 8
        %s926 = scalar_lea.vmem [#allocation20], %s925
        %p927 = pneg %p602
        %p928 = pneg %p599
        %p929 = scmp.lt.s32.totalorder %s46, 1
        %s930 = scalar_select %p929, %s46, 1
        %s931 = smul.addr %s930, 8
        %s932 = scalar_lea.vmem %s25, %s931
        %p933 = scmp.lt.s32.totalorder %s46, 1
        %s934 = scalar_select %p933, %s46, 1
        %s935 = smul.addr %s934, 8
        %s936 = scalar_lea.vmem %s1, %s935
        %p937 = scmp.lt.s32.totalorder %s46, 1
        %s938 = scalar_select %p937, %s46, 1
        %s939 = smul.addr %s938, 8
        %s940 = scalar_lea.vmem %s25, %s939
        %v942 = vld [vmem:[%s0] sm:$0xff]
        %v943 = vld [vmem:[%s936] sm:$0xff]
        %v944 = vpack.c.bf16 %v942, %v942
        %v945 = vld [vmem:[%s2] sm:$0xf]
        %v946 = vld [vmem:[%s2 + $0x4] sm:$0xf]
        %v947 = vld [vmem:[%s2 + $0x8] sm:$0xf]
        %v948 = vld [vmem:[%s2 + $0xc] sm:$0xf]
        %v949 = vld [vmem:[%s3] sm:$0x1]
        %v951 = vperm.slane %v949, 0
        %v957 = vunpack.c.l.b16 %v945
        %v958 = vunpack.c.l.b16 %v946
        %v959 = vunpack.c.l.b16 %v947
        %v960 = vunpack.c.l.b16 %v948
        %v961 = vpack.c.b16 %v958, %v957
        %v962 = vpack.c.b16 %v960, %v959
        %vm965 = vcmask 261120
        %v967 = vsel %vm965, %v944, 0
        %969 = vmatpush.bf16.msra.mxu0 0
        %970 = vmatpush.bf16.msra.mxu0 0
        %971 = vmatpush.bf16.msra.mxu0 0
        %972 = vmatpush.bf16.msra.mxu0 0
        %973 = vmatpush.bf16.msra.mxu0 0
        %974 = vmatpush.bf16.msra.mxu0 0
        %975 = vmatpush.bf16.msra.mxu0 %v962
        %976 = vmatpush.bf16.msra.mxu0 %v961
        %977 = vmatmul.bf16.gmra.mxu0 %v967
        %v978 = vpop.f32.mrf.mxu0
        %v979 = vadd.f32 %v951, %v978
        %v980 = vpop.f32.mrf.mxu0
        %981 = vdwg.mxu0
        %v982 = vpack.c.bf16 %v979, %v979
        %984 = vrot.lane.b32.xlu0 %v979, 96
        %v985 = vpop.permute.xlu0 %984
        %987 = vxpose.xlu0.b32.start [1/16] %v985, 128
        %988 = vxpose.xlu0.b32.cont [2/16] 0.0, 128
        %989 = vxpose.xlu0.b32.cont [3/16] 0.0, 128
        %990 = vxpose.xlu0.b32.cont [4/16] 0.0, 128
        %991 = vxpose.xlu0.b32.cont [5/16] 0.0, 128
        %992 = vxpose.xlu0.b32.cont [6/16] 0.0, 128
        %993 = vxpose.xlu0.b32.cont [7/16] 0.0, 128
        %994 = vxpose.xlu0.b32.cont [8/16] 0.0, 128
        %995 = vxpose.xlu0.b32.cont [9/16] 0.0, 128
        %996 = vxpose.xlu0.b32.cont [10/16] 0.0, 128
        %997 = vxpose.xlu0.b32.cont [11/16] 0.0, 128
        %998 = vxpose.xlu0.b32.cont [12/16] 0.0, 128
        %999 = vxpose.xlu0.b32.cont [13/16] 0.0, 128
        %1000 = vxpose.xlu0.b32.cont [14/16] 0.0, 128
        %1001 = vxpose.xlu0.b32.cont [15/16] 0.0, 128
        %1002 = vxpose.xlu0.b32.end [16/16] 0.0, 128
        %v1003 = vpop.trf.xlu0
        %v1004 = vpop.trf.xlu0
        %v1005 = vpop.trf.xlu0
        %v1006 = vpop.trf.xlu0
        %v1007 = vpop.trf.xlu0
        %v1008 = vpop.trf.xlu0
        %v1009 = vpop.trf.xlu0
        %v1010 = vpop.trf.xlu0
        %v1011 = vpop.trf.xlu0
        %v1012 = vpop.trf.xlu0
        %v1013 = vpop.trf.xlu0
        %v1014 = vpop.trf.xlu0
        %v1015 = vpop.trf.xlu0
        %v1016 = vpop.trf.xlu0
        %v1017 = vpop.trf.xlu0
        %v1018 = vpop.trf.xlu0
        %v1019 = vpack.c.bf16 %v1003, %v1003
        %vm1020 = vcmask 64512
        %v1022 = vsel %vm1020, %v982, 0
        %vm1024 = vcmask 1043456
        %v1026 = vsel %vm1024, %v1019, 0
        %1028 = vmatpush.bf16.msra.mxu0 0
        %1029 = vmatpush.bf16.msra.mxu0 0
        %1030 = vmatpush.bf16.msra.mxu0 0
        %1031 = vmatpush.bf16.msra.mxu0 0
        %1032 = vmatpush.bf16.msra.mxu0 0
        %1033 = vmatpush.bf16.msra.mxu0 0
        %1034 = vmatpush.bf16.msra.mxu0 0
        %1035 = vmatpush.bf16.msra.mxu0 %v1026
        %1036 = vmatmul.bf16.gmra.mxu0 %v1022
        %v1037 = vpop.f32.mrf.mxu0
        %v1038 = vadd.f32 0.0, %v1037
        %v1039 = vpop.f32.mrf.mxu0
        %1040 = vdwg.mxu0
        %v1041 = vmul.f32 %v1038, 0.35355338
        %v1042 = vsel %vm1020, %v1041, -inf
        %1043 = vmax.xlane.f32.xlu0 %v1042
        %v1044 = vpop.xlane.xlu0 %1043
        %v1045 = vsub.f32 %v1041, %v1044
        %v1046 = vmul.f32 %v1045, 1.442695
        %v1047 = vpow.pop %v1046
        %v1048 = vsel %vm1020, %v1047, 0.0
        %1049 = vadd.xlane.f32.xlu0 %v1048
        %v1050 = vpop.xlane.xlu0 %1049
        %v1051 = vrcp.pop %v1050
        %v1052 = vmul.f32 %v1047, %v1051
        %v1053 = vpack.c.bf16 %v1052, %v1052
        %1055 = vrot.lane.b32.xlu0 %v982, 64
        %v1056 = vpop.permute.xlu0 %1055
        %v1058 = vsel %vm1020, %v1053, 0
        %v1061 = vsel %vm1024, %v1056, 0
        %1063 = vmatpush.bf16.msra.mxu0 0
        %1064 = vmatpush.bf16.msra.mxu0 0
        %1065 = vmatpush.bf16.msra.mxu0 0
        %1066 = vmatpush.bf16.msra.mxu0 0
        %1067 = vmatpush.bf16.msra.mxu0 0
        %1068 = vmatpush.bf16.msra.mxu0 0
        %1069 = vmatpush.bf16.msra.mxu0 0
        %1070 = vmatpush.bf16.msra.mxu0 %v1061
        %1071 = vmatmul.bf16.gmra.mxu0 %v1058
        %v1072 = vpop.f32.mrf.mxu0
        %v1073 = vadd.f32 0.0, %v1072
        %v1074 = vpop.f32.mrf.mxu0
        %1075 = vdwg.mxu0
        %1076 = vrot.lane.b32.xlu0 %v979, 88
        %v1077 = vpop.permute.xlu0 %1076
        %1079 = vxpose.xlu0.b32.start [1/16] %v1077, 128
        %1080 = vxpose.xlu0.b32.cont [2/16] 0.0, 128
        %1081 = vxpose.xlu0.b32.cont [3/16] 0.0, 128
        %1082 = vxpose.xlu0.b32.cont [4/16] 0.0, 128
        %1083 = vxpose.xlu0.b32.cont [5/16] 0.0, 128
        %1084 = vxpose.xlu0.b32.cont [6/16] 0.0, 128
        %1085 = vxpose.xlu0.b32.cont [7/16] 0.0, 128
        %1086 = vxpose.xlu0.b32.cont [8/16] 0.0, 128
        %1087 = vxpose.xlu0.b32.cont [9/16] 0.0, 128
        %1088 = vxpose.xlu0.b32.cont [10/16] 0.0, 128
        %1089 = vxpose.xlu0.b32.cont [11/16] 0.0, 128
        %1090 = vxpose.xlu0.b32.cont [12/16] 0.0, 128
        %1091 = vxpose.xlu0.b32.cont [13/16] 0.0, 128
        %1092 = vxpose.xlu0.b32.cont [14/16] 0.0, 128
        %1093 = vxpose.xlu0.b32.cont [15/16] 0.0, 128
        %1094 = vxpose.xlu0.b32.end [16/16] 0.0, 128
        %v1095 = vpop.trf.xlu0
        %v1096 = vpop.trf.xlu0
        %v1097 = vpop.trf.xlu0
        %v1098 = vpop.trf.xlu0
        %v1099 = vpop.trf.xlu0
        %v1100 = vpop.trf.xlu0
        %v1101 = vpop.trf.xlu0
        %v1102 = vpop.trf.xlu0
        %v1103 = vpop.trf.xlu0
        %v1104 = vpop.trf.xlu0
        %v1105 = vpop.trf.xlu0
        %v1106 = vpop.trf.xlu0
        %v1107 = vpop.trf.xlu0
        %v1108 = vpop.trf.xlu0
        %v1109 = vpop.trf.xlu0
        %v1110 = vpop.trf.xlu0
        %v1111 = vpack.c.bf16 %v1095, %v1095
        %1112 = vrot.lane.b32.xlu0 %v982, 120
        %v1113 = vpop.permute.xlu0 %1112
        %v1115 = vsel %vm1020, %v1113, 0
        %v1118 = vsel %vm1024, %v1111, 0
        %1120 = vmatpush.bf16.msra.mxu0 0
        %1121 = vmatpush.bf16.msra.mxu0 0
        %1122 = vmatpush.bf16.msra.mxu0 0
        %1123 = vmatpush.bf16.msra.mxu0 0
        %1124 = vmatpush.bf16.msra.mxu0 0
        %1125 = vmatpush.bf16.msra.mxu0 0
        %1126 = vmatpush.bf16.msra.mxu0 0
        %1127 = vmatpush.bf16.msra.mxu0 %v1118
        %1128 = vmatmul.bf16.gmra.mxu0 %v1115
        %v1129 = vpop.f32.mrf.mxu0
        %v1130 = vadd.f32 0.0, %v1129
        %v1131 = vpop.f32.mrf.mxu0
        %1132 = vdwg.mxu0
        %v1133 = vmul.f32 %v1130, 0.35355338
        %v1134 = vsel %vm1020, %v1133, -inf
        %1135 = vmax.xlane.f32.xlu0 %v1134
        %v1136 = vpop.xlane.xlu0 %1135
        %v1137 = vsub.f32 %v1133, %v1136
        %v1138 = vmul.f32 %v1137, 1.442695
        %v1139 = vpow.pop %v1138
        %v1140 = vsel %vm1020, %v1139, 0.0
        %1141 = vadd.xlane.f32.xlu0 %v1140
        %v1142 = vpop.xlane.xlu0 %1141
        %v1143 = vrcp.pop %v1142
        %v1144 = vmul.f32 %v1139, %v1143
        %v1145 = vpack.c.bf16 %v1144, %v1144
        %1146 = vrot.lane.b32.xlu0 %v982, 56
        %v1147 = vpop.permute.xlu0 %1146
        %v1149 = vsel %vm1020, %v1145, 0
        %v1152 = vsel %vm1024, %v1147, 0
        %1154 = vmatpush.bf16.msra.mxu0 0
        %1155 = vmatpush.bf16.msra.mxu0 0
        %1156 = vmatpush.bf16.msra.mxu0 0
        %1157 = vmatpush.bf16.msra.mxu0 0
        %1158 = vmatpush.bf16.msra.mxu0 0
        %1159 = vmatpush.bf16.msra.mxu0 0
        %1160 = vmatpush.bf16.msra.mxu0 0
        %1161 = vmatpush.bf16.msra.mxu0 %v1152
        %1162 = vmatmul.bf16.gmra.mxu0 %v1149
        %v1163 = vpop.f32.mrf.mxu0
        %v1164 = vadd.f32 0.0, %v1163
        %v1165 = vpop.f32.mrf.mxu0
        %1166 = vdwg.mxu0
        %1167 = vrot.lane.b32.xlu0 %v979, 80
        %v1168 = vpop.permute.xlu0 %1167
        %1170 = vxpose.xlu0.b32.start [1/16] %v1168, 128
        %1171 = vxpose.xlu0.b32.cont [2/16] 0.0, 128
        %1172 = vxpose.xlu0.b32.cont [3/16] 0.0, 128
        %1173 = vxpose.xlu0.b32.cont [4/16] 0.0, 128
        %1174 = vxpose.xlu0.b32.cont [5/16] 0.0, 128
        %1175 = vxpose.xlu0.b32.cont [6/16] 0.0, 128
        %1176 = vxpose.xlu0.b32.cont [7/16] 0.0, 128
        %1177 = vxpose.xlu0.b32.cont [8/16] 0.0, 128
        %1178 = vxpose.xlu0.b32.cont [9/16] 0.0, 128
        %1179 = vxpose.xlu0.b32.cont [10/16] 0.0, 128
        %1180 = vxpose.xlu0.b32.cont [11/16] 0.0, 128
        %1181 = vxpose.xlu0.b32.cont [12/16] 0.0, 128
        %1182 = vxpose.xlu0.b32.cont [13/16] 0.0, 128
        %1183 = vxpose.xlu0.b32.cont [14/16] 0.0, 128
        %1184 = vxpose.xlu0.b32.cont [15/16] 0.0, 128
        %1185 = vxpose.xlu0.b32.end [16/16] 0.0, 128
        %v1186 = vpop.trf.xlu0
        %v1187 = vpop.trf.xlu0
        %v1188 = vpop.trf.xlu0
        %v1189 = vpop.trf.xlu0
        %v1190 = vpop.trf.xlu0
        %v1191 = vpop.trf.xlu0
        %v1192 = vpop.trf.xlu0
        %v1193 = vpop.trf.xlu0
        %v1194 = vpop.trf.xlu0
        %v1195 = vpop.trf.xlu0
        %v1196 = vpop.trf.xlu0
        %v1197 = vpop.trf.xlu0
        %v1198 = vpop.trf.xlu0
        %v1199 = vpop.trf.xlu0
        %v1200 = vpop.trf.xlu0
        %v1201 = vpop.trf.xlu0
        %v1202 = vpack.c.bf16 %v1186, %v1186
        %1203 = vrot.lane.b32.xlu0 %v982, 112
        %v1204 = vpop.permute.xlu0 %1203
        %v1206 = vsel %vm1020, %v1204, 0
        %v1209 = vsel %vm1024, %v1202, 0
        %1211 = vmatpush.bf16.msra.mxu0 0
        %1212 = vmatpush.bf16.msra.mxu0 0
        %1213 = vmatpush.bf16.msra.mxu0 0
        %1214 = vmatpush.bf16.msra.mxu0 0
        %1215 = vmatpush.bf16.msra.mxu0 0
        %1216 = vmatpush.bf16.msra.mxu0 0
        %1217 = vmatpush.bf16.msra.mxu0 0
        %1218 = vmatpush.bf16.msra.mxu0 %v1209
        %1219 = vmatmul.bf16.gmra.mxu0 %v1206
        %v1220 = vpop.f32.mrf.mxu0
        %v1221 = vadd.f32 0.0, %v1220
        %v1222 = vpop.f32.mrf.mxu0
        %1223 = vdwg.mxu0
        %v1224 = vmul.f32 %v1221, 0.35355338
        %v1225 = vsel %vm1020, %v1224, -inf
        %1226 = vmax.xlane.f32.xlu0 %v1225
        %v1227 = vpop.xlane.xlu0 %1226
        %v1228 = vsub.f32 %v1224, %v1227
        %v1229 = vmul.f32 %v1228, 1.442695
        %v1230 = vpow.pop %v1229
        %v1231 = vsel %vm1020, %v1230, 0.0
        %1232 = vadd.xlane.f32.xlu0 %v1231
        %v1233 = vpop.xlane.xlu0 %1232
        %v1234 = vrcp.pop %v1233
        %v1235 = vmul.f32 %v1230, %v1234
        %v1236 = vpack.c.bf16 %v1235, %v1235
        %1237 = vrot.lane.b32.xlu0 %v982, 48
        %v1238 = vpop.permute.xlu0 %1237
        %v1240 = vsel %vm1020, %v1236, 0
        %v1243 = vsel %vm1024, %v1238, 0
        %1245 = vmatpush.bf16.msra.mxu0 0
        %1246 = vmatpush.bf16.msra.mxu0 0
        %1247 = vmatpush.bf16.msra.mxu0 0
        %1248 = vmatpush.bf16.msra.mxu0 0
        %1249 = vmatpush.bf16.msra.mxu0 0
        %1250 = vmatpush.bf16.msra.mxu0 0
        %1251 = vmatpush.bf16.msra.mxu0 0
        %1252 = vmatpush.bf16.msra.mxu0 %v1243
        %1253 = vmatmul.bf16.gmra.mxu0 %v1240
        %v1254 = vpop.f32.mrf.mxu0
        %v1255 = vadd.f32 0.0, %v1254
        %v1256 = vpop.f32.mrf.mxu0
        %1257 = vdwg.mxu0
        %1258 = vrot.lane.b32.xlu0 %v979, 72
        %v1259 = vpop.permute.xlu0 %1258
        %1261 = vxpose.xlu0.b32.start [1/16] %v1259, 128
        %1262 = vxpose.xlu0.b32.cont [2/16] 0.0, 128
        %1263 = vxpose.xlu0.b32.cont [3/16] 0.0, 128
        %1264 = vxpose.xlu0.b32.cont [4/16] 0.0, 128
        %1265 = vxpose.xlu0.b32.cont [5/16] 0.0, 128
        %1266 = vxpose.xlu0.b32.cont [6/16] 0.0, 128
        %1267 = vxpose.xlu0.b32.cont [7/16] 0.0, 128
        %1268 = vxpose.xlu0.b32.cont [8/16] 0.0, 128
        %1269 = vxpose.xlu0.b32.cont [9/16] 0.0, 128
        %1270 = vxpose.xlu0.b32.cont [10/16] 0.0, 128
        %1271 = vxpose.xlu0.b32.cont [11/16] 0.0, 128
        %1272 = vxpose.xlu0.b32.cont [12/16] 0.0, 128
        %1273 = vxpose.xlu0.b32.cont [13/16] 0.0, 128
        %1274 = vxpose.xlu0.b32.cont [14/16] 0.0, 128
        %1275 = vxpose.xlu0.b32.cont [15/16] 0.0, 128
        %1276 = vxpose.xlu0.b32.end [16/16] 0.0, 128
        %v1277 = vpop.trf.xlu0
        %v1278 = vpop.trf.xlu0
        %v1279 = vpop.trf.xlu0
        %v1280 = vpop.trf.xlu0
        %v1281 = vpop.trf.xlu0
        %v1282 = vpop.trf.xlu0
        %v1283 = vpop.trf.xlu0
        %v1284 = vpop.trf.xlu0
        %v1285 = vpop.trf.xlu0
        %v1286 = vpop.trf.xlu0
        %v1287 = vpop.trf.xlu0
        %v1288 = vpop.trf.xlu0
        %v1289 = vpop.trf.xlu0
        %v1290 = vpop.trf.xlu0
        %v1291 = vpop.trf.xlu0
        %v1292 = vpop.trf.xlu0
        %v1293 = vpack.c.bf16 %v1277, %v1277
        %1294 = vrot.lane.b32.xlu0 %v982, 104
        %v1295 = vpop.permute.xlu0 %1294
        %v1297 = vsel %vm1020, %v1295, 0
        %v1300 = vsel %vm1024, %v1293, 0
        %1302 = vmatpush.bf16.msra.mxu0 0
        %1303 = vmatpush.bf16.msra.mxu0 0
        %1304 = vmatpush.bf16.msra.mxu0 0
        %1305 = vmatpush.bf16.msra.mxu0 0
        %1306 = vmatpush.bf16.msra.mxu0 0
        %1307 = vmatpush.bf16.msra.mxu0 0
        %1308 = vmatpush.bf16.msra.mxu0 0
        %1309 = vmatpush.bf16.msra.mxu0 %v1300
        %1310 = vmatmul.bf16.gmra.mxu0 %v1297
        %v1311 = vpop.f32.mrf.mxu0
        %v1312 = vadd.f32 0.0, %v1311
        %v1313 = vpop.f32.mrf.mxu0
        %1314 = vdwg.mxu0
        %v1315 = vmul.f32 %v1312, 0.35355338
        %v1316 = vsel %vm1020, %v1315, -inf
        %1317 = vmax.xlane.f32.xlu0 %v1316
        %v1318 = vpop.xlane.xlu0 %1317
        %v1319 = vsub.f32 %v1315, %v1318
        %v1320 = vmul.f32 %v1319, 1.442695
        %v1321 = vpow.pop %v1320
        %v1322 = vsel %vm1020, %v1321, 0.0
        %1323 = vadd.xlane.f32.xlu0 %v1322
        %v1324 = vpop.xlane.xlu0 %1323
        %v1325 = vrcp.pop %v1324
        %v1326 = vmul.f32 %v1321, %v1325
        %v1327 = vpack.c.bf16 %v1326, %v1326
        %1328 = vrot.lane.b32.xlu0 %v982, 40
        %v1329 = vpop.permute.xlu0 %1328
        %v1331 = vsel %vm1020, %v1327, 0
        %v1334 = vsel %vm1024, %v1329, 0
        %1336 = vmatpush.bf16.msra.mxu0 0
        %1337 = vmatpush.bf16.msra.mxu0 0
        %1338 = vmatpush.bf16.msra.mxu0 0
        %1339 = vmatpush.bf16.msra.mxu0 0
        %1340 = vmatpush.bf16.msra.mxu0 0
        %1341 = vmatpush.bf16.msra.mxu0 0
        %1342 = vmatpush.bf16.msra.mxu0 0
        %1343 = vmatpush.bf16.msra.mxu0 %v1334
        %1344 = vmatmul.bf16.gmra.mxu0 %v1331
        %v1345 = vpop.f32.mrf.mxu0
        %v1346 = vadd.f32 0.0, %v1345
        %v1347 = vpop.f32.mrf.mxu0
        %1348 = vdwg.mxu0
        %1350 = vrot.lane.b32.xlu0 %v1164, 8
        %v1351 = vpop.permute.xlu0 %1350
        %1354 = vrot.lane.b32.xlu0 %v1255, 16
        %v1355 = vpop.permute.xlu0 %1354
        %1358 = vrot.lane.b32.xlu0 %v1346, 24
        %v1359 = vpop.permute.xlu0 %1358
        %v1361 = vsel %vm1020, %v1073, %v1351
        %vm1362 = vcmask 130048
        %v1363 = vsel %vm1362, %v1361, %v1355
        %vm1364 = vcmask 195584
        %v1365 = vsel %vm1364, %v1363, %v1359
        %v1366 = vpack.c.bf16 %v1365, %v1365
        %v1367 = vld [vmem:[%s4] sm:$0xf]
        %v1368 = vld [vmem:[%s4 + $0x4] sm:$0xf]
        %v1369 = vld [vmem:[%s4 + $0x8] sm:$0xf]
        %v1370 = vld [vmem:[%s4 + $0xc] sm:$0xf]
        %v1371 = vld [vmem:[%s5] sm:$0x1]
        %v1373 = vperm.slane %v1371, 0
        %v1379 = vunpack.c.l.b16 %v1367
        %v1380 = vunpack.c.l.b16 %v1368
        %v1381 = vunpack.c.l.b16 %v1369
        %v1382 = vunpack.c.l.b16 %v1370
        %v1383 = vpack.c.b16 %v1380, %v1379
        %v1384 = vpack.c.b16 %v1382, %v1381
        %v1388 = vsel %vm965, %v1366, 0
        %1390 = vmatpush.bf16.msra.mxu0 0
        %1391 = vmatpush.bf16.msra.mxu0 0
        %1392 = vmatpush.bf16.msra.mxu0 0
        %1393 = vmatpush.bf16.msra.mxu0 0
        %1394 = vmatpush.bf16.msra.mxu0 0
        %1395 = vmatpush.bf16.msra.mxu0 0
        %1396 = vmatpush.bf16.msra.mxu0 %v1384
        %1397 = vmatpush.bf16.msra.mxu0 %v1383
        %1398 = vmatmul.bf16.gmra.mxu0 %v1388
        %v1399 = vpop.f32.mrf.mxu0
        %v1400 = vadd.f32 %v1373, %v1399
        %v1401 = vpop.f32.mrf.mxu0
        %1402 = vdwg.mxu0
        %v1403 = vadd.f32 %v942, %v1400
        %v1404 = vld [vmem:[%s6] sm:$0x1]
        %v1405 = vld [vmem:[%s7] sm:$0x1]
        %v1406 = vsel %vm965, %v1403, 0.0
        %1407 = vadd.xlane.f32.xlu0 %v1406
        %v1408 = vpop.xlane.xlu0 %1407
        %v1409 = vrcp.pop 32.0
        %v1410 = vmul.f32 32.0, %v1409
        %v1411 = vsub.f32 1.0, %v1410
        %v1412 = vmul.f32 %v1409, %v1411
        %v1413 = vadd.f32 %v1409, %v1412
        %vm1414 = vweird.f32 %v1409
        %v1415 = vsel %vm1414, %v1409, %v1413
        %v1416 = vmul.f32 %v1408, %v1415
        %v1417 = vsub.f32 %v1403, %v1416
        %v1418 = vmul.f32 %v1417, %v1417
        %v1419 = vsel %vm965, %v1418, 0.0
        %1420 = vadd.xlane.f32.xlu0 %v1419
        %v1421 = vpop.xlane.xlu0 %1420
        %v1422 = vmul.f32 %v1421, %v1415
        %v1423 = vadd.f32 %v1422, 1e-05
        %v1424 = vrsqrt.pop %v1423
        %v1425 = vmul.f32 %v1424, %v1423
        %v1426 = vmul.f32 %v1425, %v1424
        %v1427 = vmul.f32 0.5, %v1426
        %v1428 = vsub.f32 1.5, %v1427
        %v1429 = vmul.f32 %v1424, %v1428
        %vm1430 = vweird.f32 %v1423
        %vm1431 = vweird.f32 %v1424
        %vm1432 = vmor %vm1430, %vm1431
        %v1433 = vsel %vm1432, %v1424, %v1429
        %v1434 = vmul.f32 %v1417, %v1433
        %v1436 = vperm.slane %v1404, 0
        %v1438 = vmul.f32 %v1434, %v1436
        %v1440 = vperm.slane %v1405, 0
        %v1442 = vadd.f32 %v1438, %v1440
        %v1443 = vpack.c.bf16 %v1442, %v1442
        %v1444 = vld [vmem:[#allocation2] sm:$0xf]
        %v1445 = vld [vmem:[#allocation2 + $0x4] sm:$0xf]
        %v1446 = vld [vmem:[#allocation2 + $0x8] sm:$0xf]
        %v1447 = vld [vmem:[#allocation2 + $0xc] sm:$0xf]
        %v1448 = vld [vmem:[%s9] sm:$0x1]
        %v1450 = vperm.slane %v1448, 0
        %v1456 = vunpack.c.l.b16 %v1444
        %v1457 = vunpack.c.l.b16 %v1445
        %v1458 = vunpack.c.l.b16 %v1446
        %v1459 = vunpack.c.l.b16 %v1447
        %v1460 = vpack.c.b16 %v1457, %v1456
        %v1461 = vpack.c.b16 %v1459, %v1458
        %v1465 = vsel %vm965, %v1443, 0
        %1467 = vmatpush.bf16.msra.mxu0 0
        %1468 = vmatpush.bf16.msra.mxu0 0
        %1469 = vmatpush.bf16.msra.mxu0 0
        %1470 = vmatpush.bf16.msra.mxu0 0
        %1471 = vmatpush.bf16.msra.mxu0 0
        %1472 = vmatpush.bf16.msra.mxu0 0
        %1473 = vmatpush.bf16.msra.mxu0 %v1461
        %1474 = vmatpush.bf16.msra.mxu0 %v1460
        %1475 = vmatmul.bf16.gmra.mxu0 %v1465
        %v1476 = vpop.f32.mrf.mxu0
        %v1477 = vadd.f32 %v1450, %v1476
        %v1478 = vpop.f32.mrf.mxu0
        %1479 = vdwg.mxu0
        %v1480 = vpack.c.bf16 %v943, %v943
        %v1481 = vld [vmem:[#allocation5] sm:$0xf]
        %v1482 = vld [vmem:[#allocation5 + $0x4] sm:$0xf]
        %v1483 = vld [vmem:[#allocation5 + $0x8] sm:$0xf]
        %v1484 = vld [vmem:[#allocation5 + $0xc] sm:$0xf]
        %v1485 = vld [vmem:[#allocation7] sm:$0x1]
        %v1487 = vperm.slane %v1485, 0
        %v1493 = vunpack.c.l.b16 %v1481
        %v1494 = vunpack.c.l.b16 %v1482
        %v1495 = vunpack.c.l.b16 %v1483
        %v1496 = vunpack.c.l.b16 %v1484
        %v1497 = vpack.c.b16 %v1494, %v1493
        %v1498 = vpack.c.b16 %v1496, %v1495
        %v1502 = vsel %vm965, %v1480, 0
        %1504 = vmatpush.bf16.msra.mxu0 0
        %1505 = vmatpush.bf16.msra.mxu0 0
        %1506 = vmatpush.bf16.msra.mxu0 0
        %1507 = vmatpush.bf16.msra.mxu0 0
        %1508 = vmatpush.bf16.msra.mxu0 0
        %1509 = vmatpush.bf16.msra.mxu0 0
        %1510 = vmatpush.bf16.msra.mxu0 %v1498
        %1511 = vmatpush.bf16.msra.mxu0 %v1497
        %1512 = vmatmul.bf16.gmra.mxu0 %v1502
        %v1513 = vpop.f32.mrf.mxu0
        %v1514 = vadd.f32 %v1487, %v1513
        %v1515 = vpop.f32.mrf.mxu0
        %1516 = vdwg.mxu0
        %v1517 = vpack.c.bf16 %v1477, %v1477
        %1518 = vxpose.xlu0.b32.start [1/16] %v1514, 128
        %1519 = vxpose.xlu0.b32.cont [2/16] 0.0, 128
        %1520 = vxpose.xlu0.b32.cont [3/16] 0.0, 128
        %1521 = vxpose.xlu0.b32.cont [4/16] 0.0, 128
        %1522 = vxpose.xlu0.b32.cont [5/16] 0.0, 128
        %1523 = vxpose.xlu0.b32.cont [6/16] 0.0, 128
        %1524 = vxpose.xlu0.b32.cont [7/16] 0.0, 128
        %1525 = vxpose.xlu0.b32.cont [8/16] 0.0, 128
        %1526 = vxpose.xlu0.b32.cont [9/16] 0.0, 128
        %1527 = vxpose.xlu0.b32.cont [10/16] 0.0, 128
        %1528 = vxpose.xlu0.b32.cont [11/16] 0.0, 128
        %1529 = vxpose.xlu0.b32.cont [12/16] 0.0, 128
        %1530 = vxpose.xlu0.b32.cont [13/16] 0.0, 128
        %1531 = vxpose.xlu0.b32.cont [14/16] 0.0, 128
        %1532 = vxpose.xlu0.b32.cont [15/16] 0.0, 128
        %1533 = vxpose.xlu0.b32.end [16/16] 0.0, 128
        %v1534 = vpop.trf.xlu0
        %v1535 = vpop.trf.xlu0
        %v1536 = vpop.trf.xlu0
        %v1537 = vpop.trf.xlu0
        %v1538 = vpop.trf.xlu0
        %v1539 = vpop.trf.xlu0
        %v1540 = vpop.trf.xlu0
        %v1541 = vpop.trf.xlu0
        %v1542 = vpop.trf.xlu0
        %v1543 = vpop.trf.xlu0
        %v1544 = vpop.trf.xlu0
        %v1545 = vpop.trf.xlu0
        %v1546 = vpop.trf.xlu0
        %v1547 = vpop.trf.xlu0
        %v1548 = vpop.trf.xlu0
        %v1549 = vpop.trf.xlu0
        %v1550 = vpack.c.bf16 %v1534, %v1534
        %v1552 = vsel %vm1020, %v1517, 0
        %v1555 = vsel %vm1024, %v1550, 0
        %1557 = vmatpush.bf16.msra.mxu0 0
        %1558 = vmatpush.bf16.msra.mxu0 0
        %1559 = vmatpush.bf16.msra.mxu0 0
        %1560 = vmatpush.bf16.msra.mxu0 0
        %1561 = vmatpush.bf16.msra.mxu0 0
        %1562 = vmatpush.bf16.msra.mxu0 0
        %1563 = vmatpush.bf16.msra.mxu0 0
        %1564 = vmatpush.bf16.msra.mxu0 %v1555
        %1565 = vmatmul.bf16.gmra.mxu0 %v1552
        %v1566 = vpop.f32.mrf.mxu0
        %v1567 = vadd.f32 0.0, %v1566
        %v1568 = vpop.f32.mrf.mxu0
        %1569 = vdwg.mxu0
        %v1570 = vmul.f32 %v1567, 0.35355338
        %v1571 = vsel %vm1020, %v1570, -inf
        %1572 = vmax.xlane.f32.xlu0 %v1571
        %v1573 = vpop.xlane.xlu0 %1572
        %v1574 = vsub.f32 %v1570, %v1573
        %v1575 = vmul.f32 %v1574, 1.442695
        %v1576 = vpow.pop %v1575
        %v1577 = vsel %vm1020, %v1576, 0.0
        %1578 = vadd.xlane.f32.xlu0 %v1577
        %v1579 = vpop.xlane.xlu0 %1578
        %v1580 = vrcp.pop %v1579
        %v1581 = vmul.f32 %v1576, %v1580
        %v1582 = vpack.c.bf16 %v1581, %v1581
        %v1583 = vpack.c.bf16 %v1514, %v1514
        %1585 = vrot.lane.b32.xlu0 %v1583, 96
        %v1586 = vpop.permute.xlu0 %1585
        %v1588 = vsel %vm1020, %v1582, 0
        %v1591 = vsel %vm1024, %v1586, 0
        %1593 = vmatpush.bf16.msra.mxu0 0
        %1594 = vmatpush.bf16.msra.mxu0 0
        %1595 = vmatpush.bf16.msra.mxu0 0
        %1596 = vmatpush.bf16.msra.mxu0 0
        %1597 = vmatpush.bf16.msra.mxu0 0
        %1598 = vmatpush.bf16.msra.mxu0 0
        %1599 = vmatpush.bf16.msra.mxu0 0
        %1600 = vmatpush.bf16.msra.mxu0 %v1591
        %1601 = vmatmul.bf16.gmra.mxu0 %v1588
        %v1602 = vpop.f32.mrf.mxu0
        %v1603 = vadd.f32 0.0, %v1602
        %v1604 = vpop.f32.mrf.mxu0
        %1605 = vdwg.mxu0
        %1607 = vrot.lane.b32.xlu0 %v1514, 120
        %v1608 = vpop.permute.xlu0 %1607
        %1610 = vxpose.xlu0.b32.start [1/16] %v1608, 128
        %1611 = vxpose.xlu0.b32.cont [2/16] 0.0, 128
        %1612 = vxpose.xlu0.b32.cont [3/16] 0.0, 128
        %1613 = vxpose.xlu0.b32.cont [4/16] 0.0, 128
        %1614 = vxpose.xlu0.b32.cont [5/16] 0.0, 128
        %1615 = vxpose.xlu0.b32.cont [6/16] 0.0, 128
        %1616 = vxpose.xlu0.b32.cont [7/16] 0.0, 128
        %1617 = vxpose.xlu0.b32.cont [8/16] 0.0, 128
        %1618 = vxpose.xlu0.b32.cont [9/16] 0.0, 128
        %1619 = vxpose.xlu0.b32.cont [10/16] 0.0, 128
        %1620 = vxpose.xlu0.b32.cont [11/16] 0.0, 128
        %1621 = vxpose.xlu0.b32.cont [12/16] 0.0, 128
        %1622 = vxpose.xlu0.b32.cont [13/16] 0.0, 128
        %1623 = vxpose.xlu0.b32.cont [14/16] 0.0, 128
        %1624 = vxpose.xlu0.b32.cont [15/16] 0.0, 128
        %1625 = vxpose.xlu0.b32.end [16/16] 0.0, 128
        %v1626 = vpop.trf.xlu0
        %v1627 = vpop.trf.xlu0
        %v1628 = vpop.trf.xlu0
        %v1629 = vpop.trf.xlu0
        %v1630 = vpop.trf.xlu0
        %v1631 = vpop.trf.xlu0
        %v1632 = vpop.trf.xlu0
        %v1633 = vpop.trf.xlu0
        %v1634 = vpop.trf.xlu0
        %v1635 = vpop.trf.xlu0
        %v1636 = vpop.trf.xlu0
        %v1637 = vpop.trf.xlu0
        %v1638 = vpop.trf.xlu0
        %v1639 = vpop.trf.xlu0
        %v1640 = vpop.trf.xlu0
        %v1641 = vpop.trf.xlu0
        %v1642 = vpack.c.bf16 %v1626, %v1626
        %1644 = vrot.lane.b32.xlu0 %v1517, 120
        %v1645 = vpop.permute.xlu0 %1644
        %v1647 = vsel %vm1020, %v1645, 0
        %v1650 = vsel %vm1024, %v1642, 0
        %1652 = vmatpush.bf16.msra.mxu0 0
        %1653 = vmatpush.bf16.msra.mxu0 0
        %1654 = vmatpush.bf16.msra.mxu0 0
        %1655 = vmatpush.bf16.msra.mxu0 0
        %1656 = vmatpush.bf16.msra.mxu0 0
        %1657 = vmatpush.bf16.msra.mxu0 0
        %1658 = vmatpush.bf16.msra.mxu0 0
        %1659 = vmatpush.bf16.msra.mxu0 %v1650
        %1660 = vmatmul.bf16.gmra.mxu0 %v1647
        %v1661 = vpop.f32.mrf.mxu0
        %v1662 = vadd.f32 0.0, %v1661
        %v1663 = vpop.f32.mrf.mxu0
        %1664 = vdwg.mxu0
        %v1665 = vmul.f32 %v1662, 0.35355338
        %v1666 = vsel %vm1020, %v1665, -inf
        %1667 = vmax.xlane.f32.xlu0 %v1666
        %v1668 = vpop.xlane.xlu0 %1667
        %v1669 = vsub.f32 %v1665, %v1668
        %v1670 = vmul.f32 %v1669, 1.442695
        %v1671 = vpow.pop %v1670
        %v1672 = vsel %vm1020, %v1671, 0.0
        %1673 = vadd.xlane.f32.xlu0 %v1672
        %v1674 = vpop.xlane.xlu0 %1673
        %v1675 = vrcp.pop %v1674
        %v1676 = vmul.f32 %v1671, %v1675
        %v1677 = vpack.c.bf16 %v1676, %v1676
        %1678 = vrot.lane.b32.xlu0 %v1583, 88
        %v1679 = vpop.permute.xlu0 %1678
        %v1681 = vsel %vm1020, %v1677, 0
        %v1684 = vsel %vm1024, %v1679, 0
        %1686 = vmatpush.bf16.msra.mxu0 0
        %1687 = vmatpush.bf16.msra.mxu0 0
        %1688 = vmatpush.bf16.msra.mxu0 0
        %1689 = vmatpush.bf16.msra.mxu0 0
        %1690 = vmatpush.bf16.msra.mxu0 0
        %1691 = vmatpush.bf16.msra.mxu0 0
        %1692 = vmatpush.bf16.msra.mxu0 0
        %1693 = vmatpush.bf16.msra.mxu0 %v1684
        %1694 = vmatmul.bf16.gmra.mxu0 %v1681
        %v1695 = vpop.f32.mrf.mxu0
        %v1696 = vadd.f32 0.0, %v1695
        %v1697 = vpop.f32.mrf.mxu0
        %1698 = vdwg.mxu0
        %1699 = vrot.lane.b32.xlu0 %v1514, 112
        %v1700 = vpop.permute.xlu0 %1699
        %1702 = vxpose.xlu0.b32.start [1/16] %v1700, 128
        %1703 = vxpose.xlu0.b32.cont [2/16] 0.0, 128
        %1704 = vxpose.xlu0.b32.cont [3/16] 0.0, 128
        %1705 = vxpose.xlu0.b32.cont [4/16] 0.0, 128
        %1706 = vxpose.xlu0.b32.cont [5/16] 0.0, 128
        %1707 = vxpose.xlu0.b32.cont [6/16] 0.0, 128
        %1708 = vxpose.xlu0.b32.cont [7/16] 0.0, 128
        %1709 = vxpose.xlu0.b32.cont [8/16] 0.0, 128
        %1710 = vxpose.xlu0.b32.cont [9/16] 0.0, 128
        %1711 = vxpose.xlu0.b32.cont [10/16] 0.0, 128
        %1712 = vxpose.xlu0.b32.cont [11/16] 0.0, 128
        %1713 = vxpose.xlu0.b32.cont [12/16] 0.0, 128
        %1714 = vxpose.xlu0.b32.cont [13/16] 0.0, 128
        %1715 = vxpose.xlu0.b32.cont [14/16] 0.0, 128
        %1716 = vxpose.xlu0.b32.cont [15/16] 0.0, 128
        %1717 = vxpose.xlu0.b32.end [16/16] 0.0, 128
        %v1718 = vpop.trf.xlu0
        %v1719 = vpop.trf.xlu0
        %v1720 = vpop.trf.xlu0
        %v1721 = vpop.trf.xlu0
        %v1722 = vpop.trf.xlu0
        %v1723 = vpop.trf.xlu0
        %v1724 = vpop.trf.xlu0
        %v1725 = vpop.trf.xlu0
        %v1726 = vpop.trf.xlu0
        %v1727 = vpop.trf.xlu0
        %v1728 = vpop.trf.xlu0
        %v1729 = vpop.trf.xlu0
        %v1730 = vpop.trf.xlu0
        %v1731 = vpop.trf.xlu0
        %v1732 = vpop.trf.xlu0
        %v1733 = vpop.trf.xlu0
        %v1734 = vpack.c.bf16 %v1718, %v1718
        %1735 = vrot.lane.b32.xlu0 %v1517, 112
        %v1736 = vpop.permute.xlu0 %1735
        %v1738 = vsel %vm1020, %v1736, 0
        %v1741 = vsel %vm1024, %v1734, 0
        %1743 = vmatpush.bf16.msra.mxu0 0
        %1744 = vmatpush.bf16.msra.mxu0 0
        %1745 = vmatpush.bf16.msra.mxu0 0
        %1746 = vmatpush.bf16.msra.mxu0 0
        %1747 = vmatpush.bf16.msra.mxu0 0
        %1748 = vmatpush.bf16.msra.mxu0 0
        %1749 = vmatpush.bf16.msra.mxu0 0
        %1750 = vmatpush.bf16.msra.mxu0 %v1741
        %1751 = vmatmul.bf16.gmra.mxu0 %v1738
        %v1752 = vpop.f32.mrf.mxu0
        %v1753 = vadd.f32 0.0, %v1752
        %v1754 = vpop.f32.mrf.mxu0
        %1755 = vdwg.mxu0
        %v1756 = vmul.f32 %v1753, 0.35355338
        %v1757 = vsel %vm1020, %v1756, -inf
        %1758 = vmax.xlane.f32.xlu0 %v1757
        %v1759 = vpop.xlane.xlu0 %1758
        %v1760 = vsub.f32 %v1756, %v1759
        %v1761 = vmul.f32 %v1760, 1.442695
        %v1762 = vpow.pop %v1761
        %v1763 = vsel %vm1020, %v1762, 0.0
        %1764 = vadd.xlane.f32.xlu0 %v1763
        %v1765 = vpop.xlane.xlu0 %1764
        %v1766 = vrcp.pop %v1765
        %v1767 = vmul.f32 %v1762, %v1766
        %v1768 = vpack.c.bf16 %v1767, %v1767
        %1769 = vrot.lane.b32.xlu0 %v1583, 80
        %v1770 = vpop.permute.xlu0 %1769
        %v1772 = vsel %vm1020, %v1768, 0
        %v1775 = vsel %vm1024, %v1770, 0
        %1777 = vmatpush.bf16.msra.mxu0 0
        %1778 = vmatpush.bf16.msra.mxu0 0
        %1779 = vmatpush.bf16.msra.mxu0 0
        %1780 = vmatpush.bf16.msra.mxu0 0
        %1781 = vmatpush.bf16.msra.mxu0 0
        %1782 = vmatpush.bf16.msra.mxu0 0
        %1783 = vmatpush.bf16.msra.mxu0 0
        %1784 = vmatpush.bf16.msra.mxu0 %v1775
        %1785 = vmatmul.bf16.gmra.mxu0 %v1772
        %v1786 = vpop.f32.mrf.mxu0
        %v1787 = vadd.f32 0.0, %v1786
        %v1788 = vpop.f32.mrf.mxu0
        %1789 = vdwg.mxu0
        %1790 = vrot.lane.b32.xlu0 %v1514, 104
        %v1791 = vpop.permute.xlu0 %1790
        %1793 = vxpose.xlu0.b32.start [1/16] %v1791, 128
        %1794 = vxpose.xlu0.b32.cont [2/16] 0.0, 128
        %1795 = vxpose.xlu0.b32.cont [3/16] 0.0, 128
        %1796 = vxpose.xlu0.b32.cont [4/16] 0.0, 128
        %1797 = vxpose.xlu0.b32.cont [5/16] 0.0, 128
        %1798 = vxpose.xlu0.b32.cont [6/16] 0.0, 128
        %1799 = vxpose.xlu0.b32.cont [7/16] 0.0, 128
        %1800 = vxpose.xlu0.b32.cont [8/16] 0.0, 128
        %1801 = vxpose.xlu0.b32.cont [9/16] 0.0, 128
        %1802 = vxpose.xlu0.b32.cont [10/16] 0.0, 128
        %1803 = vxpose.xlu0.b32.cont [11/16] 0.0, 128
        %1804 = vxpose.xlu0.b32.cont [12/16] 0.0, 128
        %1805 = vxpose.xlu0.b32.cont [13/16] 0.0, 128
        %1806 = vxpose.xlu0.b32.cont [14/16] 0.0, 128
        %1807 = vxpose.xlu0.b32.cont [15/16] 0.0, 128
        %1808 = vxpose.xlu0.b32.end [16/16] 0.0, 128
        %v1809 = vpop.trf.xlu0
        %v1810 = vpop.trf.xlu0
        %v1811 = vpop.trf.xlu0
        %v1812 = vpop.trf.xlu0
        %v1813 = vpop.trf.xlu0
        %v1814 = vpop.trf.xlu0
        %v1815 = vpop.trf.xlu0
        %v1816 = vpop.trf.xlu0
        %v1817 = vpop.trf.xlu0
        %v1818 = vpop.trf.xlu0
        %v1819 = vpop.trf.xlu0
        %v1820 = vpop.trf.xlu0
        %v1821 = vpop.trf.xlu0
        %v1822 = vpop.trf.xlu0
        %v1823 = vpop.trf.xlu0
        %v1824 = vpop.trf.xlu0
        %v1825 = vpack.c.bf16 %v1809, %v1809
        %1826 = vrot.lane.b32.xlu0 %v1517, 104
        %v1827 = vpop.permute.xlu0 %1826
        %v1829 = vsel %vm1020, %v1827, 0
        %v1832 = vsel %vm1024, %v1825, 0
        %1834 = vmatpush.bf16.msra.mxu0 0
        %1835 = vmatpush.bf16.msra.mxu0 0
        %1836 = vmatpush.bf16.msra.mxu0 0
        %1837 = vmatpush.bf16.msra.mxu0 0
        %1838 = vmatpush.bf16.msra.mxu0 0
        %1839 = vmatpush.bf16.msra.mxu0 0
        %1840 = vmatpush.bf16.msra.mxu0 0
        %1841 = vmatpush.bf16.msra.mxu0 %v1832
        %1842 = vmatmul.bf16.gmra.mxu0 %v1829
        %v1843 = vpop.f32.mrf.mxu0
        %v1844 = vadd.f32 0.0, %v1843
        %v1845 = vpop.f32.mrf.mxu0
        %1846 = vdwg.mxu0
        %v1847 = vmul.f32 %v1844, 0.35355338
        %v1848 = vsel %vm1020, %v1847, -inf
        %1849 = vmax.xlane.f32.xlu0 %v1848
        %v1850 = vpop.xlane.xlu0 %1849
        %v1851 = vsub.f32 %v1847, %v1850
        %v1852 = vmul.f32 %v1851, 1.442695
        %v1853 = vpow.pop %v1852
        %v1854 = vsel %vm1020, %v1853, 0.0
        %1855 = vadd.xlane.f32.xlu0 %v1854
        %v1856 = vpop.xlane.xlu0 %1855
        %v1857 = vrcp.pop %v1856
        %v1858 = vmul.f32 %v1853, %v1857
        %v1859 = vpack.c.bf16 %v1858, %v1858
        %1860 = vrot.lane.b32.xlu0 %v1583, 72
        %v1861 = vpop.permute.xlu0 %1860
        %v1863 = vsel %vm1020, %v1859, 0
        %v1866 = vsel %vm1024, %v1861, 0
        %1868 = vmatpush.bf16.msra.mxu0 0
        %1869 = vmatpush.bf16.msra.mxu0 0
        %1870 = vmatpush.bf16.msra.mxu0 0
        %1871 = vmatpush.bf16.msra.mxu0 0
        %1872 = vmatpush.bf16.msra.mxu0 0
        %1873 = vmatpush.bf16.msra.mxu0 0
        %1874 = vmatpush.bf16.msra.mxu0 0
        %1875 = vmatpush.bf16.msra.mxu0 %v1866
        %1876 = vmatmul.bf16.gmra.mxu0 %v1863
        %v1877 = vpop.f32.mrf.mxu0
        %v1878 = vadd.f32 0.0, %v1877
        %v1879 = vpop.f32.mrf.mxu0
        %1880 = vdwg.mxu0
        %1882 = vrot.lane.b32.xlu0 %v1696, 8
        %v1883 = vpop.permute.xlu0 %1882
        %1886 = vrot.lane.b32.xlu0 %v1787, 16
        %v1887 = vpop.permute.xlu0 %1886
        %1890 = vrot.lane.b32.xlu0 %v1878, 24
        %v1891 = vpop.permute.xlu0 %1890
        %v1893 = vsel %vm1020, %v1603, %v1883
        %v1894 = vsel %vm1362, %v1893, %v1887
        %v1895 = vsel %vm1364, %v1894, %v1891
        %v1896 = vpack.c.bf16 %v1895, %v1895
        %v1897 = vld [vmem:[#allocation8] sm:$0xf]
        %v1898 = vld [vmem:[#allocation8 + $0x4] sm:$0xf]
        %v1899 = vld [vmem:[#allocation8 + $0x8] sm:$0xf]
        %v1900 = vld [vmem:[#allocation8 + $0xc] sm:$0xf]
        %v1901 = vld [vmem:[#allocation10] sm:$0x1]
        %v1903 = vperm.slane %v1901, 0
        %v1909 = vunpack.c.l.b16 %v1897
        %v1910 = vunpack.c.l.b16 %v1898
        %v1911 = vunpack.c.l.b16 %v1899
        %v1912 = vunpack.c.l.b16 %v1900
        %v1913 = vpack.c.b16 %v1910, %v1909
        %v1914 = vpack.c.b16 %v1912, %v1911
        %v1918 = vsel %vm965, %v1896, 0
        %1920 = vmatpush.bf16.msra.mxu0 0
        %1921 = vmatpush.bf16.msra.mxu0 0
        %1922 = vmatpush.bf16.msra.mxu0 0
        %1923 = vmatpush.bf16.msra.mxu0 0
        %1924 = vmatpush.bf16.msra.mxu0 0
        %1925 = vmatpush.bf16.msra.mxu0 0
        %1926 = vmatpush.bf16.msra.mxu0 %v1914
        %1927 = vmatpush.bf16.msra.mxu0 %v1913
        %1928 = vmatmul.bf16.gmra.mxu0 %v1918
        %v1929 = vpop.f32.mrf.mxu0
        %v1930 = vadd.f32 %v1903, %v1929
        %v1931 = vpop.f32.mrf.mxu0
        %1932 = vdwg.mxu0
        %v1933 = vadd.f32 %v1442, %v1930
        %v1934 = vld [vmem:[#allocation11] sm:$0x1]
        %v1935 = vld [vmem:[#allocation13] sm:$0x1]
        %v1936 = vsel %vm965, %v1933, 0.0
        %1937 = vadd.xlane.f32.xlu0 %v1936
        %v1938 = vpop.xlane.xlu0 %1937
        %v1939 = vmul.f32 %v1938, %v1415
        %v1940 = vsub.f32 %v1933, %v1939
        %v1941 = vmul.f32 %v1940, %v1940
        %v1942 = vsel %vm965, %v1941, 0.0
        %1943 = vadd.xlane.f32.xlu0 %v1942
        %v1944 = vpop.xlane.xlu0 %1943
        %v1945 = vmul.f32 %v1944, %v1415
        %v1946 = vadd.f32 %v1945, 1e-05
        %v1947 = vrsqrt.pop %v1946
        %v1948 = vmul.f32 %v1947, %v1946
        %v1949 = vmul.f32 %v1948, %v1947
        %v1950 = vmul.f32 0.5, %v1949
        %v1951 = vsub.f32 1.5, %v1950
        %v1952 = vmul.f32 %v1947, %v1951
        %vm1953 = vweird.f32 %v1946
        %vm1954 = vweird.f32 %v1947
        %vm1955 = vmor %vm1953, %vm1954
        %v1956 = vsel %vm1955, %v1947, %v1952
        %v1957 = vmul.f32 %v1940, %v1956
        %v1959 = vperm.slane %v1934, 0
        %v1961 = vmul.f32 %v1957, %v1959
        %v1963 = vperm.slane %v1935, 0
        %v1965 = vadd.f32 %v1961, %v1963
        %v1966 = vpack.c.bf16 %v1965, %v1965
        %v1967 = vld [vmem:[#allocation14] sm:$0xf]
        %v1968 = vld [vmem:[#allocation14 + $0x4] sm:$0xf]
        %v1969 = vld [vmem:[#allocation14 + $0x8] sm:$0xf]
        %v1970 = vld [vmem:[#allocation14 + $0xc] sm:$0xf]
        %v1971 = vld [vmem:[#allocation16] sm:$0x1]
        %v1973 = vperm.slane %v1971, 0
        %v1979 = vunpack.c.l.b16 %v1967
        %v1980 = vunpack.c.l.b16 %v1968
        %v1981 = vunpack.c.l.b16 %v1969
        %v1982 = vunpack.c.l.b16 %v1970
        %v1983 = vpack.c.b16 %v1980, %v1979
        %v1984 = vpack.c.b16 %v1982, %v1981
        %v1988 = vsel %vm965, %v1966, 0
        %1990 = vmatpush.bf16.msra.mxu0 0
        %1991 = vmatpush.bf16.msra.mxu0 0
        %1992 = vmatpush.bf16.msra.mxu0 0
        %1993 = vmatpush.bf16.msra.mxu0 0
        %1994 = vmatpush.bf16.msra.mxu0 0
        %1995 = vmatpush.bf16.msra.mxu0 0
        %1996 = vmatpush.bf16.msra.mxu0 %v1984
        %1997 = vmatpush.bf16.msra.mxu0 %v1983
        %1998 = vmatmul.bf16.gmra.mxu0 %v1988
        %v1999 = vpop.f32.mrf.mxu0
        %v2000 = vadd.f32 %v1973, %v1999
        %v2001 = vpop.f32.mrf.mxu0
        %2002 = vdwg.mxu0
        %v2003 = vmul.f32 %v2000, %v2000
        %v2004 = vmul.f32 %v2000, %v2003
        %v2005 = vmul.f32 %v2004, 0.044715
        %v2006 = vadd.f32 %v2000, %v2005
        %v2007 = vmul.f32 %v2006, 0.7978846
        %v2008 = vtanh.pop %v2007
        %v2009 = vadd.f32 %v2008, 1.0
        %v2010 = vmul.f32 %v2009, 0.5
        %v2011 = vmul.f32 %v2000, %v2010
        %v2012 = vpack.c.bf16 %v2011, %v2011
        %v2013 = vld [vmem:[%s18] sm:$0xf]
        %v2014 = vld [vmem:[%s18 + $0x4] sm:$0xf]
        %v2015 = vld [vmem:[%s18 + $0x8] sm:$0xf]
        %v2016 = vld [vmem:[%s18 + $0xc] sm:$0xf]
        %v2017 = vld [vmem:[%s18 + $0x10] sm:$0xf]
        %v2018 = vld [vmem:[%s18 + $0x14] sm:$0xf]
        %v2019 = vld [vmem:[%s18 + $0x18] sm:$0xf]
        %v2020 = vld [vmem:[%s18 + $0x1c] sm:$0xf]
        %v2021 = vld [vmem:[%s19] sm:$0x1]
        %v2023 = vperm.slane %v2021, 0
        %v2033 = vunpack.c.l.b16 %v2013
        %v2034 = vunpack.c.l.b16 %v2014
        %v2035 = vunpack.c.l.b16 %v2015
        %v2036 = vunpack.c.l.b16 %v2016
        %v2037 = vunpack.c.l.b16 %v2017
        %v2038 = vunpack.c.l.b16 %v2018
        %v2039 = vunpack.c.l.b16 %v2019
        %v2040 = vunpack.c.l.b16 %v2020
        %v2041 = vpack.c.b16 %v2034, %v2033
        %v2042 = vpack.c.b16 %v2036, %v2035
        %v2043 = vpack.c.b16 %v2038, %v2037
        %v2044 = vpack.c.b16 %v2040, %v2039
        %vm2049 = vcmask 523264
        %v2051 = vsel %vm2049, %v2012, 0
        %2053 = vmatpush.bf16.msra.mxu0 0
        %2054 = vmatpush.bf16.msra.mxu0 0
        %2055 = vmatpush.bf16.msra.mxu0 0
        %2056 = vmatpush.bf16.msra.mxu0 0
        %2057 = vmatpush.bf16.msra.mxu0 %v2044
        %2058 = vmatpush.bf16.msra.mxu0 %v2043
        %2059 = vmatpush.bf16.msra.mxu0 %v2042
        %2060 = vmatpush.bf16.msra.mxu0 %v2041
        %2061 = vmatmul.bf16.gmra.mxu0 %v2051
        %v2062 = vpop.f32.mrf.mxu0
        %v2063 = vadd.f32 %v2023, %v2062
        %v2064 = vpop.f32.mrf.mxu0
        %2065 = vdwg.mxu0
        %v2066 = vadd.f32 %v1965, %v2063
        %v2067 = vld [vmem:[%s20] sm:$0x1]
        %v2068 = vld [vmem:[%s21] sm:$0x1]
        %v2069 = vsel %vm965, %v2066, 0.0
        %2070 = vadd.xlane.f32.xlu0 %v2069
        %v2071 = vpop.xlane.xlu0 %2070
        %v2072 = vmul.f32 %v2071, %v1415
        %v2073 = vsub.f32 %v2066, %v2072
        %v2074 = vmul.f32 %v2073, %v2073
        %v2075 = vsel %vm965, %v2074, 0.0
        %2076 = vadd.xlane.f32.xlu0 %v2075
        %v2077 = vpop.xlane.xlu0 %2076
        %v2078 = vmul.f32 %v2077, %v1415
        %v2079 = vadd.f32 %v2078, 1e-05
        %v2080 = vrsqrt.pop %v2079
        %v2081 = vmul.f32 %v2080, %v2079
        %v2082 = vmul.f32 %v2081, %v2080
        %v2083 = vmul.f32 0.5, %v2082
        %v2084 = vsub.f32 1.5, %v2083
        %v2085 = vmul.f32 %v2080, %v2084
        %vm2086 = vweird.f32 %v2079
        %vm2087 = vweird.f32 %v2080
        %vm2088 = vmor %vm2086, %vm2087
        %v2089 = vsel %vm2088, %v2080, %v2085
        %v2090 = vmul.f32 %v2073, %v2089
        %v2092 = vperm.slane %v2067, 0
        %v2094 = vmul.f32 %v2090, %v2092
        %v2096 = vperm.slane %v2068, 0
        %v2098 = vadd.f32 %v2094, %v2096
        %2099 = vst.msk [vmem:[%s926] sm:$0xff] %vm965, %v2098
        %v2100 = vpack.c.bf16 %v2098, %v2098
        %v2101 = vld [vmem:[#allocation17] sm:$0xf]
        %v2102 = vld [vmem:[#allocation17 + $0x4] sm:$0xf]
        %v2103 = vld [vmem:[#allocation17 + $0x8] sm:$0xf]
        %v2104 = vld [vmem:[#allocation17 + $0xc] sm:$0xf]
        %v2105 = vld [vmem:[#allocation19] sm:$0x1]
        %v2107 = vperm.slane %v2105, 0
        %v2113 = vunpack.c.l.b16 %v2101
        %v2114 = vunpack.c.l.b16 %v2102
        %v2115 = vunpack.c.l.b16 %v2103
        %v2116 = vunpack.c.l.b16 %v2104
        %v2117 = vpack.c.b16 %v2114, %v2113
        %v2118 = vpack.c.b16 %v2116, %v2115
        %v2122 = vsel %vm965, %v2100, 0
        %2124 = vmatpush.bf16.msra.mxu0 0
        %2125 = vmatpush.bf16.msra.mxu0 0
        %2126 = vmatpush.bf16.msra.mxu0 0
        %2127 = vmatpush.bf16.msra.mxu0 0
        %2128 = vmatpush.bf16.msra.mxu0 0
        %2129 = vmatpush.bf16.msra.mxu0 0
        %2130 = vmatpush.bf16.msra.mxu0 %v2118
        %2131 = vmatpush.bf16.msra.mxu0 %v2117
        %2132 = vmatmul.bf16.gmra.mxu0 %v2122
        %v2133 = vpop.f32.mrf.mxu0
        %v2134 = vadd.f32 %v2107, %v2133
        %v2135 = vpop.f32.mrf.mxu0
        %2136 = vdwg.mxu0
        %2137 = vst.msk [vmem:[%s940] sm:$0xff] %vm965, %v2134
        %s2138 = sand.u32 %s563, 1
        %s2139 = scalar_lea.sflag [#allocation4], %s2138
        %s2140 = sand.u32 %s563, 1
        %s2141 = smul.addr %s2140, 8
        %s2142 = scalar_lea.vmem [#allocation20], %s2141
        %p2143 = scmp.lt.s32.totalorder %s46, 1
        %s2144 = scalar_select %p2143, %s46, 1
        %s2145 = smul.addr %s2144, 8
        %s2146 = scalar_lea.vmem %s25, %s2145
        // Predicated region
        $region161: #{blip3d_forward.3} parent=115 // pred_check
          %p2147 = pneg %p573
        $region162: #{blip3d_forward.3} parent=115 // pred_check_branch
          %2149 = sbr.rel (%p2147) target = $region164
        $region163: #{blip3d_forward.3} parent=115 // pred_region
          %2151 = vsyncadd %s2139, 0
          %s2152 = smul.addr %s46, 8
          %s2153 = scalar_lea.hbm %s24, %s2152
          %s2155 = sshll.u32 %s2142, 4
          %s2156 = int_to_ptr.vmem [resolvable:$true] %s2155
          %s2157 = sshll.u32 %s2153, 4
          %s2158 = int_to_ptr.hbm [resolvable:$true] %s2157
          %2160 = dma.vmem_to_hbm [thread:$0]  %s2156, 128, %s2158, %s2139
        $region164: #{blip3d_forward.3} parent=115 // pred_fallthru
          _
        // Predicated region
        $region165: #{blip3d_forward.3} parent=115 // pred_check
          %p2161 = pneg %p599
        $region166: #{blip3d_forward.3} parent=115 // pred_check_branch
          %2163 = sbr.rel (%p2161) target = $region168
        $region167: #{blip3d_forward.3} parent=115 // pred_region
          _
        $region168: #{blip3d_forward.3} parent=115 // pred_fallthru
          _
      $region116: #{blip3d_forward.3} parent=5 // pred_fallthru
        _
      %p2164 = scmp.le.s32.totalorder 2, %s41
      // Predicated region
      $region169: #{blip3d_forward.3} parent=5 // pred_check
        %p2165 = pneg %p2164
      $region170: #{blip3d_forward.3} parent=5 // pred_check_branch
        %2167 = sbr.rel (%p2165) target = $region172
      $region171: #{blip3d_forward.3} parent=5 // pred_region
        %s2168 = ssub.s32 %s41, 2
        // Predicated region
        $region173: #{blip3d_forward.3} parent=171 // pred_check
          %p2169 = pneg %p579
        $region174: #{blip3d_forward.3} parent=171 // pred_check_branch
          %2171 = sbr.rel (%p2169) target = $region176
        $region175: #{blip3d_forward.3} parent=171 // pred_region
          %s2172 = sand.u32 %s564, 1
          %s2173 = scalar_lea.sflag [#allocation4], %s2172
          %s2174 = sand.u32 %s564, 1
          %s2175 = smul.addr %s2174, 8
          %s2176 = scalar_lea.vmem [#allocation20], %s2175
          %2178 = dma.done %s2173, 128
        $region176: #{blip3d_forward.3} parent=171 // pred_fallthru
          _
        // Predicated region
        $region177: #{blip3d_forward.3} parent=171 // pred_check
          %p2179 = pneg %p605
        $region178: #{blip3d_forward.3} parent=171 // pred_check_branch
          %2181 = sbr.rel (%p2179) target = $region180
        $region179: #{blip3d_forward.3} parent=171 // pred_region
          %p2182 = scmp.lt.s32.totalorder %s47, 1
          %s2183 = scalar_select %p2182, %s47, 1
          %s2184 = smul.addr %s2183, 8
          %s2185 = scalar_lea.vmem %s25, %s2184
        $region180: #{blip3d_forward.3} parent=171 // pred_fallthru
          _
      $region172: #{blip3d_forward.3} parent=5 // pred_fallthru
        _
    $region6: #{blip3d_forward.3} parent=1 // loop_footer
      %s45 = sadd.s32 1, %s41
    $region7: #{blip3d_forward.3} parent=1 // loop_footer_branch
      %40 = sbr.rel target = $region3
    $region8: #{blip3d_forward.3} parent=1 // loop_exit
      _
    %2186 = vsyncpa [#allocation3], 1
    %s2187 = scalar_lea.sflag [#allocation3], 1
    %2188 = vsyncpa %s2187, 1
    %2189 = vsyncpa [#allocation6], 1
    %2190 = vsyncpa [#allocation9], 1
    %2191 = vsyncpa [#allocation12], 1
    %2192 = vsyncpa [#allocation15], 1
    %2193 = vsyncpa [#allocation18], 1
    %2194 = vsyncpa [#allocation4], 1
    %s2195 = scalar_lea.sflag [#allocation4], 1
    %2196 = vsyncpa %s2195, 1

</llo_original>
